<compile_context>
chip_gen: v7x
topology: tpu7x:2x2x1
jax: 0.10.0
libtpu: 0.0.40
codegen_flags: <defaults>
</compile_context>

<pallas_src>
import functools

import jax
import jax.numpy as jnp
import numpy as np
from jax.experimental import pallas as pl
from jax.experimental.pallas import tpu as pltpu


# ----------------------------- config ---------------------------------------


class Config:
    feature_depth = 32
    n_prediction_head_layers = 2
    anchor_aspect_ratios = (0.5, 1.0, 2.0)
    n_classes = 4
    n_prototype_masks = 8
    belief_depth = 2
    prototype_belief_depth = 3
    affinity_depth = 2
    prototype_affinity_depth = 3


def _round_up(v, m):
    return (v + m - 1) // m * m


# --------------------------- Pallas kernel ----------------------------------


def _prediction_head_kernel(*refs, n_init, dims):
    """Fused PredictionHead forward for ONE image.

    refs layout:
      x_ref                                   (H0, W0p, C) f32 zero-padded canvas
      [w_j (9C, C) bf16, b_j (1, C) f32] * n_init   initial conv weights
      wh (9C, Cpad) bf16, bh (1, Cpad) f32    fused 5-head weights (lane padded)
      mask_j (Hj*Wjp, 1) f32 * n_init         halo masks (1 on valid HxW else 0)
      nl, alpha, scale (1, Cpad) f32          per-channel epilogue vectors
      out_ref (Hh*Whp, Cpad) f32              lane-dense fused output
      scratch_j VMEM (Hj, Wjp, C) f32 * n_init
    """
    x_ref, rest = refs[0], refs[1:]
    wb = rest[:2 * n_init]
    wh_ref = rest[2 * n_init]
    bh_ref = rest[2 * n_init + 1]
    masks = rest[2 * n_init + 2:3 * n_init + 2]
    nl_ref, alpha_ref, scale_ref = rest[3 * n_init + 2:3 * n_init + 5]
    out_ref = rest[3 * n_init + 5]
    scratch = rest[3 * n_init + 6:]

    C = x_ref.shape[-1]

    def im2col(src, Ho, Wo):
        # One sublane-shifted slab per kw over the full height (3 tile-crossing
        # copies instead of 9); each kh tap is a row-offset slice of a slab and
        # a whole-sublane-tile collapse (Wo is a multiple of 8).
        slabs = [src[:, kw:kw + Wo, :] for kw in range(3)]      # (Ho+2, Wo, C)
        cols = []
        for kh in range(3):
            for kw in range(3):
                cols.append(slabs[kw][kh:kh + Ho].reshape(Ho * Wo, C))
        # (Ho*Wo, 9C) -> bf16 so every conv is ONE bf16 MXU matmul (f32 acc).
        return jnp.concatenate(cols, axis=-1).astype(jnp.bfloat16)

    # ---- initial convs, computed on shrinking halo canvases ----------------
    src = x_ref
    for j in range(n_init):
        Ho, Wo = dims[j]
        patches = im2col(src, Ho, Wo)                           # (Ho*Wo, 9C)
        y = jnp.dot(patches, wb[2 * j][...],
                    preferred_element_type=jnp.float32) + wb[2 * j + 1][...]
        # Zero the halo ring (lane-broadcast (R,1) mask) so the next conv sees
        # exact SAME-padding zeros.
        y = y * masks[j][...]
        scratch[j][...] = y.reshape(Ho, Wo, C)
        src = scratch[j]

    # ---- the 5 heads fused into one lane-dense (K=9C, 128) MXU matmul ------
    Hh, Whp = dims[n_init]
    patches = im2col(src, Hh, Whp)
    z = jnp.dot(patches, wh_ref[...],
                preferred_element_type=jnp.float32) + bh_ref[...]

    # Single-tanh epilogue: sigmoid(z) - 0.5 == 0.5 * tanh(z / 2); the 0.5 and
    # the 1/H, 1/W box scales are folded into `scale`, the /2 into `alpha`.
    z = jnp.where(nl_ref[...] > 0.5, jnp.tanh(z * alpha_ref[...]), z)
    out_ref[...] = (z * scale_ref[...]).astype(out_ref.dtype)


# ------------------------- parameter init -----------------------------------


def _conv_params(key, cout, cin):
    k1, k2 = jax.random.split(key)
    scale = 1.0 / np.sqrt(cin * 9.0)
    w = jax.random.uniform(k1, (cout, cin, 3, 3), jnp.float32, -scale, scale)
    b = jax.random.uniform(k2, (cout,), jnp.float32, -scale, scale)
    return w, b


def init_params(key, cfg):
    A = len(cfg.anchor_aspect_ratios)
    keys = jax.random.split(key, cfg.n_prediction_head_layers + 5)
    return {
        "initial": [
            _conv_params(keys[i], cfg.feature_depth, cfg.feature_depth)
            for i in range(cfg.n_prediction_head_layers)
        ],
        "cls": _conv_params(keys[-5], A * (cfg.n_classes + 1), cfg.feature_depth),
        "box": _conv_params(keys[-4], A * 4, cfg.feature_depth),
        "mask": _conv_params(keys[-3], A * cfg.n_prototype_masks, cfg.feature_depth),
        "belief": _conv_params(
            keys[-2], A * cfg.belief_depth * cfg.prototype_belief_depth,
            cfg.feature_depth),
        "affinity": _conv_params(
            keys[-1], A * cfg.affinity_depth * cfg.prototype_affinity_depth,
            cfg.feature_depth),
    }


# -------------------- one-time parameter / constant prep --------------------


def prepare_prediction_head(params, cfg, H, W):
    """One-time prep: fold weights to bf16 im2col layout, fuse the five heads
    into one lane-padded (9C, 128) block, precompute halo masks and the
    per-channel epilogue vectors."""
    A = len(cfg.anchor_aspect_ratios)
    C = cfg.feature_depth
    n_init = len(params["initial"])

    def fold_w(w_oihw):
        cin, cout = w_oihw.shape[1], w_oihw.shape[0]
        # (O, I, kh, kw) -> (kh, kw, I, O) -> ((kh*3+kw)*I, O); bf16 for MXU.
        return (jnp.transpose(w_oihw, (2, 3, 1, 0))
                .reshape(9 * cin, cout).astype(jnp.bfloat16))

    wb = []
    for (w, b) in params["initial"]:
        wb += [fold_w(w), b.reshape(1, -1).astype(jnp.float32)]

    head_order = ["cls", "box", "mask", "belief", "affinity"]
    head_w = [fold_w(params[k][0]) for k in head_order]
    head_b = [params[k][1] for k in head_order]
    head_splits = tuple(int(w.shape[1]) for w in head_w)
    C_tot = sum(head_splits)
    C_pad = _round_up(C_tot, 128)
    wh = jnp.pad(jnp.concatenate(head_w, axis=1),
                 ((0, 0), (0, C_pad - C_tot))).astype(jnp.bfloat16)
    bh = jnp.pad(jnp.concatenate(head_b).reshape(1, -1),
                 ((0, 0), (0, C_pad - C_tot))).astype(jnp.float32)

    # per-channel epilogue: out = where(nl, tanh(z*alpha), z) * scale
    C_cls, C_box = head_splits[0], head_splits[1]
    nl_v = np.zeros((1, C_pad), np.float32)
    alpha_v = np.ones((1, C_pad), np.float32)
    scale_v = np.ones((1, C_pad), np.float32)
    nl_v[0, C_cls + C_box:C_tot] = 1.0            # mask / belief / affinity: tanh
    for a in range(A):                            # box channels: (anchor, xywh)
        cx, cy = C_cls + 4 * a + 0, C_cls + 4 * a + 1
        nl_v[0, cx] = nl_v[0, cy] = 1.0           # sigmoid(z)-0.5 = 0.5*tanh(z/2)
        alpha_v[0, cx] = alpha_v[0, cy] = 0.5
        scale_v[0, cx] = 0.5 / H                  # extra /H (matches module)
        scale_v[0, cy] = 0.5 / W                  # extra /W

    # halo-canvas sizes; widths padded up to multiples of 8 (f32 sublane tiles)
    w_pads = [_round_up(W, 8)]
    for _ in range(n_init):
        w_pads.append(_round_up(w_pads[-1] + 2, 8))
    w_pads = w_pads[::-1]                         # [conv0, ..., conv_{n-1}, head]
    dims = [(H + 2 * (n_init - j), w_pads[j]) for j in range(n_init)]
    dims.append((H, w_pads[n_init]))              # head output canvas
    in_canvas = (H + 2 * (n_init + 1), _round_up(w_pads[0] + 2, 8))

    # (R, 1) halo masks, lane-broadcast inside the kernel.
    masks = []
    for j in range(n_init):
        Hj, Wjp = dims[j]
        a_j = n_init - j
        m = np.zeros((Hj, Wjp), np.float32)
        m[a_j:a_j + H, a_j:a_j + W] = 1.0
        masks.append(jnp.asarray(m.reshape(Hj * Wjp, 1)))

    return dict(
        n_init=n_init, dims=tuple(dims), in_canvas=in_canvas,
        C=C, C_pad=C_pad, A=A, H=H, W=W, head_splits=head_splits,
        wb=wb, wh=wh, bh=bh, masks=masks,
        nl_v=jnp.asarray(nl_v), alpha_v=jnp.asarray(alpha_v),
        scale_v=jnp.asarray(scale_v))


# ----------------------------- forward --------------------------------------


def prediction_head_forward(prepared, cfg, fpn_output_nchw):
    """Matches PredictionHead.forward; input is NCHW like the PyTorch module.
    Call through jax.jit so the transpose/pad and the channel split fuse."""
    p = prepared
    N = fpn_output_nchw.shape[0]
    H, W, C, C_pad = p["H"], p["W"], p["C"], p["C_pad"]
    n_init, A = p["n_init"], p["A"]
    Hh, Whp = p["dims"][n_init]
    H0, W0p = p["in_canvas"]
    a0 = n_init + 1

    # NCHW -> NHWC, place on the zero canvas once (fuses to one XLA copy under
    # jit).  TODO(synk): build the canvas in-kernel with a DMA into a VMEM
    # scratch interior to drop this HBM round trip entirely.
    x = jnp.transpose(fpn_output_nchw, (0, 2, 3, 1)).astype(jnp.float32)
    x = jnp.pad(x, ((0, 0), (a0, H0 - H - a0), (a0, W0p - W - a0), (0, 0)))

    operands = ([x] + list(p["wb"]) + [p["wh"], p["bh"]] + list(p["masks"])
                + [p["nl_v"], p["alpha_v"], p["scale_v"]])

    in_specs = [pl.BlockSpec((None, H0, W0p, C), lambda n: (n, 0, 0, 0))]
    for arr in operands[1:]:
        in_specs.append(pl.BlockSpec(arr.shape, lambda n: (0, 0)))

    kernel = functools.partial(_prediction_head_kernel,
                               n_init=n_init, dims=p["dims"])

    # TODO(synk): add a row-block grid axis over H*W for realistic FPN sizes,
    # and fold several images per block on single-TC chips (v5e/v6e).
    out = pl.pallas_call(
        kernel,
        out_shape=jax.ShapeDtypeStruct((N, Hh * Whp, C_pad), jnp.float32),
        grid=(N,),
        in_specs=in_specs,
        out_specs=pl.BlockSpec((None, Hh * Whp, C_pad), lambda n: (n, 0, 0)),
        scratch_shapes=[pltpu.VMEM((Hj, Wjp, C), jnp.float32)
                        for (Hj, Wjp) in p["dims"][:n_init]],
        compiler_params=pltpu.CompilerParams(
            dimension_semantics=("parallel",),
            vmem_limit_bytes=32 * 1024 * 1024),
    )(*operands)

    # Drop width padding of the head canvas (no-op copy when Whp == W), then
    # split the fused lane-dense output into the five heads.
    if Whp != W:
        out = out.reshape(N, Hh, Whp, C_pad)[:, :, :W, :]
    out = out.reshape(N, H * W, C_pad)

    c_cls, c_box, c_mask, c_bel, c_aff = p["head_splits"]
    o = 0
    cls = out[:, :, o:o + c_cls].reshape(N, H * W * A, cfg.n_classes + 1)
    o += c_cls
    box = out[:, :, o:o + c_box].reshape(N, H * W * A, 4)
    o += c_box
    mask = out[:, :, o:o + c_mask].reshape(N, H * W * A, cfg.n_prototype_masks)
    o += c_mask
    belief = out[:, :, o:o + c_bel].reshape(
        N, H * W * A, cfg.belief_depth, cfg.prototype_belief_depth)
    o += c_bel
    affinity = out[:, :, o:o + c_aff].reshape(
        N, H * W * A, cfg.affinity_depth, cfg.prototype_affinity_depth)
    return cls, box, mask, belief, affinity


# -------------------------- pure-JAX reference ------------------------------


def _ref_conv3x3(x_nhwc, w_oihw, b):
    out = jax.lax.conv_general_dilated(
        x_nhwc, jnp.transpose(w_oihw, (2, 3, 1, 0)),
        window_strides=(1, 1), padding="SAME",
        dimension_numbers=("NHWC", "HWIO", "NHWC"))
    return out + b


def ref_forward(params, cfg, fpn_output_nchw):
    N, _, H, W = fpn_output_nchw.shape
    x = jnp.transpose(fpn_output_nchw, (0, 2, 3, 1))
    for (w, b) in params["initial"]:
        x = _ref_conv3x3(x, w, b)

    cls = _ref_conv3x3(x, *params["cls"]).reshape(N, -1, cfg.n_classes + 1)

    box = _ref_conv3x3(x, *params["box"]).reshape(N, -1, 4)
    xy = jax.nn.sigmoid(box[:, :, 0:2]) - 0.5
    xy = xy.at[:, :, 0].divide(H).at[:, :, 1].divide(W)
    box = jnp.concatenate([xy, box[:, :, 2:]], axis=-1)

    mask = jnp.tanh(_ref_conv3x3(x, *params["mask"])).reshape(
        N, -1, cfg.n_prototype_masks)
    belief = jnp.tanh(_ref_conv3x3(x, *params["belief"])).reshape(
        N, -1, cfg.belief_depth, cfg.prototype_belief_depth)
    affinity = jnp.tanh(_ref_conv3x3(x, *params["affinity"])).reshape(
        N, -1, cfg.affinity_depth, cfg.prototype_affinity_depth)
    return cls, box, mask, belief, affinity


# ------------------------------- main ----------------------------------------


if __name__ == "__main__":
    cfg = Config()
    key = jax.random.PRNGKey(0)
    k_params, k_input = jax.random.split(key)

    params = init_params(k_params, cfg)
    fpn_output = jax.random.normal(
        k_input, (2, cfg.feature_depth, 8, 8), jnp.float32)   # NCHW like PyTorch

    prepared = prepare_prediction_head(params, cfg, H=8, W=8)  # once per params
    fwd = jax.jit(functools.partial(prediction_head_forward, prepared, cfg))

    outs = jax.block_until_ready(fwd(fpn_output))

    refs = ref_forward(params, cfg, fpn_output)
    names = ["classification", "box_encoding", "mask_coeff",
             "belief_coeff", "affinity_coeff"]
    for name, o, r in zip(names, outs, refs):
        assert o.shape == r.shape, (name, o.shape, r.shape)
        # bf16 MXU inputs -> looser parity than the old f32-only check.
        assert np.allclose(np.asarray(o), np.asarray(r),
                           rtol=2e-2, atol=2e-2), name

    print("KERNEL_OK")
</pallas_src>

<mosaic_0001>
module attributes {stable_mosaic.version = 11 : i64} {
  func.func @_prediction_head_kernel(%arg0: i32, %arg1: memref<1x14x32x32xf32, #tpu.memory_space<vmem>>, %arg2: memref<288x32xbf16, #tpu.memory_space<vmem>>, %arg3: memref<1x32xf32, #tpu.memory_space<vmem>>, %arg4: memref<288x32xbf16, #tpu.memory_space<vmem>>, %arg5: memref<1x32xf32, #tpu.memory_space<vmem>>, %arg6: memref<288x128xbf16, #tpu.memory_space<vmem>>, %arg7: memref<1x128xf32, #tpu.memory_space<vmem>>, %arg8: memref<288x1xf32, #tpu.memory_space<vmem>>, %arg9: memref<160x1xf32, #tpu.memory_space<vmem>>, %arg10: memref<1x128xf32, #tpu.memory_space<vmem>>, %arg11: memref<1x128xf32, #tpu.memory_space<vmem>>, %arg12: memref<1x128xf32, #tpu.memory_space<vmem>>, %arg13: memref<1x64x128xf32, #tpu.memory_space<vmem>>, %arg14: memref<12x24x32xf32, #tpu.memory_space<vmem>>, %arg15: memref<10x16x32xf32, #tpu.memory_space<vmem>>) attributes {dimension_semantics = [#tpu.dimension_semantics<parallel>], iteration_bounds = array<i64: 2>, scalar_prefetch = 0 : i64, scratch_operands = 2 : i64, tpu.core_type = #tpu.core_type<tc>, window_params = [{transform_indices = @transform_0, window_bounds = array<i64: 1, 14, 32, 32>}, {pipeline_mode = #tpu.pipeline_mode<synchronous>, transform_indices = @transform_1, window_bounds = array<i64: 288, 32>}, {pipeline_mode = #tpu.pipeline_mode<synchronous>, transform_indices = @transform_2, window_bounds = array<i64: 1, 32>}, {pipeline_mode = #tpu.pipeline_mode<synchronous>, transform_indices = @transform_3, window_bounds = array<i64: 288, 32>}, {pipeline_mode = #tpu.pipeline_mode<synchronous>, transform_indices = @transform_4, window_bounds = array<i64: 1, 32>}, {pipeline_mode = #tpu.pipeline_mode<synchronous>, transform_indices = @transform_5, window_bounds = array<i64: 288, 128>}, {pipeline_mode = #tpu.pipeline_mode<synchronous>, transform_indices = @transform_6, window_bounds = array<i64: 1, 128>}, {pipeline_mode = #tpu.pipeline_mode<synchronous>, transform_indices = @transform_7, window_bounds = array<i64: 288, 1>}, {pipeline_mode = #tpu.pipeline_mode<synchronous>, transform_indices = @transform_8, window_bounds = array<i64: 160, 1>}, {pipeline_mode = #tpu.pipeline_mode<synchronous>, transform_indices = @transform_9, window_bounds = array<i64: 1, 128>}, {pipeline_mode = #tpu.pipeline_mode<synchronous>, transform_indices = @transform_10, window_bounds = array<i64: 1, 128>}, {pipeline_mode = #tpu.pipeline_mode<synchronous>, transform_indices = @transform_11, window_bounds = array<i64: 1, 128>}, {transform_indices = @transform_12, window_bounds = array<i64: 1, 64, 128>}]} {
    %c0 = arith.constant 0 : index
    %c0_0 = arith.constant 0 : index
    %c0_1 = arith.constant 0 : index
    %c0_2 = arith.constant 0 : index
    %0 = vector.load %arg1[%c0, %c0_0, %c0_1, %c0_2] : memref<1x14x32x32xf32, #tpu.memory_space<vmem>>, vector<1x14x24x32xf32>
    %1 = vector.shape_cast %0 : vector<1x14x24x32xf32> to vector<14x24x32xf32>
    %c0_3 = arith.constant 0 : index
    %c0_4 = arith.constant 0 : index
    %c1 = arith.constant 1 : index
    %c0_5 = arith.constant 0 : index
    %2 = vector.load %arg1[%c0_3, %c0_4, %c1, %c0_5] : memref<1x14x32x32xf32, #tpu.memory_space<vmem>>, vector<1x14x24x32xf32>
    %3 = vector.shape_cast %2 : vector<1x14x24x32xf32> to vector<14x24x32xf32>
    %c0_6 = arith.constant 0 : index
    %c0_7 = arith.constant 0 : index
    %c2 = arith.constant 2 : index
    %c0_8 = arith.constant 0 : index
    %4 = vector.load %arg1[%c0_6, %c0_7, %c2, %c0_8] : memref<1x14x32x32xf32, #tpu.memory_space<vmem>>, vector<1x14x24x32xf32>
    %5 = vector.shape_cast %4 : vector<1x14x24x32xf32> to vector<14x24x32xf32>
    %6 = vector.extract_strided_slice %1 {offsets = [0, 0, 0], sizes = [12, 24, 32], strides = [1, 1, 1]} : vector<14x24x32xf32> to vector<12x24x32xf32>
    %7 = vector.shape_cast %6 : vector<12x24x32xf32> to vector<288x32xf32>
    %8 = vector.extract_strided_slice %3 {offsets = [0, 0, 0], sizes = [12, 24, 32], strides = [1, 1, 1]} : vector<14x24x32xf32> to vector<12x24x32xf32>
    %9 = vector.shape_cast %8 : vector<12x24x32xf32> to vector<288x32xf32>
    %10 = vector.extract_strided_slice %5 {offsets = [0, 0, 0], sizes = [12, 24, 32], strides = [1, 1, 1]} : vector<14x24x32xf32> to vector<12x24x32xf32>
    %11 = vector.shape_cast %10 : vector<12x24x32xf32> to vector<288x32xf32>
    %12 = vector.extract_strided_slice %1 {offsets = [1, 0, 0], sizes = [12, 24, 32], strides = [1, 1, 1]} : vector<14x24x32xf32> to vector<12x24x32xf32>
    %13 = vector.shape_cast %12 : vector<12x24x32xf32> to vector<288x32xf32>
    %14 = vector.extract_strided_slice %3 {offsets = [1, 0, 0], sizes = [12, 24, 32], strides = [1, 1, 1]} : vector<14x24x32xf32> to vector<12x24x32xf32>
    %15 = vector.shape_cast %14 : vector<12x24x32xf32> to vector<288x32xf32>
    %16 = vector.extract_strided_slice %5 {offsets = [1, 0, 0], sizes = [12, 24, 32], strides = [1, 1, 1]} : vector<14x24x32xf32> to vector<12x24x32xf32>
    %17 = vector.shape_cast %16 : vector<12x24x32xf32> to vector<288x32xf32>
    %18 = vector.extract_strided_slice %1 {offsets = [2, 0, 0], sizes = [12, 24, 32], strides = [1, 1, 1]} : vector<14x24x32xf32> to vector<12x24x32xf32>
    %19 = vector.shape_cast %18 : vector<12x24x32xf32> to vector<288x32xf32>
    %20 = vector.extract_strided_slice %3 {offsets = [2, 0, 0], sizes = [12, 24, 32], strides = [1, 1, 1]} : vector<14x24x32xf32> to vector<12x24x32xf32>
    %21 = vector.shape_cast %20 : vector<12x24x32xf32> to vector<288x32xf32>
    %22 = vector.extract_strided_slice %5 {offsets = [2, 0, 0], sizes = [12, 24, 32], strides = [1, 1, 1]} : vector<14x24x32xf32> to vector<12x24x32xf32>
    %23 = vector.shape_cast %22 : vector<12x24x32xf32> to vector<288x32xf32>
    %24 = tpu.concatenate %7, %9, %11, %13, %15, %17, %19, %21, %23 in 1 : vector<288x32xf32>, vector<288x32xf32>, vector<288x32xf32>, vector<288x32xf32>, vector<288x32xf32>, vector<288x32xf32>, vector<288x32xf32>, vector<288x32xf32>, vector<288x32xf32> -> vector<288x288xf32>
    %25 = arith.truncf %24 : vector<288x288xf32> to vector<288x288xbf16>
    %c0_9 = arith.constant 0 : index
    %c0_10 = arith.constant 0 : index
    %26 = vector.load %arg2[%c0_9, %c0_10] : memref<288x32xbf16, #tpu.memory_space<vmem>>, vector<288x32xbf16>
    %cst = arith.constant dense<0.000000e+00> : vector<288x32xf32>
    %27 = tpu.matmul %25, %26, %cst {dimension_numbers = #tpu.dot_dimension_numbers<[1], [0], [0], [1], [0, 0, 1, 1], [], []>} : vector<288x288xbf16>, vector<288x32xbf16>, vector<288x32xf32> -> vector<288x32xf32>
    %c0_11 = arith.constant 0 : index
    %c0_12 = arith.constant 0 : index
    %28 = vector.load %arg3[%c0_11, %c0_12] : memref<1x32xf32, #tpu.memory_space<vmem>>, vector<1x32xf32>
    %29 = vector.broadcast %28 : vector<1x32xf32> to vector<288x32xf32>
    %30 = arith.addf %27, %29 : vector<288x32xf32>
    %c0_13 = arith.constant 0 : index
    %c0_14 = arith.constant 0 : index
    %31 = vector.load %arg8[%c0_13, %c0_14] : memref<288x1xf32, #tpu.memory_space<vmem>>, vector<288x1xf32>
    %32 = vector.broadcast %31 : vector<288x1xf32> to vector<288x32xf32>
    %33 = arith.mulf %30, %32 : vector<288x32xf32>
    %34 = vector.shape_cast %33 : vector<288x32xf32> to vector<12x24x32xf32>
    %c0_15 = arith.constant 0 : index
    %c0_16 = arith.constant 0 : index
    %c0_17 = arith.constant 0 : index
    %35 = vector.load %arg14[%c0_15, %c0_16, %c0_17] : memref<12x24x32xf32, #tpu.memory_space<vmem>>, vector<12x24x32xf32>
    tpu.vector_store %arg14[%c0_15, %c0_16, %c0_17], %34 {strides = array<i32>} : memref<12x24x32xf32, #tpu.memory_space<vmem>>, vector<12x24x32xf32>,
    %c0_18 = arith.constant 0 : index
    %c0_19 = arith.constant 0 : index
    %c0_20 = arith.constant 0 : index
    %36 = vector.load %arg14[%c0_18, %c0_19, %c0_20] : memref<12x24x32xf32, #tpu.memory_space<vmem>>, vector<12x16x32xf32>
    %c0_21 = arith.constant 0 : index
    %c1_22 = arith.constant 1 : index
    %c0_23 = arith.constant 0 : index
    %37 = vector.load %arg14[%c0_21, %c1_22, %c0_23] : memref<12x24x32xf32, #tpu.memory_space<vmem>>, vector<12x16x32xf32>
    %c0_24 = arith.constant 0 : index
    %c2_25 = arith.constant 2 : index
    %c0_26 = arith.constant 0 : index
    %38 = vector.load %arg14[%c0_24, %c2_25, %c0_26] : memref<12x24x32xf32, #tpu.memory_space<vmem>>, vector<12x16x32xf32>
    %39 = vector.extract_strided_slice %36 {offsets = [0, 0, 0], sizes = [10, 16, 32], strides = [1, 1, 1]} : vector<12x16x32xf32> to vector<10x16x32xf32>
    %40 = vector.shape_cast %39 : vector<10x16x32xf32> to vector<160x32xf32>
    %41 = vector.extract_strided_slice %37 {offsets = [0, 0, 0], sizes = [10, 16, 32], strides = [1, 1, 1]} : vector<12x16x32xf32> to vector<10x16x32xf32>
    %42 = vector.shape_cast %41 : vector<10x16x32xf32> to vector<160x32xf32>
    %43 = vector.extract_strided_slice %38 {offsets = [0, 0, 0], sizes = [10, 16, 32], strides = [1, 1, 1]} : vector<12x16x32xf32> to vector<10x16x32xf32>
    %44 = vector.shape_cast %43 : vector<10x16x32xf32> to vector<160x32xf32>
    %45 = vector.extract_strided_slice %36 {offsets = [1, 0, 0], sizes = [10, 16, 32], strides = [1, 1, 1]} : vector<12x16x32xf32> to vector<10x16x32xf32>
    %46 = vector.shape_cast %45 : vector<10x16x32xf32> to vector<160x32xf32>
    %47 = vector.extract_strided_slice %37 {offsets = [1, 0, 0], sizes = [10, 16, 32], strides = [1, 1, 1]} : vector<12x16x32xf32> to vector<10x16x32xf32>
    %48 = vector.shape_cast %47 : vector<10x16x32xf32> to vector<160x32xf32>
    %49 = vector.extract_strided_slice %38 {offsets = [1, 0, 0], sizes = [10, 16, 32], strides = [1, 1, 1]} : vector<12x16x32xf32> to vector<10x16x32xf32>
    %50 = vector.shape_cast %49 : vector<10x16x32xf32> to vector<160x32xf32>
    %51 = vector.extract_strided_slice %36 {offsets = [2, 0, 0], sizes = [10, 16, 32], strides = [1, 1, 1]} : vector<12x16x32xf32> to vector<10x16x32xf32>
    %52 = vector.shape_cast %51 : vector<10x16x32xf32> to vector<160x32xf32>
    %53 = vector.extract_strided_slice %37 {offsets = [2, 0, 0], sizes = [10, 16, 32], strides = [1, 1, 1]} : vector<12x16x32xf32> to vector<10x16x32xf32>
    %54 = vector.shape_cast %53 : vector<10x16x32xf32> to vector<160x32xf32>
    %55 = vector.extract_strided_slice %38 {offsets = [2, 0, 0], sizes = [10, 16, 32], strides = [1, 1, 1]} : vector<12x16x32xf32> to vector<10x16x32xf32>
    %56 = vector.shape_cast %55 : vector<10x16x32xf32> to vector<160x32xf32>
    %57 = tpu.concatenate %40, %42, %44, %46, %48, %50, %52, %54, %56 in 1 : vector<160x32xf32>, vector<160x32xf32>, vector<160x32xf32>, vector<160x32xf32>, vector<160x32xf32>, vector<160x32xf32>, vector<160x32xf32>, vector<160x32xf32>, vector<160x32xf32> -> vector<160x288xf32>
    %58 = arith.truncf %57 : vector<160x288xf32> to vector<160x288xbf16>
    %c0_27 = arith.constant 0 : index
    %c0_28 = arith.constant 0 : index
    %59 = vector.load %arg4[%c0_27, %c0_28] : memref<288x32xbf16, #tpu.memory_space<vmem>>, vector<288x32xbf16>
    %cst_29 = arith.constant dense<0.000000e+00> : vector<160x32xf32>
    %60 = tpu.matmul %58, %59, %cst_29 {dimension_numbers = #tpu.dot_dimension_numbers<[1], [0], [0], [1], [0, 0, 1, 1], [], []>} : vector<160x288xbf16>, vector<288x32xbf16>, vector<160x32xf32> -> vector<160x32xf32>
    %c0_30 = arith.constant 0 : index
    %c0_31 = arith.constant 0 : index
    %61 = vector.load %arg5[%c0_30, %c0_31] : memref<1x32xf32, #tpu.memory_space<vmem>>, vector<1x32xf32>
    %62 = vector.broadcast %61 : vector<1x32xf32> to vector<160x32xf32>
    %63 = arith.addf %60, %62 : vector<160x32xf32>
    %c0_32 = arith.constant 0 : index
    %c0_33 = arith.constant 0 : index
    %64 = vector.load %arg9[%c0_32, %c0_33] : memref<160x1xf32, #tpu.memory_space<vmem>>, vector<160x1xf32>
    %65 = vector.broadcast %64 : vector<160x1xf32> to vector<160x32xf32>
    %66 = arith.mulf %63, %65 : vector<160x32xf32>
    %67 = vector.shape_cast %66 : vector<160x32xf32> to vector<10x16x32xf32>
    %c0_34 = arith.constant 0 : index
    %c0_35 = arith.constant 0 : index
    %c0_36 = arith.constant 0 : index
    %68 = vector.load %arg15[%c0_34, %c0_35, %c0_36] : memref<10x16x32xf32, #tpu.memory_space<vmem>>, vector<10x16x32xf32>
    tpu.vector_store %arg15[%c0_34, %c0_35, %c0_36], %67 {strides = array<i32>} : memref<10x16x32xf32, #tpu.memory_space<vmem>>, vector<10x16x32xf32>,
    %c0_37 = arith.constant 0 : index
    %c0_38 = arith.constant 0 : index
    %c0_39 = arith.constant 0 : index
    %69 = vector.load %arg15[%c0_37, %c0_38, %c0_39] : memref<10x16x32xf32, #tpu.memory_space<vmem>>, vector<10x8x32xf32>
    %c0_40 = arith.constant 0 : index
    %c1_41 = arith.constant 1 : index
    %c0_42 = arith.constant 0 : index
    %70 = vector.load %arg15[%c0_40, %c1_41, %c0_42] : memref<10x16x32xf32, #tpu.memory_space<vmem>>, vector<10x8x32xf32>
    %c0_43 = arith.constant 0 : index
    %c2_44 = arith.constant 2 : index
    %c0_45 = arith.constant 0 : index
    %71 = vector.load %arg15[%c0_43, %c2_44, %c0_45] : memref<10x16x32xf32, #tpu.memory_space<vmem>>, vector<10x8x32xf32>
    %72 = vector.extract_strided_slice %69 {offsets = [0, 0, 0], sizes = [8, 8, 32], strides = [1, 1, 1]} : vector<10x8x32xf32> to vector<8x8x32xf32>
    %73 = vector.shape_cast %72 : vector<8x8x32xf32> to vector<64x32xf32>
    %74 = vector.extract_strided_slice %70 {offsets = [0, 0, 0], sizes = [8, 8, 32], strides = [1, 1, 1]} : vector<10x8x32xf32> to vector<8x8x32xf32>
    %75 = vector.shape_cast %74 : vector<8x8x32xf32> to vector<64x32xf32>
    %76 = vector.extract_strided_slice %71 {offsets = [0, 0, 0], sizes = [8, 8, 32], strides = [1, 1, 1]} : vector<10x8x32xf32> to vector<8x8x32xf32>
    %77 = vector.shape_cast %76 : vector<8x8x32xf32> to vector<64x32xf32>
    %78 = vector.extract_strided_slice %69 {offsets = [1, 0, 0], sizes = [8, 8, 32], strides = [1, 1, 1]} : vector<10x8x32xf32> to vector<8x8x32xf32>
    %79 = vector.shape_cast %78 : vector<8x8x32xf32> to vector<64x32xf32>
    %80 = vector.extract_strided_slice %70 {offsets = [1, 0, 0], sizes = [8, 8, 32], strides = [1, 1, 1]} : vector<10x8x32xf32> to vector<8x8x32xf32>
    %81 = vector.shape_cast %80 : vector<8x8x32xf32> to vector<64x32xf32>
    %82 = vector.extract_strided_slice %71 {offsets = [1, 0, 0], sizes = [8, 8, 32], strides = [1, 1, 1]} : vector<10x8x32xf32> to vector<8x8x32xf32>
    %83 = vector.shape_cast %82 : vector<8x8x32xf32> to vector<64x32xf32>
    %84 = vector.extract_strided_slice %69 {offsets = [2, 0, 0], sizes = [8, 8, 32], strides = [1, 1, 1]} : vector<10x8x32xf32> to vector<8x8x32xf32>
    %85 = vector.shape_cast %84 : vector<8x8x32xf32> to vector<64x32xf32>
    %86 = vector.extract_strided_slice %70 {offsets = [2, 0, 0], sizes = [8, 8, 32], strides = [1, 1, 1]} : vector<10x8x32xf32> to vector<8x8x32xf32>
    %87 = vector.shape_cast %86 : vector<8x8x32xf32> to vector<64x32xf32>
    %88 = vector.extract_strided_slice %71 {offsets = [2, 0, 0], sizes = [8, 8, 32], strides = [1, 1, 1]} : vector<10x8x32xf32> to vector<8x8x32xf32>
    %89 = vector.shape_cast %88 : vector<8x8x32xf32> to vector<64x32xf32>
    %90 = tpu.concatenate %73, %75, %77, %79, %81, %83, %85, %87, %89 in 1 : vector<64x32xf32>, vector<64x32xf32>, vector<64x32xf32>, vector<64x32xf32>, vector<64x32xf32>, vector<64x32xf32>, vector<64x32xf32>, vector<64x32xf32>, vector<64x32xf32> -> vector<64x288xf32>
    %91 = arith.truncf %90 : vector<64x288xf32> to vector<64x288xbf16>
    %c0_46 = arith.constant 0 : index
    %c0_47 = arith.constant 0 : index
    %92 = vector.load %arg6[%c0_46, %c0_47] : memref<288x128xbf16, #tpu.memory_space<vmem>>, vector<288x128xbf16>
    %cst_48 = arith.constant dense<0.000000e+00> : vector<64x128xf32>
    %93 = tpu.matmul %91, %92, %cst_48 {dimension_numbers = #tpu.dot_dimension_numbers<[1], [0], [0], [1], [0, 0, 1, 1], [], []>} : vector<64x288xbf16>, vector<288x128xbf16>, vector<64x128xf32> -> vector<64x128xf32>
    %c0_49 = arith.constant 0 : index
    %c0_50 = arith.constant 0 : index
    %94 = vector.load %arg7[%c0_49, %c0_50] : memref<1x128xf32, #tpu.memory_space<vmem>>, vector<1x128xf32>
    %95 = vector.broadcast %94 : vector<1x128xf32> to vector<64x128xf32>
    %96 = arith.addf %93, %95 : vector<64x128xf32>
    %c0_51 = arith.constant 0 : index
    %c0_52 = arith.constant 0 : index
    %97 = vector.load %arg10[%c0_51, %c0_52] : memref<1x128xf32, #tpu.memory_space<vmem>>, vector<1x128xf32>
    %cst_53 = arith.constant 5.000000e-01 : f32
    %98 = vector.broadcast %cst_53 : f32 to vector<1x128xf32>
    %99 = arith.cmpf ogt, %97, %98 : vector<1x128xf32>
    %c0_54 = arith.constant 0 : index
    %c0_55 = arith.constant 0 : index
    %100 = vector.load %arg11[%c0_54, %c0_55] : memref<1x128xf32, #tpu.memory_space<vmem>>, vector<1x128xf32>
    %101 = vector.broadcast %100 : vector<1x128xf32> to vector<64x128xf32>
    %102 = arith.mulf %96, %101 : vector<64x128xf32>
    %103 = math.tanh %102 : vector<64x128xf32>
    %104 = vector.shape_cast %99 : vector<1x128xi1> to vector<1x128xi1>
    %105 = vector.broadcast %104 : vector<1x128xi1> to vector<64x128xi1>
    %106 = arith.select %105, %103, %96 : vector<64x128xi1>, vector<64x128xf32>
    %c0_56 = arith.constant 0 : index
    %c0_57 = arith.constant 0 : index
    %107 = vector.load %arg12[%c0_56, %c0_57] : memref<1x128xf32, #tpu.memory_space<vmem>>, vector<1x128xf32>
    %108 = vector.broadcast %107 : vector<1x128xf32> to vector<64x128xf32>
    %109 = arith.mulf %106, %108 : vector<64x128xf32>
    %c0_58 = arith.constant 0 : index
    %c0_59 = arith.constant 0 : index
    %c0_60 = arith.constant 0 : index
    %110 = vector.load %arg13[%c0_58, %c0_59, %c0_60] : memref<1x64x128xf32, #tpu.memory_space<vmem>>, vector<1x64x128xf32>
    %111 = vector.shape_cast %110 : vector<1x64x128xf32> to vector<64x128xf32>
    %112 = vector.shape_cast %109 : vector<64x128xf32> to vector<1x64x128xf32>
    tpu.vector_store %arg13[%c0_58, %c0_59, %c0_60], %112 {strides = array<i32>} : memref<1x64x128xf32, #tpu.memory_space<vmem>>, vector<1x64x128xf32>,
    return
  }
  func.func @transform_0(%arg0: i32) -> (i32, i32, i32, i32) {
    %c0_i32 = arith.constant 0 : i32
    %c0_i32_0 = arith.constant 0 : i32
    %c0_i32_1 = arith.constant 0 : i32
    %c0_i32_2 = arith.constant 0 : i32
    return %arg0, %c0_i32, %c0_i32_0, %c0_i32_1 : i32, i32, i32, i32
  }
  func.func @transform_1(%arg0: i32) -> (i32, i32) {
    %c0_i32 = arith.constant 0 : i32
    %c0_i32_0 = arith.constant 0 : i32
    %c0_i32_1 = arith.constant 0 : i32
    return %c0_i32, %c0_i32_0 : i32, i32
  }
  func.func @transform_2(%arg0: i32) -> (i32, i32) {
    %c0_i32 = arith.constant 0 : i32
    %c0_i32_0 = arith.constant 0 : i32
    %c0_i32_1 = arith.constant 0 : i32
    return %c0_i32, %c0_i32_0 : i32, i32
  }
  func.func @transform_3(%arg0: i32) -> (i32, i32) {
    %c0_i32 = arith.constant 0 : i32
    %c0_i32_0 = arith.constant 0 : i32
    %c0_i32_1 = arith.constant 0 : i32
    return %c0_i32, %c0_i32_0 : i32, i32
  }
  func.func @transform_4(%arg0: i32) -> (i32, i32) {
    %c0_i32 = arith.constant 0 : i32
    %c0_i32_0 = arith.constant 0 : i32
    %c0_i32_1 = arith.constant 0 : i32
    return %c0_i32, %c0_i32_0 : i32, i32
  }
  func.func @transform_5(%arg0: i32) -> (i32, i32) {
    %c0_i32 = arith.constant 0 : i32
    %c0_i32_0 = arith.constant 0 : i32
    %c0_i32_1 = arith.constant 0 : i32
    return %c0_i32, %c0_i32_0 : i32, i32
  }
  func.func @transform_6(%arg0: i32) -> (i32, i32) {
    %c0_i32 = arith.constant 0 : i32
    %c0_i32_0 = arith.constant 0 : i32
    %c0_i32_1 = arith.constant 0 : i32
    return %c0_i32, %c0_i32_0 : i32, i32
  }
  func.func @transform_7(%arg0: i32) -> (i32, i32) {
    %c0_i32 = arith.constant 0 : i32
    %c0_i32_0 = arith.constant 0 : i32
    %c0_i32_1 = arith.constant 0 : i32
    return %c0_i32, %c0_i32_0 : i32, i32
  }
  func.func @transform_8(%arg0: i32) -> (i32, i32) {
    %c0_i32 = arith.constant 0 : i32
    %c0_i32_0 = arith.constant 0 : i32
    %c0_i32_1 = arith.constant 0 : i32
    return %c0_i32, %c0_i32_0 : i32, i32
  }
  func.func @transform_9(%arg0: i32) -> (i32, i32) {
    %c0_i32 = arith.constant 0 : i32
    %c0_i32_0 = arith.constant 0 : i32
    %c0_i32_1 = arith.constant 0 : i32
    return %c0_i32, %c0_i32_0 : i32, i32
  }
  func.func @transform_10(%arg0: i32) -> (i32, i32) {
    %c0_i32 = arith.constant 0 : i32
    %c0_i32_0 = arith.constant 0 : i32
    %c0_i32_1 = arith.constant 0 : i32
    return %c0_i32, %c0_i32_0 : i32, i32
  }
  func.func @transform_11(%arg0: i32) -> (i32, i32) {
    %c0_i32 = arith.constant 0 : i32
    %c0_i32_0 = arith.constant 0 : i32
    %c0_i32_1 = arith.constant 0 : i32
    return %c0_i32, %c0_i32_0 : i32, i32
  }
  func.func @transform_12(%arg0: i32) -> (i32, i32, i32) {
    %c0_i32 = arith.constant 0 : i32
    %c0_i32_0 = arith.constant 0 : i32
    %c0_i32_1 = arith.constant 0 : i32
    return %arg0, %c0_i32, %c0_i32_0 : i32, i32, i32
  }
}

</mosaic_0001>

<llo_original>
// kernel: prediction_head_forward.1
$region0: #{prediction_head_forward.1}
  #allocation0 [shape = 'u32[]', space=smem, size = 0x4, offset = 0x4, fixed_abs, tag = 'smem constant byte address 0x4 - core index']
  #allocation1 [shape = 'u32[144,128]{1,0:T(1,128)}', space=vmem, size = 0x12000, scoped, tag = 'internal scratch']
  #allocation2 [shape = 'f32[12,24,32]{2,1,0:T(8,128)}', space=vmem, size = 0x24000, scoped, tag = 'scratch operand']
  #allocation3 [shape = 'f32[10,16,32]{2,1,0:T(8,128)}', space=vmem, size = 0x14000, scoped, tag = 'scratch operand']
  %s0 = inlined_call_operand.vmem [shape: f32[2,14,32,32], index: 0, kind: input, shape index: {}]
  %s1 = inlined_call_operand.vmem [shape: bf16[288,32], index: 1, kind: input, shape index: {}]
  %s2 = inlined_call_operand.vmem [shape: f32[1,32], index: 2, kind: input, shape index: {}]
  %s3 = inlined_call_operand.vmem [shape: bf16[288,32], index: 3, kind: input, shape index: {}]
  %s4 = inlined_call_operand.vmem [shape: f32[1,32], index: 4, kind: input, shape index: {}]
  %s5 = inlined_call_operand.vmem [shape: bf16[288,128], index: 5, kind: input, shape index: {}]
  %s6 = inlined_call_operand.vmem [shape: f32[1,128], index: 6, kind: input, shape index: {}]
  %s7 = inlined_call_operand.vmem [shape: f32[288,1], index: 7, kind: input, shape index: {}]
  %s8 = inlined_call_operand.vmem [shape: f32[160,1], index: 8, kind: input, shape index: {}]
  %s9 = inlined_call_operand.vmem [shape: f32[1,128], index: 9, kind: input, shape index: {}]
  %s10 = inlined_call_operand.vmem [shape: f32[1,128], index: 10, kind: input, shape index: {}]
  %s11 = inlined_call_operand.vmem [shape: f32[1,128], index: 11, kind: input, shape index: {}]
  %s12 = inlined_call_operand.vmem [shape: f32[2,64,128], index: 12, kind: output, shape index: {}]
  %s13 = sld [smem:[#allocation0]]
  $region81: #{prediction_head_forward.1} parent=0
    _
  %s15 = ssub.s32 1, %s13
  %s16 = scalar_select 0, %s15, %s13
  loop: start=0, step=1, limit=4
  $region2: #{prediction_head_forward.1} parent=0 // loop_pre_header
    _
  $region3: #{prediction_head_forward.1} parent=0 // loop_header
    %s18 = sphi 0, %s22
    %p19 = scmp.ge.s32.totalorder %s18, 4
    %s28 = sphi 0, %s30
    %s31 = sphi 0, %s28
    %s32 = sphi 0, %s31
    %s48 = sphi 0, %s32
    %s52 = sphi 0, %s52
    %s54 = sphi 0, %s52
    %s55 = sphi 0, %s54
    %s69 = sphi 0, %s55
    %s73 = sphi 0, %s73
    %s75 = sphi 0, %s73
    %s76 = sphi 0, %s75
    %s90 = sphi 0, %s76
    %s94 = sphi 0, %s94
    %s96 = sphi 0, %s94
    %s97 = sphi 0, %s96
    %s111 = sphi 0, %s97
    %s115 = sphi 0, %s115
    %s117 = sphi 0, %s115
    %s118 = sphi 0, %s117
    %s132 = sphi 0, %s118
    %s136 = sphi 0, %s136
    %s138 = sphi 0, %s136
    %s139 = sphi 0, %s138
    %s153 = sphi 0, %s139
    %s157 = sphi 0, %s157
    %s159 = sphi 0, %s157
    %s160 = sphi 0, %s159
    %s174 = sphi 0, %s160
    %s178 = sphi 0, %s178
    %s180 = sphi 0, %s178
    %s181 = sphi 0, %s180
    %s195 = sphi 0, %s181
    %s199 = sphi 0, %s199
    %s201 = sphi 0, %s199
    %s202 = sphi 0, %s201
    %s216 = sphi 0, %s202
    %s220 = sphi 0, %s220
    %s222 = sphi 0, %s220
    %s223 = sphi 0, %s222
    %s237 = sphi 0, %s223
    %s241 = sphi 0, %s241
    %s243 = sphi 0, %s241
    %s244 = sphi 0, %s243
    %s258 = sphi 0, %s244
    %s262 = sphi 0, %s262
    %s264 = sphi 0, %s262
    %s265 = sphi 0, %s264
    %s279 = sphi 0, %s265
    %s285 = sphi 0, %s287
    %s288 = sphi 0, %s285
    %s289 = sphi 0, %s288
    %s305 = sphi 0, %s289
  $region4: #{prediction_head_forward.1} parent=0 // loop_header_branch
    %21 = sbr.rel (%p19) target = $region8
  $region5: #{prediction_head_forward.1} parent=0 // loop_body
    %s23 = ssub.s32 %s18, 1
    %s24 = ssub.s32 %s18, 2
    %s25 = sadd.s32 %s18, 1
    %s26 = ssub.s32 %s18, %s25
    %p27 = scmp.eq.s32.totalorder %s26, 0
    %s29 = sadd.s32 %s28, 1
    %s30 = scalar_select %p27, %s28, %s29
    %p33 = pneg %p27
    %p34 = scmp.eq.s32.totalorder %s18, 1
    %p35 = por %p33, %p34
    %p36 = scmp.ne.s32.totalorder %s28, %s31
    %p37 = scmp.eq.s32.totalorder %s18, 0
    %p38 = por %p36, %p37
    %p39 = scmp.ne.s32.totalorder %s28, %s31
    %p40 = scmp.eq.s32.totalorder %s23, 1
    %p41 = por %p39, %p40
    %p42 = scmp.ne.s32.totalorder %s31, %s32
    %p43 = scmp.eq.s32.totalorder %s23, 0
    %p44 = por %p42, %p43
    %p45 = scmp.ne.s32.totalorder %s31, %s32
    %p46 = scmp.eq.s32.totalorder %s24, 1
    %p47 = por %p45, %p46
    %p49 = scmp.ne.s32.totalorder %s32, %s48
    %p50 = scmp.eq.s32.totalorder %s24, 0
    %p51 = por %p49, %p50
    %s53 = sadd.s32 %s52, 1
    %p56 = scmp.eq.s32.totalorder %s18, 1
    %p57 = scmp.ne.s32.totalorder %s52, %s54
    %p58 = scmp.eq.s32.totalorder %s18, 0
    %p59 = por %p57, %p58
    %p60 = scmp.ne.s32.totalorder %s52, %s54
    %p61 = scmp.eq.s32.totalorder %s23, 1
    %p62 = por %p60, %p61
    %p63 = scmp.ne.s32.totalorder %s54, %s55
    %p64 = scmp.eq.s32.totalorder %s23, 0
    %p65 = por %p63, %p64
    %p66 = scmp.ne.s32.totalorder %s54, %s55
    %p67 = scmp.eq.s32.totalorder %s24, 1
    %p68 = por %p66, %p67
    %p70 = scmp.ne.s32.totalorder %s55, %s69
    %p71 = scmp.eq.s32.totalorder %s24, 0
    %p72 = por %p70, %p71
    %s74 = sadd.s32 %s73, 1
    %p77 = scmp.eq.s32.totalorder %s18, 1
    %p78 = scmp.ne.s32.totalorder %s73, %s75
    %p79 = scmp.eq.s32.totalorder %s18, 0
    %p80 = por %p78, %p79
    %p81 = scmp.ne.s32.totalorder %s73, %s75
    %p82 = scmp.eq.s32.totalorder %s23, 1
    %p83 = por %p81, %p82
    %p84 = scmp.ne.s32.totalorder %s75, %s76
    %p85 = scmp.eq.s32.totalorder %s23, 0
    %p86 = por %p84, %p85
    %p87 = scmp.ne.s32.totalorder %s75, %s76
    %p88 = scmp.eq.s32.totalorder %s24, 1
    %p89 = por %p87, %p88
    %p91 = scmp.ne.s32.totalorder %s76, %s90
    %p92 = scmp.eq.s32.totalorder %s24, 0
    %p93 = por %p91, %p92
    %s95 = sadd.s32 %s94, 1
    %p98 = scmp.eq.s32.totalorder %s18, 1
    %p99 = scmp.ne.s32.totalorder %s94, %s96
    %p100 = scmp.eq.s32.totalorder %s18, 0
    %p101 = por %p99, %p100
    %p102 = scmp.ne.s32.totalorder %s94, %s96
    %p103 = scmp.eq.s32.totalorder %s23, 1
    %p104 = por %p102, %p103
    %p105 = scmp.ne.s32.totalorder %s96, %s97
    %p106 = scmp.eq.s32.totalorder %s23, 0
    %p107 = por %p105, %p106
    %p108 = scmp.ne.s32.totalorder %s96, %s97
    %p109 = scmp.eq.s32.totalorder %s24, 1
    %p110 = por %p108, %p109
    %p112 = scmp.ne.s32.totalorder %s97, %s111
    %p113 = scmp.eq.s32.totalorder %s24, 0
    %p114 = por %p112, %p113
    %s116 = sadd.s32 %s115, 1
    %p119 = scmp.eq.s32.totalorder %s18, 1
    %p120 = scmp.ne.s32.totalorder %s115, %s117
    %p121 = scmp.eq.s32.totalorder %s18, 0
    %p122 = por %p120, %p121
    %p123 = scmp.ne.s32.totalorder %s115, %s117
    %p124 = scmp.eq.s32.totalorder %s23, 1
    %p125 = por %p123, %p124
    %p126 = scmp.ne.s32.totalorder %s117, %s118
    %p127 = scmp.eq.s32.totalorder %s23, 0
    %p128 = por %p126, %p127
    %p129 = scmp.ne.s32.totalorder %s117, %s118
    %p130 = scmp.eq.s32.totalorder %s24, 1
    %p131 = por %p129, %p130
    %p133 = scmp.ne.s32.totalorder %s118, %s132
    %p134 = scmp.eq.s32.totalorder %s24, 0
    %p135 = por %p133, %p134
    %s137 = sadd.s32 %s136, 1
    %p140 = scmp.eq.s32.totalorder %s18, 1
    %p141 = scmp.ne.s32.totalorder %s136, %s138
    %p142 = scmp.eq.s32.totalorder %s18, 0
    %p143 = por %p141, %p142
    %p144 = scmp.ne.s32.totalorder %s136, %s138
    %p145 = scmp.eq.s32.totalorder %s23, 1
    %p146 = por %p144, %p145
    %p147 = scmp.ne.s32.totalorder %s138, %s139
    %p148 = scmp.eq.s32.totalorder %s23, 0
    %p149 = por %p147, %p148
    %p150 = scmp.ne.s32.totalorder %s138, %s139
    %p151 = scmp.eq.s32.totalorder %s24, 1
    %p152 = por %p150, %p151
    %p154 = scmp.ne.s32.totalorder %s139, %s153
    %p155 = scmp.eq.s32.totalorder %s24, 0
    %p156 = por %p154, %p155
    %s158 = sadd.s32 %s157, 1
    %p161 = scmp.eq.s32.totalorder %s18, 1
    %p162 = scmp.ne.s32.totalorder %s157, %s159
    %p163 = scmp.eq.s32.totalorder %s18, 0
    %p164 = por %p162, %p163
    %p165 = scmp.ne.s32.totalorder %s157, %s159
    %p166 = scmp.eq.s32.totalorder %s23, 1
    %p167 = por %p165, %p166
    %p168 = scmp.ne.s32.totalorder %s159, %s160
    %p169 = scmp.eq.s32.totalorder %s23, 0
    %p170 = por %p168, %p169
    %p171 = scmp.ne.s32.totalorder %s159, %s160
    %p172 = scmp.eq.s32.totalorder %s24, 1
    %p173 = por %p171, %p172
    %p175 = scmp.ne.s32.totalorder %s160, %s174
    %p176 = scmp.eq.s32.totalorder %s24, 0
    %p177 = por %p175, %p176
    %s179 = sadd.s32 %s178, 1
    %p182 = scmp.eq.s32.totalorder %s18, 1
    %p183 = scmp.ne.s32.totalorder %s178, %s180
    %p184 = scmp.eq.s32.totalorder %s18, 0
    %p185 = por %p183, %p184
    %p186 = scmp.ne.s32.totalorder %s178, %s180
    %p187 = scmp.eq.s32.totalorder %s23, 1
    %p188 = por %p186, %p187
    %p189 = scmp.ne.s32.totalorder %s180, %s181
    %p190 = scmp.eq.s32.totalorder %s23, 0
    %p191 = por %p189, %p190
    %p192 = scmp.ne.s32.totalorder %s180, %s181
    %p193 = scmp.eq.s32.totalorder %s24, 1
    %p194 = por %p192, %p193
    %p196 = scmp.ne.s32.totalorder %s181, %s195
    %p197 = scmp.eq.s32.totalorder %s24, 0
    %p198 = por %p196, %p197
    %s200 = sadd.s32 %s199, 1
    %p203 = scmp.eq.s32.totalorder %s18, 1
    %p204 = scmp.ne.s32.totalorder %s199, %s201
    %p205 = scmp.eq.s32.totalorder %s18, 0
    %p206 = por %p204, %p205
    %p207 = scmp.ne.s32.totalorder %s199, %s201
    %p208 = scmp.eq.s32.totalorder %s23, 1
    %p209 = por %p207, %p208
    %p210 = scmp.ne.s32.totalorder %s201, %s202
    %p211 = scmp.eq.s32.totalorder %s23, 0
    %p212 = por %p210, %p211
    %p213 = scmp.ne.s32.totalorder %s201, %s202
    %p214 = scmp.eq.s32.totalorder %s24, 1
    %p215 = por %p213, %p214
    %p217 = scmp.ne.s32.totalorder %s202, %s216
    %p218 = scmp.eq.s32.totalorder %s24, 0
    %p219 = por %p217, %p218
    %s221 = sadd.s32 %s220, 1
    %p224 = scmp.eq.s32.totalorder %s18, 1
    %p225 = scmp.ne.s32.totalorder %s220, %s222
    %p226 = scmp.eq.s32.totalorder %s18, 0
    %p227 = por %p225, %p226
    %p228 = scmp.ne.s32.totalorder %s220, %s222
    %p229 = scmp.eq.s32.totalorder %s23, 1
    %p230 = por %p228, %p229
    %p231 = scmp.ne.s32.totalorder %s222, %s223
    %p232 = scmp.eq.s32.totalorder %s23, 0
    %p233 = por %p231, %p232
    %p234 = scmp.ne.s32.totalorder %s222, %s223
    %p235 = scmp.eq.s32.totalorder %s24, 1
    %p236 = por %p234, %p235
    %p238 = scmp.ne.s32.totalorder %s223, %s237
    %p239 = scmp.eq.s32.totalorder %s24, 0
    %p240 = por %p238, %p239
    %s242 = sadd.s32 %s241, 1
    %p245 = scmp.eq.s32.totalorder %s18, 1
    %p246 = scmp.ne.s32.totalorder %s241, %s243
    %p247 = scmp.eq.s32.totalorder %s18, 0
    %p248 = por %p246, %p247
    %p249 = scmp.ne.s32.totalorder %s241, %s243
    %p250 = scmp.eq.s32.totalorder %s23, 1
    %p251 = por %p249, %p250
    %p252 = scmp.ne.s32.totalorder %s243, %s244
    %p253 = scmp.eq.s32.totalorder %s23, 0
    %p254 = por %p252, %p253
    %p255 = scmp.ne.s32.totalorder %s243, %s244
    %p256 = scmp.eq.s32.totalorder %s24, 1
    %p257 = por %p255, %p256
    %p259 = scmp.ne.s32.totalorder %s244, %s258
    %p260 = scmp.eq.s32.totalorder %s24, 0
    %p261 = por %p259, %p260
    %s263 = sadd.s32 %s262, 1
    %p266 = scmp.eq.s32.totalorder %s18, 1
    %p267 = scmp.ne.s32.totalorder %s262, %s264
    %p268 = scmp.eq.s32.totalorder %s18, 0
    %p269 = por %p267, %p268
    %p270 = scmp.ne.s32.totalorder %s262, %s264
    %p271 = scmp.eq.s32.totalorder %s23, 1
    %p272 = por %p270, %p271
    %p273 = scmp.ne.s32.totalorder %s264, %s265
    %p274 = scmp.eq.s32.totalorder %s23, 0
    %p275 = por %p273, %p274
    %p276 = scmp.ne.s32.totalorder %s264, %s265
    %p277 = scmp.eq.s32.totalorder %s24, 1
    %p278 = por %p276, %p277
    %p280 = scmp.ne.s32.totalorder %s265, %s279
    %p281 = scmp.eq.s32.totalorder %s24, 0
    %p282 = por %p280, %p281
    %s283 = ssub.s32 %s18, %s25
    %p284 = scmp.eq.s32.totalorder %s283, 0
    %s286 = sadd.s32 %s285, 1
    %s287 = scalar_select %p284, %s285, %s286
    %p290 = pneg %p284
    %p291 = scmp.eq.s32.totalorder %s18, 1
    %p292 = por %p290, %p291
    %p293 = scmp.ne.s32.totalorder %s285, %s288
    %p294 = scmp.eq.s32.totalorder %s18, 0
    %p295 = por %p293, %p294
    %p296 = scmp.ne.s32.totalorder %s285, %s288
    %p297 = scmp.eq.s32.totalorder %s23, 1
    %p298 = por %p296, %p297
    %p299 = scmp.ne.s32.totalorder %s288, %s289
    %p300 = scmp.eq.s32.totalorder %s23, 0
    %p301 = por %p299, %p300
    %p302 = scmp.ne.s32.totalorder %s288, %s289
    %p303 = scmp.eq.s32.totalorder %s24, 1
    %p304 = por %p302, %p303
    %p306 = scmp.ne.s32.totalorder %s289, %s305
    %p307 = scmp.eq.s32.totalorder %s24, 0
    %p308 = por %p306, %p307
    %p309 = scmp.le.s32.totalorder 1, %s18
    %p310 = scmp.lt.s32.totalorder %s18, 3
    %p311 = pnand %p309, %p310
    %p312 = pneg %p311
    // Predicated region
    $region9: #{prediction_head_forward.1} parent=5 // pred_check
      _
    $region10: #{prediction_head_forward.1} parent=5 // pred_check_branch
      %314 = sbr.rel (%p311) target = $region12
    $region11: #{prediction_head_forward.1} parent=5 // pred_region
      %s315 = ssub.s32 %s18, 1
      // Predicated region
      $region13: #{prediction_head_forward.1} parent=11 // pred_check
        %p316 = pneg %p65
      $region14: #{prediction_head_forward.1} parent=11 // pred_check_branch
        %318 = sbr.rel (%p316) target = $region16
      $region15: #{prediction_head_forward.1} parent=11 // pred_region
        _
      $region16: #{prediction_head_forward.1} parent=11 // pred_fallthru
        _
      // Predicated region
      $region17: #{prediction_head_forward.1} parent=11 // pred_check
        %p319 = pneg %p86
      $region18: #{prediction_head_forward.1} parent=11 // pred_check_branch
        %321 = sbr.rel (%p319) target = $region20
      $region19: #{prediction_head_forward.1} parent=11 // pred_region
        _
      $region20: #{prediction_head_forward.1} parent=11 // pred_fallthru
        _
      // Predicated region
      $region21: #{prediction_head_forward.1} parent=11 // pred_check
        %p322 = pneg %p107
      $region22: #{prediction_head_forward.1} parent=11 // pred_check_branch
        %324 = sbr.rel (%p322) target = $region24
      $region23: #{prediction_head_forward.1} parent=11 // pred_region
        _
      $region24: #{prediction_head_forward.1} parent=11 // pred_fallthru
        _
      // Predicated region
      $region25: #{prediction_head_forward.1} parent=11 // pred_check
        %p325 = pneg %p128
      $region26: #{prediction_head_forward.1} parent=11 // pred_check_branch
        %327 = sbr.rel (%p325) target = $region28
      $region27: #{prediction_head_forward.1} parent=11 // pred_region
        _
      $region28: #{prediction_head_forward.1} parent=11 // pred_fallthru
        _
      // Predicated region
      $region29: #{prediction_head_forward.1} parent=11 // pred_check
        %p328 = pneg %p149
      $region30: #{prediction_head_forward.1} parent=11 // pred_check_branch
        %330 = sbr.rel (%p328) target = $region32
      $region31: #{prediction_head_forward.1} parent=11 // pred_region
        _
      $region32: #{prediction_head_forward.1} parent=11 // pred_fallthru
        _
      // Predicated region
      $region33: #{prediction_head_forward.1} parent=11 // pred_check
        %p331 = pneg %p170
      $region34: #{prediction_head_forward.1} parent=11 // pred_check_branch
        %333 = sbr.rel (%p331) target = $region36
      $region35: #{prediction_head_forward.1} parent=11 // pred_region
        _
      $region36: #{prediction_head_forward.1} parent=11 // pred_fallthru
        _
      // Predicated region
      $region37: #{prediction_head_forward.1} parent=11 // pred_check
        %p334 = pneg %p191
      $region38: #{prediction_head_forward.1} parent=11 // pred_check_branch
        %336 = sbr.rel (%p334) target = $region40
      $region39: #{prediction_head_forward.1} parent=11 // pred_region
        _
      $region40: #{prediction_head_forward.1} parent=11 // pred_fallthru
        _
      // Predicated region
      $region41: #{prediction_head_forward.1} parent=11 // pred_check
        %p337 = pneg %p212
      $region42: #{prediction_head_forward.1} parent=11 // pred_check_branch
        %339 = sbr.rel (%p337) target = $region44
      $region43: #{prediction_head_forward.1} parent=11 // pred_region
        _
      $region44: #{prediction_head_forward.1} parent=11 // pred_fallthru
        _
      // Predicated region
      $region45: #{prediction_head_forward.1} parent=11 // pred_check
        %p340 = pneg %p233
      $region46: #{prediction_head_forward.1} parent=11 // pred_check_branch
        %342 = sbr.rel (%p340) target = $region48
      $region47: #{prediction_head_forward.1} parent=11 // pred_region
        _
      $region48: #{prediction_head_forward.1} parent=11 // pred_fallthru
        _
      // Predicated region
      $region49: #{prediction_head_forward.1} parent=11 // pred_check
        %p343 = pneg %p254
      $region50: #{prediction_head_forward.1} parent=11 // pred_check_branch
        %345 = sbr.rel (%p343) target = $region52
      $region51: #{prediction_head_forward.1} parent=11 // pred_region
        _
      $region52: #{prediction_head_forward.1} parent=11 // pred_fallthru
        _
      // Predicated region
      $region53: #{prediction_head_forward.1} parent=11 // pred_check
        %p346 = pneg %p275
      $region54: #{prediction_head_forward.1} parent=11 // pred_check_branch
        %348 = sbr.rel (%p346) target = $region56
      $region55: #{prediction_head_forward.1} parent=11 // pred_region
        _
      $region56: #{prediction_head_forward.1} parent=11 // pred_fallthru
        _
    $region12: #{prediction_head_forward.1} parent=5 // pred_fallthru
      _
    %p349 = scmp.lt.s32.totalorder %s18, 2
    // Predicated region
    $region57: #{prediction_head_forward.1} parent=5 // pred_check
      %p350 = pneg %p349
    $region58: #{prediction_head_forward.1} parent=5 // pred_check_branch
      %352 = sbr.rel (%p350) target = $region60
    $region59: #{prediction_head_forward.1} parent=5 // pred_region
      // Predicated region
      $region61: #{prediction_head_forward.1} parent=59 // pred_check
        %p353 = pneg %p38
      $region62: #{prediction_head_forward.1} parent=59 // pred_check_branch
        %355 = sbr.rel (%p353) target = $region64
      $region63: #{prediction_head_forward.1} parent=59 // pred_region
        %p356 = scmp.lt.s32.totalorder %s18, 1
        %s357 = scalar_select %p356, %s18, 1
        %s358 = smul.addr %s357, 56
        %s359 = smul.addr %s358, 8
        %s360 = scalar_lea.vmem %s0, %s359
      $region64: #{prediction_head_forward.1} parent=59 // pred_fallthru
        _
    $region60: #{prediction_head_forward.1} parent=5 // pred_fallthru
      _
    %p361 = scmp.le.s32.totalorder 1, %s18
    %p362 = scmp.lt.s32.totalorder %s18, 3
    %p363 = pnand %p361, %p362
    %p364 = pneg %p363
    // Predicated region
    $region65: #{prediction_head_forward.1} parent=5 // pred_check
      _
    $region66: #{prediction_head_forward.1} parent=5 // pred_check_branch
      %366 = sbr.rel (%p363) target = $region68
    $region67: #{prediction_head_forward.1} parent=5 // pred_region
      %s367 = ssub.s32 %s18, 1
      %p368 = scmp.lt.s32.totalorder %s23, 1
      %s369 = scalar_select %p368, %s23, 1
      %s370 = smul.addr %s369, 56
      %s371 = smul.addr %s370, 8
      %s372 = scalar_lea.vmem %s0, %s371
      %p373 = pneg %p44
      %p374 = pneg %p41
      %p375 = pneg %p65
      %p376 = pneg %p62
      %p377 = pneg %p86
      %p378 = pneg %p83
      %p379 = pneg %p107
      %p380 = pneg %p104
      %p381 = pneg %p128
      %p382 = pneg %p125
      %p383 = pneg %p149
      %p384 = pneg %p146
      %p385 = pneg %p170
      %p386 = pneg %p167
      %p387 = pneg %p191
      %p388 = pneg %p188
      %p389 = pneg %p212
      %p390 = pneg %p209
      %p391 = pneg %p233
      %p392 = pneg %p230
      %p393 = pneg %p254
      %p394 = pneg %p251
      %p395 = pneg %p275
      %p396 = pneg %p272
      %p397 = pneg %p301
      %p398 = pneg %p298
      %p399 = scmp.lt.s32.totalorder %s23, 1
      %s400 = scalar_select %p399, %s23, 1
      %s401 = smul.addr %s400, 8
      %s402 = smul.addr %s401, 8
      %s403 = scalar_lea.vmem %s12, %s402
      %p404 = scmp.lt.s32.totalorder %s23, 1
      %s405 = scalar_select %p404, %s23, 1
      %s406 = smul.addr %s405, 56
      %s407 = smul.addr %s406, 8
      %s408 = scalar_lea.vmem %s0, %s407
      %p409 = scmp.lt.s32.totalorder %s23, 1
      %s410 = scalar_select %p409, %s23, 1
      %s411 = smul.addr %s410, 8
      %s412 = smul.addr %s411, 8
      %s413 = scalar_lea.vmem %s12, %s412
      %v415 = vld [vmem:[%s408] sm:$0xff]
      %v416 = vld [vmem:[%s408 + $0x8] sm:$0xff]
      %v417 = vld [vmem:[%s408 + $0x10] sm:$0xff]
      %v418 = vld [vmem:[%s408 + $0x20] sm:$0xff]
      %v419 = vld [vmem:[%s408 + $0x28] sm:$0xff]
      %v420 = vld [vmem:[%s408 + $0x30] sm:$0xff]
      %v421 = vld [vmem:[%s408 + $0x40] sm:$0xff]
      %v422 = vld [vmem:[%s408 + $0x48] sm:$0xff]
      %v423 = vld [vmem:[%s408 + $0x50] sm:$0xff]
      %v424 = vld [vmem:[%s408 + $0x60] sm:$0xff]
      %v425 = vld [vmem:[%s408 + $0x68] sm:$0xff]
      %v426 = vld [vmem:[%s408 + $0x70] sm:$0xff]
      %v427 = vld [vmem:[%s408 + $0x80] sm:$0xff]
      %v428 = vld [vmem:[%s408 + $0x88] sm:$0xff]
      %v429 = vld [vmem:[%s408 + $0x90] sm:$0xff]
      %v430 = vld [vmem:[%s408 + $0xa0] sm:$0xff]
      %v431 = vld [vmem:[%s408 + $0xa8] sm:$0xff]
      %v432 = vld [vmem:[%s408 + $0xb0] sm:$0xff]
      %v433 = vld [vmem:[%s408 + $0xc0] sm:$0xff]
      %v434 = vld [vmem:[%s408 + $0xc8] sm:$0xff]
      %v435 = vld [vmem:[%s408 + $0xd0] sm:$0xff]
      %v436 = vld [vmem:[%s408 + $0xe0] sm:$0xff]
      %v437 = vld [vmem:[%s408 + $0xe8] sm:$0xff]
      %v438 = vld [vmem:[%s408 + $0xf0] sm:$0xff]
      %v439 = vld [vmem:[%s408 + $0x100] sm:$0xff]
      %v440 = vld [vmem:[%s408 + $0x108] sm:$0xff]
      %v441 = vld [vmem:[%s408 + $0x110] sm:$0xff]
      %v442 = vld [vmem:[%s408 + $0x120] sm:$0xff]
      %v443 = vld [vmem:[%s408 + $0x128] sm:$0xff]
      %v444 = vld [vmem:[%s408 + $0x130] sm:$0xff]
      %v445 = vld [vmem:[%s408 + $0x140] sm:$0xff]
      %v446 = vld [vmem:[%s408 + $0x148] sm:$0xff]
      %v447 = vld [vmem:[%s408 + $0x150] sm:$0xff]
      %v448 = vld [vmem:[%s408 + $0x160] sm:$0xff]
      %v449 = vld [vmem:[%s408 + $0x168] sm:$0xff]
      %v450 = vld [vmem:[%s408 + $0x170] sm:$0xff]
      %v451 = vld [vmem:[%s408 + $0x180] sm:$0xff]
      %v452 = vld [vmem:[%s408 + $0x188] sm:$0xff]
      %v453 = vld [vmem:[%s408 + $0x190] sm:$0xff]
      %v454 = vld [vmem:[%s408 + $0x1a0] sm:$0xff]
      %v455 = vld [vmem:[%s408 + $0x1a8] sm:$0xff]
      %v456 = vld [vmem:[%s408 + $0x1b0] sm:$0xff]
      %v457 = vld [vmem:[%s408 + $0x1] sm:$0xff]
      %v458 = vld [vmem:[%s408 + $0x9] sm:$0xff]
      %v459 = vld [vmem:[%s408 + $0x11] sm:$0xff]
      %v460 = vld [vmem:[%s408 + $0x21] sm:$0xff]
      %v461 = vld [vmem:[%s408 + $0x29] sm:$0xff]
      %v462 = vld [vmem:[%s408 + $0x31] sm:$0xff]
      %v463 = vld [vmem:[%s408 + $0x41] sm:$0xff]
      %v464 = vld [vmem:[%s408 + $0x49] sm:$0xff]
      %v465 = vld [vmem:[%s408 + $0x51] sm:$0xff]
      %v466 = vld [vmem:[%s408 + $0x61] sm:$0xff]
      %v467 = vld [vmem:[%s408 + $0x69] sm:$0xff]
      %v468 = vld [vmem:[%s408 + $0x71] sm:$0xff]
      %v469 = vld [vmem:[%s408 + $0x81] sm:$0xff]
      %v470 = vld [vmem:[%s408 + $0x89] sm:$0xff]
      %v471 = vld [vmem:[%s408 + $0x91] sm:$0xff]
      %v472 = vld [vmem:[%s408 + $0xa1] sm:$0xff]
      %v473 = vld [vmem:[%s408 + $0xa9] sm:$0xff]
      %v474 = vld [vmem:[%s408 + $0xb1] sm:$0xff]
      %v475 = vld [vmem:[%s408 + $0xc1] sm:$0xff]
      %v476 = vld [vmem:[%s408 + $0xc9] sm:$0xff]
      %v477 = vld [vmem:[%s408 + $0xd1] sm:$0xff]
      %v478 = vld [vmem:[%s408 + $0xe1] sm:$0xff]
      %v479 = vld [vmem:[%s408 + $0xe9] sm:$0xff]
      %v480 = vld [vmem:[%s408 + $0xf1] sm:$0xff]
      %v481 = vld [vmem:[%s408 + $0x101] sm:$0xff]
      %v482 = vld [vmem:[%s408 + $0x109] sm:$0xff]
      %v483 = vld [vmem:[%s408 + $0x111] sm:$0xff]
      %v484 = vld [vmem:[%s408 + $0x121] sm:$0xff]
      %v485 = vld [vmem:[%s408 + $0x129] sm:$0xff]
      %v486 = vld [vmem:[%s408 + $0x131] sm:$0xff]
      %v487 = vld [vmem:[%s408 + $0x141] sm:$0xff]
      %v488 = vld [vmem:[%s408 + $0x149] sm:$0xff]
      %v489 = vld [vmem:[%s408 + $0x151] sm:$0xff]
      %v490 = vld [vmem:[%s408 + $0x161] sm:$0xff]
      %v491 = vld [vmem:[%s408 + $0x169] sm:$0xff]
      %v492 = vld [vmem:[%s408 + $0x171] sm:$0xff]
      %v493 = vld [vmem:[%s408 + $0x181] sm:$0xff]
      %v494 = vld [vmem:[%s408 + $0x189] sm:$0xff]
      %v495 = vld [vmem:[%s408 + $0x191] sm:$0xff]
      %v496 = vld [vmem:[%s408 + $0x1a1] sm:$0xff]
      %v497 = vld [vmem:[%s408 + $0x1a9] sm:$0xff]
      %v498 = vld [vmem:[%s408 + $0x1b1] sm:$0xff]
      %v499 = vld [vmem:[%s408 + $0x2] sm:$0xff]
      %v500 = vld [vmem:[%s408 + $0xa] sm:$0xff]
      %v501 = vld [vmem:[%s408 + $0x12] sm:$0xff]
      %v502 = vld [vmem:[%s408 + $0x22] sm:$0xff]
      %v503 = vld [vmem:[%s408 + $0x2a] sm:$0xff]
      %v504 = vld [vmem:[%s408 + $0x32] sm:$0xff]
      %v505 = vld [vmem:[%s408 + $0x42] sm:$0xff]
      %v506 = vld [vmem:[%s408 + $0x4a] sm:$0xff]
      %v507 = vld [vmem:[%s408 + $0x52] sm:$0xff]
      %v508 = vld [vmem:[%s408 + $0x62] sm:$0xff]
      %v509 = vld [vmem:[%s408 + $0x6a] sm:$0xff]
      %v510 = vld [vmem:[%s408 + $0x72] sm:$0xff]
      %v511 = vld [vmem:[%s408 + $0x82] sm:$0xff]
      %v512 = vld [vmem:[%s408 + $0x8a] sm:$0xff]
      %v513 = vld [vmem:[%s408 + $0x92] sm:$0xff]
      %v514 = vld [vmem:[%s408 + $0xa2] sm:$0xff]
      %v515 = vld [vmem:[%s408 + $0xaa] sm:$0xff]
      %v516 = vld [vmem:[%s408 + $0xb2] sm:$0xff]
      %v517 = vld [vmem:[%s408 + $0xc2] sm:$0xff]
      %v518 = vld [vmem:[%s408 + $0xca] sm:$0xff]
      %v519 = vld [vmem:[%s408 + $0xd2] sm:$0xff]
      %v520 = vld [vmem:[%s408 + $0xe2] sm:$0xff]
      %v521 = vld [vmem:[%s408 + $0xea] sm:$0xff]
      %v522 = vld [vmem:[%s408 + $0xf2] sm:$0xff]
      %v523 = vld [vmem:[%s408 + $0x102] sm:$0xff]
      %v524 = vld [vmem:[%s408 + $0x10a] sm:$0xff]
      %v525 = vld [vmem:[%s408 + $0x112] sm:$0xff]
      %v526 = vld [vmem:[%s408 + $0x122] sm:$0xff]
      %v527 = vld [vmem:[%s408 + $0x12a] sm:$0xff]
      %v528 = vld [vmem:[%s408 + $0x132] sm:$0xff]
      %v529 = vld [vmem:[%s408 + $0x142] sm:$0xff]
      %v530 = vld [vmem:[%s408 + $0x14a] sm:$0xff]
      %v531 = vld [vmem:[%s408 + $0x152] sm:$0xff]
      %v532 = vld [vmem:[%s408 + $0x162] sm:$0xff]
      %v533 = vld [vmem:[%s408 + $0x16a] sm:$0xff]
      %v534 = vld [vmem:[%s408 + $0x172] sm:$0xff]
      %v535 = vld [vmem:[%s408 + $0x182] sm:$0xff]
      %v536 = vld [vmem:[%s408 + $0x18a] sm:$0xff]
      %v537 = vld [vmem:[%s408 + $0x192] sm:$0xff]
      %v538 = vld [vmem:[%s408 + $0x1a2] sm:$0xff]
      %v539 = vld [vmem:[%s408 + $0x1aa] sm:$0xff]
      %v540 = vld [vmem:[%s408 + $0x1b2] sm:$0xff]
      %577 = vrot.lane.b32.xlu0 %v457, 32
      %v578 = vpop.permute.xlu0 %577
      %579 = vrot.lane.b32.xlu0 %v458, 32
      %v580 = vpop.permute.xlu0 %579
      %581 = vrot.lane.b32.xlu0 %v459, 32
      %v582 = vpop.permute.xlu0 %581
      %583 = vrot.lane.b32.xlu0 %v460, 32
      %v584 = vpop.permute.xlu0 %583
      %585 = vrot.lane.b32.xlu0 %v461, 32
      %v586 = vpop.permute.xlu0 %585
      %587 = vrot.lane.b32.xlu0 %v462, 32
      %v588 = vpop.permute.xlu0 %587
      %589 = vrot.lane.b32.xlu0 %v463, 32
      %v590 = vpop.permute.xlu0 %589
      %591 = vrot.lane.b32.xlu0 %v464, 32
      %v592 = vpop.permute.xlu0 %591
      %593 = vrot.lane.b32.xlu0 %v465, 32
      %v594 = vpop.permute.xlu0 %593
      %595 = vrot.lane.b32.xlu0 %v466, 32
      %v596 = vpop.permute.xlu0 %595
      %597 = vrot.lane.b32.xlu0 %v467, 32
      %v598 = vpop.permute.xlu0 %597
      %599 = vrot.lane.b32.xlu0 %v468, 32
      %v600 = vpop.permute.xlu0 %599
      %601 = vrot.lane.b32.xlu0 %v469, 32
      %v602 = vpop.permute.xlu0 %601
      %603 = vrot.lane.b32.xlu0 %v470, 32
      %v604 = vpop.permute.xlu0 %603
      %605 = vrot.lane.b32.xlu0 %v471, 32
      %v606 = vpop.permute.xlu0 %605
      %607 = vrot.lane.b32.xlu0 %v472, 32
      %v608 = vpop.permute.xlu0 %607
      %609 = vrot.lane.b32.xlu0 %v473, 32
      %v610 = vpop.permute.xlu0 %609
      %611 = vrot.lane.b32.xlu0 %v474, 32
      %v612 = vpop.permute.xlu0 %611
      %613 = vrot.lane.b32.xlu0 %v475, 32
      %v614 = vpop.permute.xlu0 %613
      %615 = vrot.lane.b32.xlu0 %v476, 32
      %v616 = vpop.permute.xlu0 %615
      %617 = vrot.lane.b32.xlu0 %v477, 32
      %v618 = vpop.permute.xlu0 %617
      %619 = vrot.lane.b32.xlu0 %v478, 32
      %v620 = vpop.permute.xlu0 %619
      %621 = vrot.lane.b32.xlu0 %v479, 32
      %v622 = vpop.permute.xlu0 %621
      %623 = vrot.lane.b32.xlu0 %v480, 32
      %v624 = vpop.permute.xlu0 %623
      %625 = vrot.lane.b32.xlu0 %v481, 32
      %v626 = vpop.permute.xlu0 %625
      %627 = vrot.lane.b32.xlu0 %v482, 32
      %v628 = vpop.permute.xlu0 %627
      %629 = vrot.lane.b32.xlu0 %v483, 32
      %v630 = vpop.permute.xlu0 %629
      %631 = vrot.lane.b32.xlu0 %v484, 32
      %v632 = vpop.permute.xlu0 %631
      %633 = vrot.lane.b32.xlu0 %v485, 32
      %v634 = vpop.permute.xlu0 %633
      %635 = vrot.lane.b32.xlu0 %v486, 32
      %v636 = vpop.permute.xlu0 %635
      %637 = vrot.lane.b32.xlu0 %v487, 32
      %v638 = vpop.permute.xlu0 %637
      %639 = vrot.lane.b32.xlu0 %v488, 32
      %v640 = vpop.permute.xlu0 %639
      %641 = vrot.lane.b32.xlu0 %v489, 32
      %v642 = vpop.permute.xlu0 %641
      %643 = vrot.lane.b32.xlu0 %v490, 32
      %v644 = vpop.permute.xlu0 %643
      %645 = vrot.lane.b32.xlu0 %v491, 32
      %v646 = vpop.permute.xlu0 %645
      %647 = vrot.lane.b32.xlu0 %v492, 32
      %v648 = vpop.permute.xlu0 %647
      %721 = vrot.lane.b32.xlu0 %v499, 64
      %v722 = vpop.permute.xlu0 %721
      %723 = vrot.lane.b32.xlu0 %v500, 64
      %v724 = vpop.permute.xlu0 %723
      %725 = vrot.lane.b32.xlu0 %v501, 64
      %v726 = vpop.permute.xlu0 %725
      %727 = vrot.lane.b32.xlu0 %v502, 64
      %v728 = vpop.permute.xlu0 %727
      %729 = vrot.lane.b32.xlu0 %v503, 64
      %v730 = vpop.permute.xlu0 %729
      %731 = vrot.lane.b32.xlu0 %v504, 64
      %v732 = vpop.permute.xlu0 %731
      %733 = vrot.lane.b32.xlu0 %v505, 64
      %v734 = vpop.permute.xlu0 %733
      %735 = vrot.lane.b32.xlu0 %v506, 64
      %v736 = vpop.permute.xlu0 %735
      %737 = vrot.lane.b32.xlu0 %v507, 64
      %v738 = vpop.permute.xlu0 %737
      %739 = vrot.lane.b32.xlu0 %v508, 64
      %v740 = vpop.permute.xlu0 %739
      %741 = vrot.lane.b32.xlu0 %v509, 64
      %v742 = vpop.permute.xlu0 %741
      %743 = vrot.lane.b32.xlu0 %v510, 64
      %v744 = vpop.permute.xlu0 %743
      %745 = vrot.lane.b32.xlu0 %v511, 64
      %v746 = vpop.permute.xlu0 %745
      %747 = vrot.lane.b32.xlu0 %v512, 64
      %v748 = vpop.permute.xlu0 %747
      %749 = vrot.lane.b32.xlu0 %v513, 64
      %v750 = vpop.permute.xlu0 %749
      %751 = vrot.lane.b32.xlu0 %v514, 64
      %v752 = vpop.permute.xlu0 %751
      %753 = vrot.lane.b32.xlu0 %v515, 64
      %v754 = vpop.permute.xlu0 %753
      %755 = vrot.lane.b32.xlu0 %v516, 64
      %v756 = vpop.permute.xlu0 %755
      %757 = vrot.lane.b32.xlu0 %v517, 64
      %v758 = vpop.permute.xlu0 %757
      %759 = vrot.lane.b32.xlu0 %v518, 64
      %v760 = vpop.permute.xlu0 %759
      %761 = vrot.lane.b32.xlu0 %v519, 64
      %v762 = vpop.permute.xlu0 %761
      %763 = vrot.lane.b32.xlu0 %v520, 64
      %v764 = vpop.permute.xlu0 %763
      %765 = vrot.lane.b32.xlu0 %v521, 64
      %v766 = vpop.permute.xlu0 %765
      %767 = vrot.lane.b32.xlu0 %v522, 64
      %v768 = vpop.permute.xlu0 %767
      %769 = vrot.lane.b32.xlu0 %v523, 64
      %v770 = vpop.permute.xlu0 %769
      %771 = vrot.lane.b32.xlu0 %v524, 64
      %v772 = vpop.permute.xlu0 %771
      %773 = vrot.lane.b32.xlu0 %v525, 64
      %v774 = vpop.permute.xlu0 %773
      %775 = vrot.lane.b32.xlu0 %v526, 64
      %v776 = vpop.permute.xlu0 %775
      %777 = vrot.lane.b32.xlu0 %v527, 64
      %v778 = vpop.permute.xlu0 %777
      %779 = vrot.lane.b32.xlu0 %v528, 64
      %v780 = vpop.permute.xlu0 %779
      %781 = vrot.lane.b32.xlu0 %v529, 64
      %v782 = vpop.permute.xlu0 %781
      %783 = vrot.lane.b32.xlu0 %v530, 64
      %v784 = vpop.permute.xlu0 %783
      %785 = vrot.lane.b32.xlu0 %v531, 64
      %v786 = vpop.permute.xlu0 %785
      %787 = vrot.lane.b32.xlu0 %v532, 64
      %v788 = vpop.permute.xlu0 %787
      %789 = vrot.lane.b32.xlu0 %v533, 64
      %v790 = vpop.permute.xlu0 %789
      %791 = vrot.lane.b32.xlu0 %v534, 64
      %v792 = vpop.permute.xlu0 %791
      %865 = vrot.lane.b32.xlu0 %v418, 96
      %v866 = vpop.permute.xlu0 %865
      %867 = vrot.lane.b32.xlu0 %v419, 96
      %v868 = vpop.permute.xlu0 %867
      %869 = vrot.lane.b32.xlu0 %v420, 96
      %v870 = vpop.permute.xlu0 %869
      %871 = vrot.lane.b32.xlu0 %v421, 96
      %v872 = vpop.permute.xlu0 %871
      %873 = vrot.lane.b32.xlu0 %v422, 96
      %v874 = vpop.permute.xlu0 %873
      %875 = vrot.lane.b32.xlu0 %v423, 96
      %v876 = vpop.permute.xlu0 %875
      %877 = vrot.lane.b32.xlu0 %v424, 96
      %v878 = vpop.permute.xlu0 %877
      %879 = vrot.lane.b32.xlu0 %v425, 96
      %v880 = vpop.permute.xlu0 %879
      %881 = vrot.lane.b32.xlu0 %v426, 96
      %v882 = vpop.permute.xlu0 %881
      %883 = vrot.lane.b32.xlu0 %v427, 96
      %v884 = vpop.permute.xlu0 %883
      %885 = vrot.lane.b32.xlu0 %v428, 96
      %v886 = vpop.permute.xlu0 %885
      %887 = vrot.lane.b32.xlu0 %v429, 96
      %v888 = vpop.permute.xlu0 %887
      %889 = vrot.lane.b32.xlu0 %v430, 96
      %v890 = vpop.permute.xlu0 %889
      %891 = vrot.lane.b32.xlu0 %v431, 96
      %v892 = vpop.permute.xlu0 %891
      %893 = vrot.lane.b32.xlu0 %v432, 96
      %v894 = vpop.permute.xlu0 %893
      %895 = vrot.lane.b32.xlu0 %v433, 96
      %v896 = vpop.permute.xlu0 %895
      %897 = vrot.lane.b32.xlu0 %v434, 96
      %v898 = vpop.permute.xlu0 %897
      %899 = vrot.lane.b32.xlu0 %v435, 96
      %v900 = vpop.permute.xlu0 %899
      %901 = vrot.lane.b32.xlu0 %v436, 96
      %v902 = vpop.permute.xlu0 %901
      %903 = vrot.lane.b32.xlu0 %v437, 96
      %v904 = vpop.permute.xlu0 %903
      %905 = vrot.lane.b32.xlu0 %v438, 96
      %v906 = vpop.permute.xlu0 %905
      %907 = vrot.lane.b32.xlu0 %v439, 96
      %v908 = vpop.permute.xlu0 %907
      %909 = vrot.lane.b32.xlu0 %v440, 96
      %v910 = vpop.permute.xlu0 %909
      %911 = vrot.lane.b32.xlu0 %v441, 96
      %v912 = vpop.permute.xlu0 %911
      %913 = vrot.lane.b32.xlu0 %v442, 96
      %v914 = vpop.permute.xlu0 %913
      %915 = vrot.lane.b32.xlu0 %v443, 96
      %v916 = vpop.permute.xlu0 %915
      %917 = vrot.lane.b32.xlu0 %v444, 96
      %v918 = vpop.permute.xlu0 %917
      %919 = vrot.lane.b32.xlu0 %v445, 96
      %v920 = vpop.permute.xlu0 %919
      %921 = vrot.lane.b32.xlu0 %v446, 96
      %v922 = vpop.permute.xlu0 %921
      %923 = vrot.lane.b32.xlu0 %v447, 96
      %v924 = vpop.permute.xlu0 %923
      %925 = vrot.lane.b32.xlu0 %v448, 96
      %v926 = vpop.permute.xlu0 %925
      %927 = vrot.lane.b32.xlu0 %v449, 96
      %v928 = vpop.permute.xlu0 %927
      %929 = vrot.lane.b32.xlu0 %v450, 96
      %v930 = vpop.permute.xlu0 %929
      %931 = vrot.lane.b32.xlu0 %v451, 96
      %v932 = vpop.permute.xlu0 %931
      %933 = vrot.lane.b32.xlu0 %v452, 96
      %v934 = vpop.permute.xlu0 %933
      %935 = vrot.lane.b32.xlu0 %v453, 96
      %v936 = vpop.permute.xlu0 %935
      %976 = vrot.lane.b32.xlu0 %v502, 32
      %v977 = vpop.permute.xlu0 %976
      %978 = vrot.lane.b32.xlu0 %v503, 32
      %v979 = vpop.permute.xlu0 %978
      %980 = vrot.lane.b32.xlu0 %v504, 32
      %v981 = vpop.permute.xlu0 %980
      %982 = vrot.lane.b32.xlu0 %v505, 32
      %v983 = vpop.permute.xlu0 %982
      %984 = vrot.lane.b32.xlu0 %v506, 32
      %v985 = vpop.permute.xlu0 %984
      %986 = vrot.lane.b32.xlu0 %v507, 32
      %v987 = vpop.permute.xlu0 %986
      %988 = vrot.lane.b32.xlu0 %v508, 32
      %v989 = vpop.permute.xlu0 %988
      %990 = vrot.lane.b32.xlu0 %v509, 32
      %v991 = vpop.permute.xlu0 %990
      %992 = vrot.lane.b32.xlu0 %v510, 32
      %v993 = vpop.permute.xlu0 %992
      %994 = vrot.lane.b32.xlu0 %v511, 32
      %v995 = vpop.permute.xlu0 %994
      %996 = vrot.lane.b32.xlu0 %v512, 32
      %v997 = vpop.permute.xlu0 %996
      %998 = vrot.lane.b32.xlu0 %v513, 32
      %v999 = vpop.permute.xlu0 %998
      %1000 = vrot.lane.b32.xlu0 %v514, 32
      %v1001 = vpop.permute.xlu0 %1000
      %1002 = vrot.lane.b32.xlu0 %v515, 32
      %v1003 = vpop.permute.xlu0 %1002
      %1004 = vrot.lane.b32.xlu0 %v516, 32
      %v1005 = vpop.permute.xlu0 %1004
      %1006 = vrot.lane.b32.xlu0 %v517, 32
      %v1007 = vpop.permute.xlu0 %1006
      %1008 = vrot.lane.b32.xlu0 %v518, 32
      %v1009 = vpop.permute.xlu0 %1008
      %1010 = vrot.lane.b32.xlu0 %v519, 32
      %v1011 = vpop.permute.xlu0 %1010
      %1012 = vrot.lane.b32.xlu0 %v520, 32
      %v1013 = vpop.permute.xlu0 %1012
      %1014 = vrot.lane.b32.xlu0 %v521, 32
      %v1015 = vpop.permute.xlu0 %1014
      %1016 = vrot.lane.b32.xlu0 %v522, 32
      %v1017 = vpop.permute.xlu0 %1016
      %1018 = vrot.lane.b32.xlu0 %v523, 32
      %v1019 = vpop.permute.xlu0 %1018
      %1020 = vrot.lane.b32.xlu0 %v524, 32
      %v1021 = vpop.permute.xlu0 %1020
      %1022 = vrot.lane.b32.xlu0 %v525, 32
      %v1023 = vpop.permute.xlu0 %1022
      %1024 = vrot.lane.b32.xlu0 %v526, 32
      %v1025 = vpop.permute.xlu0 %1024
      %1026 = vrot.lane.b32.xlu0 %v527, 32
      %v1027 = vpop.permute.xlu0 %1026
      %1028 = vrot.lane.b32.xlu0 %v528, 32
      %v1029 = vpop.permute.xlu0 %1028
      %1030 = vrot.lane.b32.xlu0 %v529, 32
      %v1031 = vpop.permute.xlu0 %1030
      %1032 = vrot.lane.b32.xlu0 %v530, 32
      %v1033 = vpop.permute.xlu0 %1032
      %1034 = vrot.lane.b32.xlu0 %v531, 32
      %v1035 = vpop.permute.xlu0 %1034
      %1036 = vrot.lane.b32.xlu0 %v532, 32
      %v1037 = vpop.permute.xlu0 %1036
      %1038 = vrot.lane.b32.xlu0 %v533, 32
      %v1039 = vpop.permute.xlu0 %1038
      %1040 = vrot.lane.b32.xlu0 %v534, 32
      %v1041 = vpop.permute.xlu0 %1040
      %1042 = vrot.lane.b32.xlu0 %v535, 32
      %v1043 = vpop.permute.xlu0 %1042
      %1044 = vrot.lane.b32.xlu0 %v536, 32
      %v1045 = vpop.permute.xlu0 %1044
      %1046 = vrot.lane.b32.xlu0 %v537, 32
      %v1047 = vpop.permute.xlu0 %1046
      %1087 = vrot.lane.b32.xlu0 %v421, 64
      %v1088 = vpop.permute.xlu0 %1087
      %1089 = vrot.lane.b32.xlu0 %v422, 64
      %v1090 = vpop.permute.xlu0 %1089
      %1091 = vrot.lane.b32.xlu0 %v423, 64
      %v1092 = vpop.permute.xlu0 %1091
      %1093 = vrot.lane.b32.xlu0 %v424, 64
      %v1094 = vpop.permute.xlu0 %1093
      %1095 = vrot.lane.b32.xlu0 %v425, 64
      %v1096 = vpop.permute.xlu0 %1095
      %1097 = vrot.lane.b32.xlu0 %v426, 64
      %v1098 = vpop.permute.xlu0 %1097
      %1099 = vrot.lane.b32.xlu0 %v427, 64
      %v1100 = vpop.permute.xlu0 %1099
      %1101 = vrot.lane.b32.xlu0 %v428, 64
      %v1102 = vpop.permute.xlu0 %1101
      %1103 = vrot.lane.b32.xlu0 %v429, 64
      %v1104 = vpop.permute.xlu0 %1103
      %1105 = vrot.lane.b32.xlu0 %v430, 64
      %v1106 = vpop.permute.xlu0 %1105
      %1107 = vrot.lane.b32.xlu0 %v431, 64
      %v1108 = vpop.permute.xlu0 %1107
      %1109 = vrot.lane.b32.xlu0 %v432, 64
      %v1110 = vpop.permute.xlu0 %1109
      %1111 = vrot.lane.b32.xlu0 %v433, 64
      %v1112 = vpop.permute.xlu0 %1111
      %1113 = vrot.lane.b32.xlu0 %v434, 64
      %v1114 = vpop.permute.xlu0 %1113
      %1115 = vrot.lane.b32.xlu0 %v435, 64
      %v1116 = vpop.permute.xlu0 %1115
      %1117 = vrot.lane.b32.xlu0 %v436, 64
      %v1118 = vpop.permute.xlu0 %1117
      %1119 = vrot.lane.b32.xlu0 %v437, 64
      %v1120 = vpop.permute.xlu0 %1119
      %1121 = vrot.lane.b32.xlu0 %v438, 64
      %v1122 = vpop.permute.xlu0 %1121
      %1123 = vrot.lane.b32.xlu0 %v439, 64
      %v1124 = vpop.permute.xlu0 %1123
      %1125 = vrot.lane.b32.xlu0 %v440, 64
      %v1126 = vpop.permute.xlu0 %1125
      %1127 = vrot.lane.b32.xlu0 %v441, 64
      %v1128 = vpop.permute.xlu0 %1127
      %1129 = vrot.lane.b32.xlu0 %v442, 64
      %v1130 = vpop.permute.xlu0 %1129
      %1131 = vrot.lane.b32.xlu0 %v443, 64
      %v1132 = vpop.permute.xlu0 %1131
      %1133 = vrot.lane.b32.xlu0 %v444, 64
      %v1134 = vpop.permute.xlu0 %1133
      %1135 = vrot.lane.b32.xlu0 %v445, 64
      %v1136 = vpop.permute.xlu0 %1135
      %1137 = vrot.lane.b32.xlu0 %v446, 64
      %v1138 = vpop.permute.xlu0 %1137
      %1139 = vrot.lane.b32.xlu0 %v447, 64
      %v1140 = vpop.permute.xlu0 %1139
      %1141 = vrot.lane.b32.xlu0 %v448, 64
      %v1142 = vpop.permute.xlu0 %1141
      %1143 = vrot.lane.b32.xlu0 %v449, 64
      %v1144 = vpop.permute.xlu0 %1143
      %1145 = vrot.lane.b32.xlu0 %v450, 64
      %v1146 = vpop.permute.xlu0 %1145
      %1147 = vrot.lane.b32.xlu0 %v451, 64
      %v1148 = vpop.permute.xlu0 %1147
      %1149 = vrot.lane.b32.xlu0 %v452, 64
      %v1150 = vpop.permute.xlu0 %1149
      %1151 = vrot.lane.b32.xlu0 %v453, 64
      %v1152 = vpop.permute.xlu0 %1151
      %1153 = vrot.lane.b32.xlu0 %v454, 64
      %v1154 = vpop.permute.xlu0 %1153
      %1155 = vrot.lane.b32.xlu0 %v455, 64
      %v1156 = vpop.permute.xlu0 %1155
      %1157 = vrot.lane.b32.xlu0 %v456, 64
      %v1158 = vpop.permute.xlu0 %1157
      %1201 = vrot.lane.b32.xlu0 %v463, 96
      %v1202 = vpop.permute.xlu0 %1201
      %1203 = vrot.lane.b32.xlu0 %v464, 96
      %v1204 = vpop.permute.xlu0 %1203
      %1205 = vrot.lane.b32.xlu0 %v465, 96
      %v1206 = vpop.permute.xlu0 %1205
      %1207 = vrot.lane.b32.xlu0 %v466, 96
      %v1208 = vpop.permute.xlu0 %1207
      %1209 = vrot.lane.b32.xlu0 %v467, 96
      %v1210 = vpop.permute.xlu0 %1209
      %1211 = vrot.lane.b32.xlu0 %v468, 96
      %v1212 = vpop.permute.xlu0 %1211
      %1213 = vrot.lane.b32.xlu0 %v469, 96
      %v1214 = vpop.permute.xlu0 %1213
      %1215 = vrot.lane.b32.xlu0 %v470, 96
      %v1216 = vpop.permute.xlu0 %1215
      %1217 = vrot.lane.b32.xlu0 %v471, 96
      %v1218 = vpop.permute.xlu0 %1217
      %1219 = vrot.lane.b32.xlu0 %v472, 96
      %v1220 = vpop.permute.xlu0 %1219
      %1221 = vrot.lane.b32.xlu0 %v473, 96
      %v1222 = vpop.permute.xlu0 %1221
      %1223 = vrot.lane.b32.xlu0 %v474, 96
      %v1224 = vpop.permute.xlu0 %1223
      %1225 = vrot.lane.b32.xlu0 %v475, 96
      %v1226 = vpop.permute.xlu0 %1225
      %1227 = vrot.lane.b32.xlu0 %v476, 96
      %v1228 = vpop.permute.xlu0 %1227
      %1229 = vrot.lane.b32.xlu0 %v477, 96
      %v1230 = vpop.permute.xlu0 %1229
      %1231 = vrot.lane.b32.xlu0 %v478, 96
      %v1232 = vpop.permute.xlu0 %1231
      %1233 = vrot.lane.b32.xlu0 %v479, 96
      %v1234 = vpop.permute.xlu0 %1233
      %1235 = vrot.lane.b32.xlu0 %v480, 96
      %v1236 = vpop.permute.xlu0 %1235
      %1237 = vrot.lane.b32.xlu0 %v481, 96
      %v1238 = vpop.permute.xlu0 %1237
      %1239 = vrot.lane.b32.xlu0 %v482, 96
      %v1240 = vpop.permute.xlu0 %1239
      %1241 = vrot.lane.b32.xlu0 %v483, 96
      %v1242 = vpop.permute.xlu0 %1241
      %1243 = vrot.lane.b32.xlu0 %v484, 96
      %v1244 = vpop.permute.xlu0 %1243
      %1245 = vrot.lane.b32.xlu0 %v485, 96
      %v1246 = vpop.permute.xlu0 %1245
      %1247 = vrot.lane.b32.xlu0 %v486, 96
      %v1248 = vpop.permute.xlu0 %1247
      %1249 = vrot.lane.b32.xlu0 %v487, 96
      %v1250 = vpop.permute.xlu0 %1249
      %1251 = vrot.lane.b32.xlu0 %v488, 96
      %v1252 = vpop.permute.xlu0 %1251
      %1253 = vrot.lane.b32.xlu0 %v489, 96
      %v1254 = vpop.permute.xlu0 %1253
      %1255 = vrot.lane.b32.xlu0 %v490, 96
      %v1256 = vpop.permute.xlu0 %1255
      %1257 = vrot.lane.b32.xlu0 %v491, 96
      %v1258 = vpop.permute.xlu0 %1257
      %1259 = vrot.lane.b32.xlu0 %v492, 96
      %v1260 = vpop.permute.xlu0 %1259
      %1261 = vrot.lane.b32.xlu0 %v493, 96
      %v1262 = vpop.permute.xlu0 %1261
      %1263 = vrot.lane.b32.xlu0 %v494, 96
      %v1264 = vpop.permute.xlu0 %1263
      %1265 = vrot.lane.b32.xlu0 %v495, 96
      %v1266 = vpop.permute.xlu0 %1265
      %1267 = vrot.lane.b32.xlu0 %v496, 96
      %v1268 = vpop.permute.xlu0 %1267
      %1269 = vrot.lane.b32.xlu0 %v497, 96
      %v1270 = vpop.permute.xlu0 %1269
      %1271 = vrot.lane.b32.xlu0 %v498, 96
      %v1272 = vpop.permute.xlu0 %1271
      %vm1309 = vcmask 261120
      %v1310 = vsel %vm1309, %v415, %v578
      %v1311 = vsel %vm1309, %v416, %v580
      %v1312 = vsel %vm1309, %v417, %v582
      %v1313 = vsel %vm1309, %v418, %v584
      %v1314 = vsel %vm1309, %v419, %v586
      %v1315 = vsel %vm1309, %v420, %v588
      %v1316 = vsel %vm1309, %v421, %v590
      %v1317 = vsel %vm1309, %v422, %v592
      %v1318 = vsel %vm1309, %v423, %v594
      %v1319 = vsel %vm1309, %v424, %v596
      %v1320 = vsel %vm1309, %v425, %v598
      %v1321 = vsel %vm1309, %v426, %v600
      %v1322 = vsel %vm1309, %v427, %v602
      %v1323 = vsel %vm1309, %v428, %v604
      %v1324 = vsel %vm1309, %v429, %v606
      %v1325 = vsel %vm1309, %v430, %v608
      %v1326 = vsel %vm1309, %v431, %v610
      %v1327 = vsel %vm1309, %v432, %v612
      %v1328 = vsel %vm1309, %v433, %v614
      %v1329 = vsel %vm1309, %v434, %v616
      %v1330 = vsel %vm1309, %v435, %v618
      %v1331 = vsel %vm1309, %v436, %v620
      %v1332 = vsel %vm1309, %v437, %v622
      %v1333 = vsel %vm1309, %v438, %v624
      %v1334 = vsel %vm1309, %v439, %v626
      %v1335 = vsel %vm1309, %v440, %v628
      %v1336 = vsel %vm1309, %v441, %v630
      %v1337 = vsel %vm1309, %v442, %v632
      %v1338 = vsel %vm1309, %v443, %v634
      %v1339 = vsel %vm1309, %v444, %v636
      %v1340 = vsel %vm1309, %v445, %v638
      %v1341 = vsel %vm1309, %v446, %v640
      %v1342 = vsel %vm1309, %v447, %v642
      %v1343 = vsel %vm1309, %v448, %v644
      %v1344 = vsel %vm1309, %v449, %v646
      %v1345 = vsel %vm1309, %v450, %v648
      %vm1346 = vcmask 523264
      %v1347 = vsel %vm1346, %v1310, %v722
      %v1348 = vsel %vm1346, %v1311, %v724
      %v1349 = vsel %vm1346, %v1312, %v726
      %v1350 = vsel %vm1346, %v1313, %v728
      %v1351 = vsel %vm1346, %v1314, %v730
      %v1352 = vsel %vm1346, %v1315, %v732
      %v1353 = vsel %vm1346, %v1316, %v734
      %v1354 = vsel %vm1346, %v1317, %v736
      %v1355 = vsel %vm1346, %v1318, %v738
      %v1356 = vsel %vm1346, %v1319, %v740
      %v1357 = vsel %vm1346, %v1320, %v742
      %v1358 = vsel %vm1346, %v1321, %v744
      %v1359 = vsel %vm1346, %v1322, %v746
      %v1360 = vsel %vm1346, %v1323, %v748
      %v1361 = vsel %vm1346, %v1324, %v750
      %v1362 = vsel %vm1346, %v1325, %v752
      %v1363 = vsel %vm1346, %v1326, %v754
      %v1364 = vsel %vm1346, %v1327, %v756
      %v1365 = vsel %vm1346, %v1328, %v758
      %v1366 = vsel %vm1346, %v1329, %v760
      %v1367 = vsel %vm1346, %v1330, %v762
      %v1368 = vsel %vm1346, %v1331, %v764
      %v1369 = vsel %vm1346, %v1332, %v766
      %v1370 = vsel %vm1346, %v1333, %v768
      %v1371 = vsel %vm1346, %v1334, %v770
      %v1372 = vsel %vm1346, %v1335, %v772
      %v1373 = vsel %vm1346, %v1336, %v774
      %v1374 = vsel %vm1346, %v1337, %v776
      %v1375 = vsel %vm1346, %v1338, %v778
      %v1376 = vsel %vm1346, %v1339, %v780
      %v1377 = vsel %vm1346, %v1340, %v782
      %v1378 = vsel %vm1346, %v1341, %v784
      %v1379 = vsel %vm1346, %v1342, %v786
      %v1380 = vsel %vm1346, %v1343, %v788
      %v1381 = vsel %vm1346, %v1344, %v790
      %v1382 = vsel %vm1346, %v1345, %v792
      %vm1383 = vcmask 785408
      %v1384 = vsel %vm1383, %v1347, %v866
      %v1385 = vsel %vm1383, %v1348, %v868
      %v1386 = vsel %vm1383, %v1349, %v870
      %v1387 = vsel %vm1383, %v1350, %v872
      %v1388 = vsel %vm1383, %v1351, %v874
      %v1389 = vsel %vm1383, %v1352, %v876
      %v1390 = vsel %vm1383, %v1353, %v878
      %v1391 = vsel %vm1383, %v1354, %v880
      %v1392 = vsel %vm1383, %v1355, %v882
      %v1393 = vsel %vm1383, %v1356, %v884
      %v1394 = vsel %vm1383, %v1357, %v886
      %v1395 = vsel %vm1383, %v1358, %v888
      %v1396 = vsel %vm1383, %v1359, %v890
      %v1397 = vsel %vm1383, %v1360, %v892
      %v1398 = vsel %vm1383, %v1361, %v894
      %v1399 = vsel %vm1383, %v1362, %v896
      %v1400 = vsel %vm1383, %v1363, %v898
      %v1401 = vsel %vm1383, %v1364, %v900
      %v1402 = vsel %vm1383, %v1365, %v902
      %v1403 = vsel %vm1383, %v1366, %v904
      %v1404 = vsel %vm1383, %v1367, %v906
      %v1405 = vsel %vm1383, %v1368, %v908
      %v1406 = vsel %vm1383, %v1369, %v910
      %v1407 = vsel %vm1383, %v1370, %v912
      %v1408 = vsel %vm1383, %v1371, %v914
      %v1409 = vsel %vm1383, %v1372, %v916
      %v1410 = vsel %vm1383, %v1373, %v918
      %v1411 = vsel %vm1383, %v1374, %v920
      %v1412 = vsel %vm1383, %v1375, %v922
      %v1413 = vsel %vm1383, %v1376, %v924
      %v1414 = vsel %vm1383, %v1377, %v926
      %v1415 = vsel %vm1383, %v1378, %v928
      %v1416 = vsel %vm1383, %v1379, %v930
      %v1417 = vsel %vm1383, %v1380, %v932
      %v1418 = vsel %vm1383, %v1381, %v934
      %v1419 = vsel %vm1383, %v1382, %v936
      %v1420 = vsel %vm1309, %v460, %v977
      %v1421 = vsel %vm1309, %v461, %v979
      %v1422 = vsel %vm1309, %v462, %v981
      %v1423 = vsel %vm1309, %v463, %v983
      %v1424 = vsel %vm1309, %v464, %v985
      %v1425 = vsel %vm1309, %v465, %v987
      %v1426 = vsel %vm1309, %v466, %v989
      %v1427 = vsel %vm1309, %v467, %v991
      %v1428 = vsel %vm1309, %v468, %v993
      %v1429 = vsel %vm1309, %v469, %v995
      %v1430 = vsel %vm1309, %v470, %v997
      %v1431 = vsel %vm1309, %v471, %v999
      %v1432 = vsel %vm1309, %v472, %v1001
      %v1433 = vsel %vm1309, %v473, %v1003
      %v1434 = vsel %vm1309, %v474, %v1005
      %v1435 = vsel %vm1309, %v475, %v1007
      %v1436 = vsel %vm1309, %v476, %v1009
      %v1437 = vsel %vm1309, %v477, %v1011
      %v1438 = vsel %vm1309, %v478, %v1013
      %v1439 = vsel %vm1309, %v479, %v1015
      %v1440 = vsel %vm1309, %v480, %v1017
      %v1441 = vsel %vm1309, %v481, %v1019
      %v1442 = vsel %vm1309, %v482, %v1021
      %v1443 = vsel %vm1309, %v483, %v1023
      %v1444 = vsel %vm1309, %v484, %v1025
      %v1445 = vsel %vm1309, %v485, %v1027
      %v1446 = vsel %vm1309, %v486, %v1029
      %v1447 = vsel %vm1309, %v487, %v1031
      %v1448 = vsel %vm1309, %v488, %v1033
      %v1449 = vsel %vm1309, %v489, %v1035
      %v1450 = vsel %vm1309, %v490, %v1037
      %v1451 = vsel %vm1309, %v491, %v1039
      %v1452 = vsel %vm1309, %v492, %v1041
      %v1453 = vsel %vm1309, %v493, %v1043
      %v1454 = vsel %vm1309, %v494, %v1045
      %v1455 = vsel %vm1309, %v495, %v1047
      %v1456 = vsel %vm1346, %v1420, %v1088
      %v1457 = vsel %vm1346, %v1421, %v1090
      %v1458 = vsel %vm1346, %v1422, %v1092
      %v1459 = vsel %vm1346, %v1423, %v1094
      %v1460 = vsel %vm1346, %v1424, %v1096
      %v1461 = vsel %vm1346, %v1425, %v1098
      %v1462 = vsel %vm1346, %v1426, %v1100
      %v1463 = vsel %vm1346, %v1427, %v1102
      %v1464 = vsel %vm1346, %v1428, %v1104
      %v1465 = vsel %vm1346, %v1429, %v1106
      %v1466 = vsel %vm1346, %v1430, %v1108
      %v1467 = vsel %vm1346, %v1431, %v1110
      %v1468 = vsel %vm1346, %v1432, %v1112
      %v1469 = vsel %vm1346, %v1433, %v1114
      %v1470 = vsel %vm1346, %v1434, %v1116
      %v1471 = vsel %vm1346, %v1435, %v1118
      %v1472 = vsel %vm1346, %v1436, %v1120
      %v1473 = vsel %vm1346, %v1437, %v1122
      %v1474 = vsel %vm1346, %v1438, %v1124
      %v1475 = vsel %vm1346, %v1439, %v1126
      %v1476 = vsel %vm1346, %v1440, %v1128
      %v1477 = vsel %vm1346, %v1441, %v1130
      %v1478 = vsel %vm1346, %v1442, %v1132
      %v1479 = vsel %vm1346, %v1443, %v1134
      %v1480 = vsel %vm1346, %v1444, %v1136
      %v1481 = vsel %vm1346, %v1445, %v1138
      %v1482 = vsel %vm1346, %v1446, %v1140
      %v1483 = vsel %vm1346, %v1447, %v1142
      %v1484 = vsel %vm1346, %v1448, %v1144
      %v1485 = vsel %vm1346, %v1449, %v1146
      %v1486 = vsel %vm1346, %v1450, %v1148
      %v1487 = vsel %vm1346, %v1451, %v1150
      %v1488 = vsel %vm1346, %v1452, %v1152
      %v1489 = vsel %vm1346, %v1453, %v1154
      %v1490 = vsel %vm1346, %v1454, %v1156
      %v1491 = vsel %vm1346, %v1455, %v1158
      %v1492 = vsel %vm1383, %v1456, %v1202
      %v1493 = vsel %vm1383, %v1457, %v1204
      %v1494 = vsel %vm1383, %v1458, %v1206
      %v1495 = vsel %vm1383, %v1459, %v1208
      %v1496 = vsel %vm1383, %v1460, %v1210
      %v1497 = vsel %vm1383, %v1461, %v1212
      %v1498 = vsel %vm1383, %v1462, %v1214
      %v1499 = vsel %vm1383, %v1463, %v1216
      %v1500 = vsel %vm1383, %v1464, %v1218
      %v1501 = vsel %vm1383, %v1465, %v1220
      %v1502 = vsel %vm1383, %v1466, %v1222
      %v1503 = vsel %vm1383, %v1467, %v1224
      %v1504 = vsel %vm1383, %v1468, %v1226
      %v1505 = vsel %vm1383, %v1469, %v1228
      %v1506 = vsel %vm1383, %v1470, %v1230
      %v1507 = vsel %vm1383, %v1471, %v1232
      %v1508 = vsel %vm1383, %v1472, %v1234
      %v1509 = vsel %vm1383, %v1473, %v1236
      %v1510 = vsel %vm1383, %v1474, %v1238
      %v1511 = vsel %vm1383, %v1475, %v1240
      %v1512 = vsel %vm1383, %v1476, %v1242
      %v1513 = vsel %vm1383, %v1477, %v1244
      %v1514 = vsel %vm1383, %v1478, %v1246
      %v1515 = vsel %vm1383, %v1479, %v1248
      %v1516 = vsel %vm1383, %v1480, %v1250
      %v1517 = vsel %vm1383, %v1481, %v1252
      %v1518 = vsel %vm1383, %v1482, %v1254
      %v1519 = vsel %vm1383, %v1483, %v1256
      %v1520 = vsel %vm1383, %v1484, %v1258
      %v1521 = vsel %vm1383, %v1485, %v1260
      %v1522 = vsel %vm1383, %v1486, %v1262
      %v1523 = vsel %vm1383, %v1487, %v1264
      %v1524 = vsel %vm1383, %v1488, %v1266
      %v1525 = vsel %vm1383, %v1489, %v1268
      %v1526 = vsel %vm1383, %v1490, %v1270
      %v1527 = vsel %vm1383, %v1491, %v1272
      %v1528 = vpack.c.bf16 %v1385, %v1384
      %v1529 = vpack.c.bf16 %v1493, %v1492
      %v1530 = vpack.c.bf16 %v506, %v505
      %v1531 = vpack.c.bf16 %v1387, %v1386
      %v1532 = vpack.c.bf16 %v1495, %v1494
      %v1533 = vpack.c.bf16 %v508, %v507
      %v1534 = vpack.c.bf16 %v1389, %v1388
      %v1535 = vpack.c.bf16 %v1497, %v1496
      %v1536 = vpack.c.bf16 %v510, %v509
      %v1537 = vpack.c.bf16 %v1391, %v1390
      %v1538 = vpack.c.bf16 %v1499, %v1498
      %v1539 = vpack.c.bf16 %v512, %v511
      %v1540 = vpack.c.bf16 %v1393, %v1392
      %v1541 = vpack.c.bf16 %v1501, %v1500
      %v1542 = vpack.c.bf16 %v514, %v513
      %v1543 = vpack.c.bf16 %v1395, %v1394
      %v1544 = vpack.c.bf16 %v1503, %v1502
      %v1545 = vpack.c.bf16 %v516, %v515
      %v1546 = vpack.c.bf16 %v1397, %v1396
      %v1547 = vpack.c.bf16 %v1505, %v1504
      %v1548 = vpack.c.bf16 %v518, %v517
      %v1549 = vpack.c.bf16 %v1399, %v1398
      %v1550 = vpack.c.bf16 %v1507, %v1506
      %v1551 = vpack.c.bf16 %v520, %v519
      %v1552 = vpack.c.bf16 %v1401, %v1400
      %v1553 = vpack.c.bf16 %v1509, %v1508
      %v1554 = vpack.c.bf16 %v522, %v521
      %v1555 = vpack.c.bf16 %v1403, %v1402
      %v1556 = vpack.c.bf16 %v1511, %v1510
      %v1557 = vpack.c.bf16 %v524, %v523
      %v1558 = vpack.c.bf16 %v1405, %v1404
      %v1559 = vpack.c.bf16 %v1513, %v1512
      %v1560 = vpack.c.bf16 %v526, %v525
      %v1561 = vpack.c.bf16 %v1407, %v1406
      %v1562 = vpack.c.bf16 %v1515, %v1514
      %v1563 = vpack.c.bf16 %v528, %v527
      %v1564 = vpack.c.bf16 %v1409, %v1408
      %v1565 = vpack.c.bf16 %v1517, %v1516
      %v1566 = vpack.c.bf16 %v530, %v529
      %v1567 = vpack.c.bf16 %v1411, %v1410
      %v1568 = vpack.c.bf16 %v1519, %v1518
      %v1569 = vpack.c.bf16 %v532, %v531
      %v1570 = vpack.c.bf16 %v1413, %v1412
      %v1571 = vpack.c.bf16 %v1521, %v1520
      %v1572 = vpack.c.bf16 %v534, %v533
      %v1573 = vpack.c.bf16 %v1415, %v1414
      %v1574 = vpack.c.bf16 %v1523, %v1522
      %v1575 = vpack.c.bf16 %v536, %v535
      %v1576 = vpack.c.bf16 %v1417, %v1416
      %v1577 = vpack.c.bf16 %v1525, %v1524
      %v1578 = vpack.c.bf16 %v538, %v537
      %v1579 = vpack.c.bf16 %v1419, %v1418
      %v1580 = vpack.c.bf16 %v1527, %v1526
      %v1581 = vpack.c.bf16 %v540, %v539
      %v1582 = vld [vmem:[%s1] sm:$0xf]
      %v1583 = vld [vmem:[%s1 + $0x4] sm:$0xf]
      %v1584 = vld [vmem:[%s1 + $0x8] sm:$0xf]
      %v1585 = vld [vmem:[%s1 + $0xc] sm:$0xf]
      %v1586 = vld [vmem:[%s1 + $0x10] sm:$0xf]
      %v1587 = vld [vmem:[%s1 + $0x14] sm:$0xf]
      %v1588 = vld [vmem:[%s1 + $0x18] sm:$0xf]
      %v1589 = vld [vmem:[%s1 + $0x1c] sm:$0xf]
      %v1590 = vld [vmem:[%s1 + $0x20] sm:$0xf]
      %v1591 = vld [vmem:[%s1 + $0x24] sm:$0xf]
      %v1592 = vld [vmem:[%s1 + $0x28] sm:$0xf]
      %v1593 = vld [vmem:[%s1 + $0x2c] sm:$0xf]
      %v1594 = vld [vmem:[%s1 + $0x30] sm:$0xf]
      %v1595 = vld [vmem:[%s1 + $0x34] sm:$0xf]
      %v1596 = vld [vmem:[%s1 + $0x38] sm:$0xf]
      %v1597 = vld [vmem:[%s1 + $0x3c] sm:$0xf]
      %v1598 = vld [vmem:[%s1 + $0x40] sm:$0xf]
      %v1599 = vld [vmem:[%s1 + $0x44] sm:$0xf]
      %v1600 = vld [vmem:[%s1 + $0x48] sm:$0xf]
      %v1601 = vld [vmem:[%s1 + $0x4c] sm:$0xf]
      %v1602 = vld [vmem:[%s1 + $0x50] sm:$0xf]
      %v1603 = vld [vmem:[%s1 + $0x54] sm:$0xf]
      %v1604 = vld [vmem:[%s1 + $0x58] sm:$0xf]
      %v1605 = vld [vmem:[%s1 + $0x5c] sm:$0xf]
      %v1606 = vld [vmem:[%s1 + $0x60] sm:$0xf]
      %v1607 = vld [vmem:[%s1 + $0x64] sm:$0xf]
      %v1608 = vld [vmem:[%s1 + $0x68] sm:$0xf]
      %v1609 = vld [vmem:[%s1 + $0x6c] sm:$0xf]
      %v1610 = vld [vmem:[%s1 + $0x70] sm:$0xf]
      %v1611 = vld [vmem:[%s1 + $0x74] sm:$0xf]
      %v1612 = vld [vmem:[%s1 + $0x78] sm:$0xf]
      %v1613 = vld [vmem:[%s1 + $0x7c] sm:$0xf]
      %v1614 = vld [vmem:[%s1 + $0x80] sm:$0xf]
      %v1615 = vld [vmem:[%s1 + $0x84] sm:$0xf]
      %v1616 = vld [vmem:[%s1 + $0x88] sm:$0xf]
      %v1617 = vld [vmem:[%s1 + $0x8c] sm:$0xf]
      %v1618 = vld [vmem:[%s2] sm:$0x1]
      %v1620 = vlaneseq
      %v1621 = vshrl.u32 %v1620, 7
      %v1622 = vsub.s32 0, %v1621
      %v1623 = vrot.slane %v1618, %v1622
      %v1661 = vunpack.c.l.b16 %v1582
      %v1662 = vunpack.c.l.b16 %v1583
      %v1663 = vunpack.c.l.b16 %v1584
      %v1664 = vunpack.c.l.b16 %v1585
      %v1665 = vunpack.c.l.b16 %v1586
      %v1666 = vunpack.c.l.b16 %v1587
      %v1667 = vunpack.c.l.b16 %v1588
      %v1668 = vunpack.c.l.b16 %v1589
      %v1669 = vunpack.c.l.b16 %v1590
      %v1670 = vunpack.c.l.b16 %v1591
      %v1671 = vunpack.c.l.b16 %v1592
      %v1672 = vunpack.c.l.b16 %v1593
      %v1673 = vunpack.c.l.b16 %v1594
      %v1674 = vunpack.c.l.b16 %v1595
      %v1675 = vunpack.c.l.b16 %v1596
      %v1676 = vunpack.c.l.b16 %v1597
      %v1677 = vunpack.c.l.b16 %v1598
      %v1678 = vunpack.c.l.b16 %v1599
      %v1679 = vunpack.c.l.b16 %v1600
      %v1680 = vunpack.c.l.b16 %v1601
      %v1681 = vunpack.c.l.b16 %v1602
      %v1682 = vunpack.c.l.b16 %v1603
      %v1683 = vunpack.c.l.b16 %v1604
      %v1684 = vunpack.c.l.b16 %v1605
      %v1685 = vunpack.c.l.b16 %v1606
      %v1686 = vunpack.c.l.b16 %v1607
      %v1687 = vunpack.c.l.b16 %v1608
      %v1688 = vunpack.c.l.b16 %v1609
      %v1689 = vunpack.c.l.b16 %v1610
      %v1690 = vunpack.c.l.b16 %v1611
      %v1691 = vunpack.c.l.b16 %v1612
      %v1692 = vunpack.c.l.b16 %v1613
      %v1693 = vunpack.c.l.b16 %v1614
      %v1694 = vunpack.c.l.b16 %v1615
      %v1695 = vunpack.c.l.b16 %v1616
      %v1696 = vunpack.c.l.b16 %v1617
      %v1697 = vpack.c.b16 %v1662, %v1661
      %v1698 = vpack.c.b16 %v1664, %v1663
      %v1699 = vpack.c.b16 %v1666, %v1665
      %v1700 = vpack.c.b16 %v1668, %v1667
      %v1701 = vpack.c.b16 %v1670, %v1669
      %v1702 = vpack.c.b16 %v1672, %v1671
      %v1703 = vpack.c.b16 %v1674, %v1673
      %v1704 = vpack.c.b16 %v1676, %v1675
      %v1705 = vpack.c.b16 %v1678, %v1677
      %v1706 = vpack.c.b16 %v1680, %v1679
      %v1707 = vpack.c.b16 %v1682, %v1681
      %v1708 = vpack.c.b16 %v1684, %v1683
      %v1709 = vpack.c.b16 %v1686, %v1685
      %v1710 = vpack.c.b16 %v1688, %v1687
      %v1711 = vpack.c.b16 %v1690, %v1689
      %v1712 = vpack.c.b16 %v1692, %v1691
      %v1713 = vpack.c.b16 %v1694, %v1693
      %v1714 = vpack.c.b16 %v1696, %v1695
      %v1734 = vsel %vm1309, %v1530, 0
      %v1737 = vsel %vm1309, %v1533, 0
      %v1740 = vsel %vm1309, %v1536, 0
      %v1743 = vsel %vm1309, %v1539, 0
      %v1746 = vsel %vm1309, %v1542, 0
      %v1749 = vsel %vm1309, %v1545, 0
      %v1752 = vsel %vm1309, %v1548, 0
      %v1755 = vsel %vm1309, %v1551, 0
      %v1758 = vsel %vm1309, %v1554, 0
      %v1761 = vsel %vm1309, %v1557, 0
      %v1764 = vsel %vm1309, %v1560, 0
      %v1767 = vsel %vm1309, %v1563, 0
      %v1770 = vsel %vm1309, %v1566, 0
      %v1773 = vsel %vm1309, %v1569, 0
      %v1776 = vsel %vm1309, %v1572, 0
      %v1779 = vsel %vm1309, %v1575, 0
      %v1782 = vsel %vm1309, %v1578, 0
      %v1785 = vsel %vm1309, %v1581, 0
      %1787 = vmatprep.subr.bf16.mxu0 0
      %1788 = vmatpush1.bf16.msra.mxu0 %v1697
      %1789 = vmatprep.subr.bf16.mxu0 0
      %1790 = vmatpush1.bf16.msra.mxu0 %v1698
      %1791 = vmatprep.subr.bf16.mxu0 0
      %1792 = vmatpush1.bf16.msra.mxu0 %v1699
      %1793 = vmatprep.subr.bf16.mxu0 0
      %1794 = vmatpush1.bf16.msra.mxu0 %v1700
      %1795 = vmatprep.subr.bf16.mxu0 0
      %1796 = vmatpush1.bf16.msra.mxu0 %v1701
      %1797 = vmatprep.subr.bf16.mxu0 0
      %1798 = vmatpush1.bf16.msra.mxu0 %v1702
      %1799 = vmatprep.subr.bf16.mxu0 0
      %1800 = vmatpush1.bf16.msra.mxu0 %v1703
      %1801 = vmatprep.subr.bf16.mxu0 0
      %1802 = vmatpush1.bf16.msra.mxu0 %v1704
      %1803 = vmatprep.subr.bf16.mxu0 0
      %1804 = vmatpush1.bf16.msra.mxu0 %v1705
      %1805 = vmatprep.subr.bf16.mxu0 0
      %1806 = vmatpush1.bf16.msra.mxu0 %v1706
      %1807 = vmatprep.subr.bf16.mxu0 0
      %1808 = vmatpush1.bf16.msra.mxu0 %v1707
      %1809 = vmatprep.subr.bf16.mxu0 0
      %1810 = vmatpush1.bf16.msra.mxu0 %v1708
      %1811 = vmatprep.subr.bf16.mxu0 0
      %1812 = vmatpush1.bf16.msra.mxu0 %v1709
      %1813 = vmatprep.subr.bf16.mxu0 0
      %1814 = vmatpush1.bf16.msra.mxu0 %v1710
      %1815 = vmatprep.subr.bf16.mxu0 0
      %1816 = vmatpush1.bf16.msra.mxu0 %v1711
      %1817 = vmatprep.subr.bf16.mxu0 0
      %1818 = vmatpush1.bf16.msra.mxu0 %v1712
      %1819 = vmatprep.mubr.bf16.mxu0 %v1529
      %1820 = vmatmul.mubr.bf16.gmra.mrb[0].mxu0 %v1528
      %v1821 = vpop.f32.mrb[0].mxu0
      %v1822 = vadd.f32 %v1623, %v1821
      %v1823 = vpop.f32.mrb[0].mxu0
      %v1824 = vpop.f32.mrb[0].mxu0
      %v1825 = vadd.f32 %v1623, %v1824
      %v1826 = vpop.f32.mrb[0].mxu0
      %1827 = vmatprep.mubr.bf16.mxu0 %v1532
      %1828 = vmatmul.mubr.bf16.gmra.mrb[0].mxu0 %v1531
      %v1829 = vpop.f32.mrb[0].mxu0
      %v1830 = vadd.f32 %v1623, %v1829
      %v1831 = vpop.f32.mrb[0].mxu0
      %v1832 = vpop.f32.mrb[0].mxu0
      %v1833 = vadd.f32 %v1623, %v1832
      %v1834 = vpop.f32.mrb[0].mxu0
      %1835 = vmatprep.mubr.bf16.mxu0 %v1535
      %1836 = vmatmul.mubr.bf16.gmra.mrb[0].mxu0 %v1534
      %v1837 = vpop.f32.mrb[0].mxu0
      %v1838 = vadd.f32 %v1623, %v1837
      %v1839 = vpop.f32.mrb[0].mxu0
      %v1840 = vpop.f32.mrb[0].mxu0
      %v1841 = vadd.f32 %v1623, %v1840
      %v1842 = vpop.f32.mrb[0].mxu0
      %1843 = vmatprep.mubr.bf16.mxu0 %v1538
      %1844 = vmatmul.mubr.bf16.gmra.mrb[0].mxu0 %v1537
      %v1845 = vpop.f32.mrb[0].mxu0
      %v1846 = vadd.f32 %v1623, %v1845
      %v1847 = vpop.f32.mrb[0].mxu0
      %v1848 = vpop.f32.mrb[0].mxu0
      %v1849 = vadd.f32 %v1623, %v1848
      %v1850 = vpop.f32.mrb[0].mxu0
      %1851 = vmatprep.mubr.bf16.mxu0 %v1541
      %1852 = vmatmul.mubr.bf16.gmra.mrb[0].mxu0 %v1540
      %v1853 = vpop.f32.mrb[0].mxu0
      %v1854 = vadd.f32 %v1623, %v1853
      %v1855 = vpop.f32.mrb[0].mxu0
      %v1856 = vpop.f32.mrb[0].mxu0
      %v1857 = vadd.f32 %v1623, %v1856
      %v1858 = vpop.f32.mrb[0].mxu0
      %1859 = vmatprep.mubr.bf16.mxu0 %v1544
      %1860 = vmatmul.mubr.bf16.gmra.mrb[0].mxu0 %v1543
      %v1861 = vpop.f32.mrb[0].mxu0
      %v1862 = vadd.f32 %v1623, %v1861
      %v1863 = vpop.f32.mrb[0].mxu0
      %v1864 = vpop.f32.mrb[0].mxu0
      %v1865 = vadd.f32 %v1623, %v1864
      %v1866 = vpop.f32.mrb[0].mxu0
      %1867 = vmatprep.mubr.bf16.mxu0 %v1547
      %1868 = vmatmul.mubr.bf16.gmra.mrb[0].mxu0 %v1546
      %v1869 = vpop.f32.mrb[0].mxu0
      %v1870 = vadd.f32 %v1623, %v1869
      %v1871 = vpop.f32.mrb[0].mxu0
      %v1872 = vpop.f32.mrb[0].mxu0
      %v1873 = vadd.f32 %v1623, %v1872
      %v1874 = vpop.f32.mrb[0].mxu0
      %1875 = vmatprep.mubr.bf16.mxu0 %v1550
      %1876 = vmatmul.mubr.bf16.gmra.mrb[0].mxu0 %v1549
      %v1877 = vpop.f32.mrb[0].mxu0
      %v1878 = vadd.f32 %v1623, %v1877
      %v1879 = vpop.f32.mrb[0].mxu0
      %v1880 = vpop.f32.mrb[0].mxu0
      %v1881 = vadd.f32 %v1623, %v1880
      %v1882 = vpop.f32.mrb[0].mxu0
      %1883 = vmatprep.mubr.bf16.mxu0 %v1553
      %1884 = vmatmul.mubr.bf16.gmra.mrb[0].mxu0 %v1552
      %v1885 = vpop.f32.mrb[0].mxu0
      %v1886 = vadd.f32 %v1623, %v1885
      %v1887 = vpop.f32.mrb[0].mxu0
      %v1888 = vpop.f32.mrb[0].mxu0
      %v1889 = vadd.f32 %v1623, %v1888
      %v1890 = vpop.f32.mrb[0].mxu0
      %1891 = vmatprep.mubr.bf16.mxu0 %v1556
      %1892 = vmatmul.mubr.bf16.gmra.mrb[0].mxu0 %v1555
      %v1893 = vpop.f32.mrb[0].mxu0
      %v1894 = vadd.f32 %v1623, %v1893
      %v1895 = vpop.f32.mrb[0].mxu0
      %v1896 = vpop.f32.mrb[0].mxu0
      %v1897 = vadd.f32 %v1623, %v1896
      %v1898 = vpop.f32.mrb[0].mxu0
      %1899 = vmatprep.mubr.bf16.mxu0 %v1559
      %1900 = vmatmul.mubr.bf16.gmra.mrb[0].mxu0 %v1558
      %v1901 = vpop.f32.mrb[0].mxu0
      %v1902 = vadd.f32 %v1623, %v1901
      %v1903 = vpop.f32.mrb[0].mxu0
      %v1904 = vpop.f32.mrb[0].mxu0
      %v1905 = vadd.f32 %v1623, %v1904
      %v1906 = vpop.f32.mrb[0].mxu0
      %1907 = vmatprep.mubr.bf16.mxu0 %v1562
      %1908 = vmatmul.mubr.bf16.gmra.mrb[0].mxu0 %v1561
      %v1909 = vpop.f32.mrb[0].mxu0
      %v1910 = vadd.f32 %v1623, %v1909
      %v1911 = vpop.f32.mrb[0].mxu0
      %v1912 = vpop.f32.mrb[0].mxu0
      %v1913 = vadd.f32 %v1623, %v1912
      %v1914 = vpop.f32.mrb[0].mxu0
      %1915 = vmatprep.mubr.bf16.mxu0 %v1565
      %1916 = vmatmul.mubr.bf16.gmra.mrb[0].mxu0 %v1564
      %v1917 = vpop.f32.mrb[0].mxu0
      %v1918 = vadd.f32 %v1623, %v1917
      %v1919 = vpop.f32.mrb[0].mxu0
      %v1920 = vpop.f32.mrb[0].mxu0
      %v1921 = vadd.f32 %v1623, %v1920
      %v1922 = vpop.f32.mrb[0].mxu0
      %1923 = vmatprep.mubr.bf16.mxu0 %v1568
      %1924 = vmatmul.mubr.bf16.gmra.mrb[0].mxu0 %v1567
      %v1925 = vpop.f32.mrb[0].mxu0
      %v1926 = vadd.f32 %v1623, %v1925
      %v1927 = vpop.f32.mrb[0].mxu0
      %v1928 = vpop.f32.mrb[0].mxu0
      %v1929 = vadd.f32 %v1623, %v1928
      %v1930 = vpop.f32.mrb[0].mxu0
      %1931 = vmatprep.mubr.bf16.mxu0 %v1571
      %1932 = vmatmul.mubr.bf16.gmra.mrb[0].mxu0 %v1570
      %v1933 = vpop.f32.mrb[0].mxu0
      %v1934 = vadd.f32 %v1623, %v1933
      %v1935 = vpop.f32.mrb[0].mxu0
      %v1936 = vpop.f32.mrb[0].mxu0
      %v1937 = vadd.f32 %v1623, %v1936
      %v1938 = vpop.f32.mrb[0].mxu0
      %1939 = vmatprep.mubr.bf16.mxu0 %v1574
      %1940 = vmatmul.mubr.bf16.gmra.mrb[0].mxu0 %v1573
      %v1941 = vpop.f32.mrb[0].mxu0
      %v1942 = vadd.f32 %v1623, %v1941
      %v1943 = vpop.f32.mrb[0].mxu0
      %v1944 = vpop.f32.mrb[0].mxu0
      %v1945 = vadd.f32 %v1623, %v1944
      %v1946 = vpop.f32.mrb[0].mxu0
      %1947 = vmatprep.mubr.bf16.mxu0 %v1577
      %1948 = vmatmul.mubr.bf16.gmra.mrb[0].mxu0 %v1576
      %v1949 = vpop.f32.mrb[0].mxu0
      %v1950 = vadd.f32 %v1623, %v1949
      %v1951 = vpop.f32.mrb[0].mxu0
      %v1952 = vpop.f32.mrb[0].mxu0
      %v1953 = vadd.f32 %v1623, %v1952
      %v1954 = vpop.f32.mrb[0].mxu0
      %1955 = vmatprep.mubr.bf16.mxu0 %v1580
      %1956 = vmatmul.mubr.bf16.gmra.mrb[0].mxu0 %v1579
      %v1957 = vpop.f32.mrb[0].mxu0
      %v1958 = vadd.f32 %v1623, %v1957
      %v1959 = vpop.f32.mrb[0].mxu0
      %v1960 = vpop.f32.mrb[0].mxu0
      %v1961 = vadd.f32 %v1623, %v1960
      %v1962 = vpop.f32.mrb[0].mxu0
      %1963 = vdwg.mxu0
      %1964 = vmatprep.subr.bf16.mxu0 0
      %1965 = vmatpush1.bf16.msra.mxu0 %v1713
      %1966 = vmatprep.subr.bf16.mxu0 0
      %1967 = vmatpush1.bf16.msra.mxu0 %v1714
      %1968 = vmatprep.subr.bf16.mxu0 0
      %1969 = vmatpush1.bf16.msra.mxu0 0
      %1970 = vmatprep.subr.bf16.mxu0 0
      %1971 = vmatpush1.bf16.msra.mxu0 0
      %1972 = vmatprep.subr.bf16.mxu0 0
      %1973 = vmatpush1.bf16.msra.mxu0 0
      %1974 = vmatprep.subr.bf16.mxu0 0
      %1975 = vmatpush1.bf16.msra.mxu0 0
      %1976 = vmatprep.subr.bf16.mxu0 0
      %1977 = vmatpush1.bf16.msra.mxu0 0
      %1978 = vmatprep.subr.bf16.mxu0 0
      %1979 = vmatpush1.bf16.msra.mxu0 0
      %1980 = vmatprep.subr.bf16.mxu0 0
      %1981 = vmatpush1.bf16.msra.mxu0 0
      %1982 = vmatprep.subr.bf16.mxu0 0
      %1983 = vmatpush1.bf16.msra.mxu0 0
      %1984 = vmatprep.subr.bf16.mxu0 0
      %1985 = vmatpush1.bf16.msra.mxu0 0
      %1986 = vmatprep.subr.bf16.mxu0 0
      %1987 = vmatpush1.bf16.msra.mxu0 0
      %1988 = vmatprep.subr.bf16.mxu0 0
      %1989 = vmatpush1.bf16.msra.mxu0 0
      %1990 = vmatprep.subr.bf16.mxu0 0
      %1991 = vmatpush1.bf16.msra.mxu0 0
      %1992 = vmatprep.subr.bf16.mxu0 0
      %1993 = vmatpush1.bf16.msra.mxu0 0
      %1994 = vmatprep.subr.bf16.mxu0 0
      %1995 = vmatpush1.bf16.msra.mxu0 0
      %1996 = vmatprep.mubr.bf16.mxu0 0
      %1997 = vmatmul.mubr.bf16.gmra.mrb[0].mxu0 %v1734
      %v1998 = vpop.f32.mrb[0].mxu0
      %v1999 = vadd.f32 %v1822, %v1998
      %v2000 = vpop.f32.mrb[0].mxu0
      %v2001 = vpop.f32.mrb[0].mxu0
      %v2002 = vadd.f32 %v1825, %v2001
      %v2003 = vpop.f32.mrb[0].mxu0
      %2004 = vmatprep.mubr.bf16.mxu0 0
      %2005 = vmatmul.mubr.bf16.gmra.mrb[0].mxu0 %v1737
      %v2006 = vpop.f32.mrb[0].mxu0
      %v2007 = vadd.f32 %v1830, %v2006
      %v2008 = vpop.f32.mrb[0].mxu0
      %v2009 = vpop.f32.mrb[0].mxu0
      %v2010 = vadd.f32 %v1833, %v2009
      %v2011 = vpop.f32.mrb[0].mxu0
      %2012 = vmatprep.mubr.bf16.mxu0 0
      %2013 = vmatmul.mubr.bf16.gmra.mrb[0].mxu0 %v1740
      %v2014 = vpop.f32.mrb[0].mxu0
      %v2015 = vadd.f32 %v1838, %v2014
      %v2016 = vpop.f32.mrb[0].mxu0
      %v2017 = vpop.f32.mrb[0].mxu0
      %v2018 = vadd.f32 %v1841, %v2017
      %v2019 = vpop.f32.mrb[0].mxu0
      %2020 = vmatprep.mubr.bf16.mxu0 0
      %2021 = vmatmul.mubr.bf16.gmra.mrb[0].mxu0 %v1743
      %v2022 = vpop.f32.mrb[0].mxu0
      %v2023 = vadd.f32 %v1846, %v2022
      %v2024 = vpop.f32.mrb[0].mxu0
      %v2025 = vpop.f32.mrb[0].mxu0
      %v2026 = vadd.f32 %v1849, %v2025
      %v2027 = vpop.f32.mrb[0].mxu0
      %2028 = vmatprep.mubr.bf16.mxu0 0
      %2029 = vmatmul.mubr.bf16.gmra.mrb[0].mxu0 %v1746
      %v2030 = vpop.f32.mrb[0].mxu0
      %v2031 = vadd.f32 %v1854, %v2030
      %v2032 = vpop.f32.mrb[0].mxu0
      %v2033 = vpop.f32.mrb[0].mxu0
      %v2034 = vadd.f32 %v1857, %v2033
      %v2035 = vpop.f32.mrb[0].mxu0
      %2036 = vmatprep.mubr.bf16.mxu0 0
      %2037 = vmatmul.mubr.bf16.gmra.mrb[0].mxu0 %v1749
      %v2038 = vpop.f32.mrb[0].mxu0
      %v2039 = vadd.f32 %v1862, %v2038
      %v2040 = vpop.f32.mrb[0].mxu0
      %v2041 = vpop.f32.mrb[0].mxu0
      %v2042 = vadd.f32 %v1865, %v2041
      %v2043 = vpop.f32.mrb[0].mxu0
      %2044 = vmatprep.mubr.bf16.mxu0 0
      %2045 = vmatmul.mubr.bf16.gmra.mrb[0].mxu0 %v1752
      %v2046 = vpop.f32.mrb[0].mxu0
      %v2047 = vadd.f32 %v1870, %v2046
      %v2048 = vpop.f32.mrb[0].mxu0
      %v2049 = vpop.f32.mrb[0].mxu0
      %v2050 = vadd.f32 %v1873, %v2049
      %v2051 = vpop.f32.mrb[0].mxu0
      %2052 = vmatprep.mubr.bf16.mxu0 0
      %2053 = vmatmul.mubr.bf16.gmra.mrb[0].mxu0 %v1755
      %v2054 = vpop.f32.mrb[0].mxu0
      %v2055 = vadd.f32 %v1878, %v2054
      %v2056 = vpop.f32.mrb[0].mxu0
      %v2057 = vpop.f32.mrb[0].mxu0
      %v2058 = vadd.f32 %v1881, %v2057
      %v2059 = vpop.f32.mrb[0].mxu0
      %2060 = vmatprep.mubr.bf16.mxu0 0
      %2061 = vmatmul.mubr.bf16.gmra.mrb[0].mxu0 %v1758
      %v2062 = vpop.f32.mrb[0].mxu0
      %v2063 = vadd.f32 %v1886, %v2062
      %v2064 = vpop.f32.mrb[0].mxu0
      %v2065 = vpop.f32.mrb[0].mxu0
      %v2066 = vadd.f32 %v1889, %v2065
      %v2067 = vpop.f32.mrb[0].mxu0
      %2068 = vmatprep.mubr.bf16.mxu0 0
      %2069 = vmatmul.mubr.bf16.gmra.mrb[0].mxu0 %v1761
      %v2070 = vpop.f32.mrb[0].mxu0
      %v2071 = vadd.f32 %v1894, %v2070
      %v2072 = vpop.f32.mrb[0].mxu0
      %v2073 = vpop.f32.mrb[0].mxu0
      %v2074 = vadd.f32 %v1897, %v2073
      %v2075 = vpop.f32.mrb[0].mxu0
      %2076 = vmatprep.mubr.bf16.mxu0 0
      %2077 = vmatmul.mubr.bf16.gmra.mrb[0].mxu0 %v1764
      %v2078 = vpop.f32.mrb[0].mxu0
      %v2079 = vadd.f32 %v1902, %v2078
      %v2080 = vpop.f32.mrb[0].mxu0
      %v2081 = vpop.f32.mrb[0].mxu0
      %v2082 = vadd.f32 %v1905, %v2081
      %v2083 = vpop.f32.mrb[0].mxu0
      %2084 = vmatprep.mubr.bf16.mxu0 0
      %2085 = vmatmul.mubr.bf16.gmra.mrb[0].mxu0 %v1767
      %v2086 = vpop.f32.mrb[0].mxu0
      %v2087 = vadd.f32 %v1910, %v2086
      %v2088 = vpop.f32.mrb[0].mxu0
      %v2089 = vpop.f32.mrb[0].mxu0
      %v2090 = vadd.f32 %v1913, %v2089
      %v2091 = vpop.f32.mrb[0].mxu0
      %2092 = vmatprep.mubr.bf16.mxu0 0
      %2093 = vmatmul.mubr.bf16.gmra.mrb[0].mxu0 %v1770
      %v2094 = vpop.f32.mrb[0].mxu0
      %v2095 = vadd.f32 %v1918, %v2094
      %v2096 = vpop.f32.mrb[0].mxu0
      %v2097 = vpop.f32.mrb[0].mxu0
      %v2098 = vadd.f32 %v1921, %v2097
      %v2099 = vpop.f32.mrb[0].mxu0
      %2100 = vmatprep.mubr.bf16.mxu0 0
      %2101 = vmatmul.mubr.bf16.gmra.mrb[0].mxu0 %v1773
      %v2102 = vpop.f32.mrb[0].mxu0
      %v2103 = vadd.f32 %v1926, %v2102
      %v2104 = vpop.f32.mrb[0].mxu0
      %v2105 = vpop.f32.mrb[0].mxu0
      %v2106 = vadd.f32 %v1929, %v2105
      %v2107 = vpop.f32.mrb[0].mxu0
      %2108 = vmatprep.mubr.bf16.mxu0 0
      %2109 = vmatmul.mubr.bf16.gmra.mrb[0].mxu0 %v1776
      %v2110 = vpop.f32.mrb[0].mxu0
      %v2111 = vadd.f32 %v1934, %v2110
      %v2112 = vpop.f32.mrb[0].mxu0
      %v2113 = vpop.f32.mrb[0].mxu0
      %v2114 = vadd.f32 %v1937, %v2113
      %v2115 = vpop.f32.mrb[0].mxu0
      %2116 = vmatprep.mubr.bf16.mxu0 0
      %2117 = vmatmul.mubr.bf16.gmra.mrb[0].mxu0 %v1779
      %v2118 = vpop.f32.mrb[0].mxu0
      %v2119 = vadd.f32 %v1942, %v2118
      %v2120 = vpop.f32.mrb[0].mxu0
      %v2121 = vpop.f32.mrb[0].mxu0
      %v2122 = vadd.f32 %v1945, %v2121
      %v2123 = vpop.f32.mrb[0].mxu0
      %2124 = vmatprep.mubr.bf16.mxu0 0
      %2125 = vmatmul.mubr.bf16.gmra.mrb[0].mxu0 %v1782
      %v2126 = vpop.f32.mrb[0].mxu0
      %v2127 = vadd.f32 %v1950, %v2126
      %v2128 = vpop.f32.mrb[0].mxu0
      %v2129 = vpop.f32.mrb[0].mxu0
      %v2130 = vadd.f32 %v1953, %v2129
      %v2131 = vpop.f32.mrb[0].mxu0
      %2132 = vmatprep.mubr.bf16.mxu0 0
      %2133 = vmatmul.mubr.bf16.gmra.mrb[0].mxu0 %v1785
      %v2134 = vpop.f32.mrb[0].mxu0
      %v2135 = vadd.f32 %v1958, %v2134
      %v2136 = vpop.f32.mrb[0].mxu0
      %v2137 = vpop.f32.mrb[0].mxu0
      %v2138 = vadd.f32 %v1961, %v2137
      %v2139 = vpop.f32.mrb[0].mxu0
      %2140 = vdwg.mxu0
      %v2141 = vld [vmem:[%s7] sm:$0xff]
      %v2142 = vld [vmem:[%s7 + $0x8] sm:$0xff]
      %v2143 = vld [vmem:[%s7 + $0x10] sm:$0xff]
      %v2144 = vld [vmem:[%s7 + $0x18] sm:$0xff]
      %v2145 = vld [vmem:[%s7 + $0x20] sm:$0xff]
      %v2146 = vld [vmem:[%s7 + $0x28] sm:$0xff]
      %v2147 = vld [vmem:[%s7 + $0x30] sm:$0xff]
      %v2148 = vld [vmem:[%s7 + $0x38] sm:$0xff]
      %v2149 = vld [vmem:[%s7 + $0x40] sm:$0xff]
      %v2150 = vld [vmem:[%s7 + $0x48] sm:$0xff]
      %v2151 = vld [vmem:[%s7 + $0x50] sm:$0xff]
      %v2152 = vld [vmem:[%s7 + $0x58] sm:$0xff]
      %v2153 = vld [vmem:[%s7 + $0x60] sm:$0xff]
      %v2154 = vld [vmem:[%s7 + $0x68] sm:$0xff]
      %v2155 = vld [vmem:[%s7 + $0x70] sm:$0xff]
      %v2156 = vld [vmem:[%s7 + $0x78] sm:$0xff]
      %v2157 = vld [vmem:[%s7 + $0x80] sm:$0xff]
      %v2158 = vld [vmem:[%s7 + $0x88] sm:$0xff]
      %v2159 = vld [vmem:[%s7 + $0x90] sm:$0xff]
      %v2160 = vld [vmem:[%s7 + $0x98] sm:$0xff]
      %v2161 = vld [vmem:[%s7 + $0xa0] sm:$0xff]
      %v2162 = vld [vmem:[%s7 + $0xa8] sm:$0xff]
      %v2163 = vld [vmem:[%s7 + $0xb0] sm:$0xff]
      %v2164 = vld [vmem:[%s7 + $0xb8] sm:$0xff]
      %v2165 = vld [vmem:[%s7 + $0xc0] sm:$0xff]
      %v2166 = vld [vmem:[%s7 + $0xc8] sm:$0xff]
      %v2167 = vld [vmem:[%s7 + $0xd0] sm:$0xff]
      %v2168 = vld [vmem:[%s7 + $0xd8] sm:$0xff]
      %v2169 = vld [vmem:[%s7 + $0xe0] sm:$0xff]
      %v2170 = vld [vmem:[%s7 + $0xe8] sm:$0xff]
      %v2171 = vld [vmem:[%s7 + $0xf0] sm:$0xff]
      %v2172 = vld [vmem:[%s7 + $0xf8] sm:$0xff]
      %v2173 = vld [vmem:[%s7 + $0x100] sm:$0xff]
      %v2174 = vld [vmem:[%s7 + $0x108] sm:$0xff]
      %v2175 = vld [vmem:[%s7 + $0x110] sm:$0xff]
      %v2176 = vld [vmem:[%s7 + $0x118] sm:$0xff]
      %2178 = vset.pattern.permute.xlu0 0
      %2179 = vperm.xlu0 %2178, %v2141
      %v2180 = vpop.permute.xlu0 %2179
      %2183 = vset.pattern.permute.xlu0 0
      %2184 = vperm.xlu0 %2183, %v2142
      %v2185 = vpop.permute.xlu0 %2184
      %2188 = vset.pattern.permute.xlu0 0
      %2189 = vperm.xlu0 %2188, %v2143
      %v2190 = vpop.permute.xlu0 %2189
      %2193 = vset.pattern.permute.xlu0 0
      %2194 = vperm.xlu0 %2193, %v2144
      %v2195 = vpop.permute.xlu0 %2194
      %2198 = vset.pattern.permute.xlu0 0
      %2199 = vperm.xlu0 %2198, %v2145
      %v2200 = vpop.permute.xlu0 %2199
      %2203 = vset.pattern.permute.xlu0 0
      %2204 = vperm.xlu0 %2203, %v2146
      %v2205 = vpop.permute.xlu0 %2204
      %2208 = vset.pattern.permute.xlu0 0
      %2209 = vperm.xlu0 %2208, %v2147
      %v2210 = vpop.permute.xlu0 %2209
      %2213 = vset.pattern.permute.xlu0 0
      %2214 = vperm.xlu0 %2213, %v2148
      %v2215 = vpop.permute.xlu0 %2214
      %2218 = vset.pattern.permute.xlu0 0
      %2219 = vperm.xlu0 %2218, %v2149
      %v2220 = vpop.permute.xlu0 %2219
      %2223 = vset.pattern.permute.xlu0 0
      %2224 = vperm.xlu0 %2223, %v2150
      %v2225 = vpop.permute.xlu0 %2224
      %2228 = vset.pattern.permute.xlu0 0
      %2229 = vperm.xlu0 %2228, %v2151
      %v2230 = vpop.permute.xlu0 %2229
      %2233 = vset.pattern.permute.xlu0 0
      %2234 = vperm.xlu0 %2233, %v2152
      %v2235 = vpop.permute.xlu0 %2234
      %2238 = vset.pattern.permute.xlu0 0
      %2239 = vperm.xlu0 %2238, %v2153
      %v2240 = vpop.permute.xlu0 %2239
      %2243 = vset.pattern.permute.xlu0 0
      %2244 = vperm.xlu0 %2243, %v2154
      %v2245 = vpop.permute.xlu0 %2244
      %2248 = vset.pattern.permute.xlu0 0
      %2249 = vperm.xlu0 %2248, %v2155
      %v2250 = vpop.permute.xlu0 %2249
      %2253 = vset.pattern.permute.xlu0 0
      %2254 = vperm.xlu0 %2253, %v2156
      %v2255 = vpop.permute.xlu0 %2254
      %2258 = vset.pattern.permute.xlu0 0
      %2259 = vperm.xlu0 %2258, %v2157
      %v2260 = vpop.permute.xlu0 %2259
      %2263 = vset.pattern.permute.xlu0 0
      %2264 = vperm.xlu0 %2263, %v2158
      %v2265 = vpop.permute.xlu0 %2264
      %2268 = vset.pattern.permute.xlu0 0
      %2269 = vperm.xlu0 %2268, %v2159
      %v2270 = vpop.permute.xlu0 %2269
      %2273 = vset.pattern.permute.xlu0 0
      %2274 = vperm.xlu0 %2273, %v2160
      %v2275 = vpop.permute.xlu0 %2274
      %2278 = vset.pattern.permute.xlu0 0
      %2279 = vperm.xlu0 %2278, %v2161
      %v2280 = vpop.permute.xlu0 %2279
      %2283 = vset.pattern.permute.xlu0 0
      %2284 = vperm.xlu0 %2283, %v2162
      %v2285 = vpop.permute.xlu0 %2284
      %2288 = vset.pattern.permute.xlu0 0
      %2289 = vperm.xlu0 %2288, %v2163
      %v2290 = vpop.permute.xlu0 %2289
      %2293 = vset.pattern.permute.xlu0 0
      %2294 = vperm.xlu0 %2293, %v2164
      %v2295 = vpop.permute.xlu0 %2294
      %2298 = vset.pattern.permute.xlu0 0
      %2299 = vperm.xlu0 %2298, %v2165
      %v2300 = vpop.permute.xlu0 %2299
      %2303 = vset.pattern.permute.xlu0 0
      %2304 = vperm.xlu0 %2303, %v2166
      %v2305 = vpop.permute.xlu0 %2304
      %2308 = vset.pattern.permute.xlu0 0
      %2309 = vperm.xlu0 %2308, %v2167
      %v2310 = vpop.permute.xlu0 %2309
      %2313 = vset.pattern.permute.xlu0 0
      %2314 = vperm.xlu0 %2313, %v2168
      %v2315 = vpop.permute.xlu0 %2314
      %2318 = vset.pattern.permute.xlu0 0
      %2319 = vperm.xlu0 %2318, %v2169
      %v2320 = vpop.permute.xlu0 %2319
      %2323 = vset.pattern.permute.xlu0 0
      %2324 = vperm.xlu0 %2323, %v2170
      %v2325 = vpop.permute.xlu0 %2324
      %2328 = vset.pattern.permute.xlu0 0
      %2329 = vperm.xlu0 %2328, %v2171
      %v2330 = vpop.permute.xlu0 %2329
      %2333 = vset.pattern.permute.xlu0 0
      %2334 = vperm.xlu0 %2333, %v2172
      %v2335 = vpop.permute.xlu0 %2334
      %2338 = vset.pattern.permute.xlu0 0
      %2339 = vperm.xlu0 %2338, %v2173
      %v2340 = vpop.permute.xlu0 %2339
      %2343 = vset.pattern.permute.xlu0 0
      %2344 = vperm.xlu0 %2343, %v2174
      %v2345 = vpop.permute.xlu0 %2344
      %2348 = vset.pattern.permute.xlu0 0
      %2349 = vperm.xlu0 %2348, %v2175
      %v2350 = vpop.permute.xlu0 %2349
      %2353 = vset.pattern.permute.xlu0 0
      %2354 = vperm.xlu0 %2353, %v2176
      %v2355 = vpop.permute.xlu0 %2354
      %v2357 = vmul.f32 %v1999, %v2180
      %v2358 = vmul.f32 %v2002, %v2185
      %v2359 = vmul.f32 %v2007, %v2190
      %v2360 = vmul.f32 %v2010, %v2195
      %v2361 = vmul.f32 %v2015, %v2200
      %v2362 = vmul.f32 %v2018, %v2205
      %v2363 = vmul.f32 %v2023, %v2210
      %v2364 = vmul.f32 %v2026, %v2215
      %v2365 = vmul.f32 %v2031, %v2220
      %v2366 = vmul.f32 %v2034, %v2225
      %v2367 = vmul.f32 %v2039, %v2230
      %v2368 = vmul.f32 %v2042, %v2235
      %v2369 = vmul.f32 %v2047, %v2240
      %v2370 = vmul.f32 %v2050, %v2245
      %v2371 = vmul.f32 %v2055, %v2250
      %v2372 = vmul.f32 %v2058, %v2255
      %v2373 = vmul.f32 %v2063, %v2260
      %v2374 = vmul.f32 %v2066, %v2265
      %v2375 = vmul.f32 %v2071, %v2270
      %v2376 = vmul.f32 %v2074, %v2275
      %v2377 = vmul.f32 %v2079, %v2280
      %v2378 = vmul.f32 %v2082, %v2285
      %v2379 = vmul.f32 %v2087, %v2290
      %v2380 = vmul.f32 %v2090, %v2295
      %v2381 = vmul.f32 %v2095, %v2300
      %v2382 = vmul.f32 %v2098, %v2305
      %v2383 = vmul.f32 %v2103, %v2310
      %v2384 = vmul.f32 %v2106, %v2315
      %v2385 = vmul.f32 %v2111, %v2320
      %v2386 = vmul.f32 %v2114, %v2325
      %v2387 = vmul.f32 %v2119, %v2330
      %v2388 = vmul.f32 %v2122, %v2335
      %v2389 = vmul.f32 %v2127, %v2340
      %v2390 = vmul.f32 %v2130, %v2345
      %v2391 = vmul.f32 %v2135, %v2350
      %v2392 = vmul.f32 %v2138, %v2355
      %2393 = vst.msk [vmem:[#allocation2] sm:$0xff] %vm1309, %v2357
      %2394 = vst.msk [vmem:[#allocation2 + $0x8] sm:$0xff] %vm1309, %v2358
      %2395 = vst.msk [vmem:[#allocation2 + $0x10] sm:$0xff] %vm1309, %v2359
      %2396 = vst.msk [vmem:[#allocation2 + $0x18] sm:$0xff] %vm1309, %v2360
      %2397 = vst.msk [vmem:[#allocation2 + $0x20] sm:$0xff] %vm1309, %v2361
      %2398 = vst.msk [vmem:[#allocation2 + $0x28] sm:$0xff] %vm1309, %v2362
      %2399 = vst.msk [vmem:[#allocation2 + $0x30] sm:$0xff] %vm1309, %v2363
      %2400 = vst.msk [vmem:[#allocation2 + $0x38] sm:$0xff] %vm1309, %v2364
      %2401 = vst.msk [vmem:[#allocation2 + $0x40] sm:$0xff] %vm1309, %v2365
      %2402 = vst.msk [vmem:[#allocation2 + $0x48] sm:$0xff] %vm1309, %v2366
      %2403 = vst.msk [vmem:[#allocation2 + $0x50] sm:$0xff] %vm1309, %v2367
      %2404 = vst.msk [vmem:[#allocation2 + $0x58] sm:$0xff] %vm1309, %v2368
      %2405 = vst.msk [vmem:[#allocation2 + $0x60] sm:$0xff] %vm1309, %v2369
      %2406 = vst.msk [vmem:[#allocation2 + $0x68] sm:$0xff] %vm1309, %v2370
      %2407 = vst.msk [vmem:[#allocation2 + $0x70] sm:$0xff] %vm1309, %v2371
      %2408 = vst.msk [vmem:[#allocation2 + $0x78] sm:$0xff] %vm1309, %v2372
      %2409 = vst.msk [vmem:[#allocation2 + $0x80] sm:$0xff] %vm1309, %v2373
      %2410 = vst.msk [vmem:[#allocation2 + $0x88] sm:$0xff] %vm1309, %v2374
      %2411 = vst.msk [vmem:[#allocation2 + $0x90] sm:$0xff] %vm1309, %v2375
      %2412 = vst.msk [vmem:[#allocation2 + $0x98] sm:$0xff] %vm1309, %v2376
      %2413 = vst.msk [vmem:[#allocation2 + $0xa0] sm:$0xff] %vm1309, %v2377
      %2414 = vst.msk [vmem:[#allocation2 + $0xa8] sm:$0xff] %vm1309, %v2378
      %2415 = vst.msk [vmem:[#allocation2 + $0xb0] sm:$0xff] %vm1309, %v2379
      %2416 = vst.msk [vmem:[#allocation2 + $0xb8] sm:$0xff] %vm1309, %v2380
      %2417 = vst.msk [vmem:[#allocation2 + $0xc0] sm:$0xff] %vm1309, %v2381
      %2418 = vst.msk [vmem:[#allocation2 + $0xc8] sm:$0xff] %vm1309, %v2382
      %2419 = vst.msk [vmem:[#allocation2 + $0xd0] sm:$0xff] %vm1309, %v2383
      %2420 = vst.msk [vmem:[#allocation2 + $0xd8] sm:$0xff] %vm1309, %v2384
      %2421 = vst.msk [vmem:[#allocation2 + $0xe0] sm:$0xff] %vm1309, %v2385
      %2422 = vst.msk [vmem:[#allocation2 + $0xe8] sm:$0xff] %vm1309, %v2386
      %2423 = vst.msk [vmem:[#allocation2 + $0xf0] sm:$0xff] %vm1309, %v2387
      %2424 = vst.msk [vmem:[#allocation2 + $0xf8] sm:$0xff] %vm1309, %v2388
      %2425 = vst.msk [vmem:[#allocation2 + $0x100] sm:$0xff] %vm1309, %v2389
      %2426 = vst.msk [vmem:[#allocation2 + $0x108] sm:$0xff] %vm1309, %v2390
      %2427 = vst.msk [vmem:[#allocation2 + $0x110] sm:$0xff] %vm1309, %v2391
      %2428 = vst.msk [vmem:[#allocation2 + $0x118] sm:$0xff] %vm1309, %v2392
      %v2429 = vld [vmem:[#allocation2] sm:$0xff]
      %v2430 = vld [vmem:[#allocation2 + $0x8] sm:$0xff]
      %v2431 = vld [vmem:[#allocation2 + $0x18] sm:$0xff]
      %v2432 = vld [vmem:[#allocation2 + $0x20] sm:$0xff]
      %v2433 = vld [vmem:[#allocation2 + $0x30] sm:$0xff]
      %v2434 = vld [vmem:[#allocation2 + $0x38] sm:$0xff]
      %v2435 = vld [vmem:[#allocation2 + $0x48] sm:$0xff]
      %v2436 = vld [vmem:[#allocation2 + $0x50] sm:$0xff]
      %v2437 = vld [vmem:[#allocation2 + $0x60] sm:$0xff]
      %v2438 = vld [vmem:[#allocation2 + $0x68] sm:$0xff]
      %v2439 = vld [vmem:[#allocation2 + $0x78] sm:$0xff]
      %v2440 = vld [vmem:[#allocation2 + $0x80] sm:$0xff]
      %v2441 = vld [vmem:[#allocation2 + $0x90] sm:$0xff]
      %v2442 = vld [vmem:[#allocation2 + $0x98] sm:$0xff]
      %v2443 = vld [vmem:[#allocation2 + $0xa8] sm:$0xff]
      %v2444 = vld [vmem:[#allocation2 + $0xb0] sm:$0xff]
      %v2445 = vld [vmem:[#allocation2 + $0xc0] sm:$0xff]
      %v2446 = vld [vmem:[#allocation2 + $0xc8] sm:$0xff]
      %v2447 = vld [vmem:[#allocation2 + $0xd8] sm:$0xff]
      %v2448 = vld [vmem:[#allocation2 + $0xe0] sm:$0xff]
      %v2449 = vld [vmem:[#allocation2 + $0xf0] sm:$0xff]
      %v2450 = vld [vmem:[#allocation2 + $0xf8] sm:$0xff]
      %v2451 = vld [vmem:[#allocation2 + $0x108] sm:$0xff]
      %v2452 = vld [vmem:[#allocation2 + $0x110] sm:$0xff]
      %v2453 = vld [vmem:[#allocation2 + $0x1] sm:$0xff]
      %v2454 = vld [vmem:[#allocation2 + $0x9] sm:$0xff]
      %v2455 = vld [vmem:[#allocation2 + $0x19] sm:$0xff]
      %v2456 = vld [vmem:[#allocation2 + $0x21] sm:$0xff]
      %v2457 = vld [vmem:[#allocation2 + $0x31] sm:$0xff]
      %v2458 = vld [vmem:[#allocation2 + $0x39] sm:$0xff]
      %v2459 = vld [vmem:[#allocation2 + $0x49] sm:$0xff]
      %v2460 = vld [vmem:[#allocation2 + $0x51] sm:$0xff]
      %v2461 = vld [vmem:[#allocation2 + $0x61] sm:$0xff]
      %v2462 = vld [vmem:[#allocation2 + $0x69] sm:$0xff]
      %v2463 = vld [vmem:[#allocation2 + $0x79] sm:$0xff]
      %v2464 = vld [vmem:[#allocation2 + $0x81] sm:$0xff]
      %v2465 = vld [vmem:[#allocation2 + $0x91] sm:$0xff]
      %v2466 = vld [vmem:[#allocation2 + $0x99] sm:$0xff]
      %v2467 = vld [vmem:[#allocation2 + $0xa9] sm:$0xff]
      %v2468 = vld [vmem:[#allocation2 + $0xb1] sm:$0xff]
      %v2469 = vld [vmem:[#allocation2 + $0xc1] sm:$0xff]
      %v2470 = vld [vmem:[#allocation2 + $0xc9] sm:$0xff]
      %v2471 = vld [vmem:[#allocation2 + $0xd9] sm:$0xff]
      %v2472 = vld [vmem:[#allocation2 + $0xe1] sm:$0xff]
      %v2473 = vld [vmem:[#allocation2 + $0xf1] sm:$0xff]
      %v2474 = vld [vmem:[#allocation2 + $0xf9] sm:$0xff]
      %v2475 = vld [vmem:[#allocation2 + $0x109] sm:$0xff]
      %v2476 = vld [vmem:[#allocation2 + $0x111] sm:$0xff]
      %v2477 = vld [vmem:[#allocation2 + $0x2] sm:$0xff]
      %v2478 = vld [vmem:[#allocation2 + $0xa] sm:$0xff]
      %v2479 = vld [vmem:[#allocation2 + $0x1a] sm:$0xff]
      %v2480 = vld [vmem:[#allocation2 + $0x22] sm:$0xff]
      %v2481 = vld [vmem:[#allocation2 + $0x32] sm:$0xff]
      %v2482 = vld [vmem:[#allocation2 + $0x3a] sm:$0xff]
      %v2483 = vld [vmem:[#allocation2 + $0x4a] sm:$0xff]
      %v2484 = vld [vmem:[#allocation2 + $0x52] sm:$0xff]
      %v2485 = vld [vmem:[#allocation2 + $0x62] sm:$0xff]
      %v2486 = vld [vmem:[#allocation2 + $0x6a] sm:$0xff]
      %v2487 = vld [vmem:[#allocation2 + $0x7a] sm:$0xff]
      %v2488 = vld [vmem:[#allocation2 + $0x82] sm:$0xff]
      %v2489 = vld [vmem:[#allocation2 + $0x92] sm:$0xff]
      %v2490 = vld [vmem:[#allocation2 + $0x9a] sm:$0xff]
      %v2491 = vld [vmem:[#allocation2 + $0xaa] sm:$0xff]
      %v2492 = vld [vmem:[#allocation2 + $0xb2] sm:$0xff]
      %v2493 = vld [vmem:[#allocation2 + $0xc2] sm:$0xff]
      %v2494 = vld [vmem:[#allocation2 + $0xca] sm:$0xff]
      %v2495 = vld [vmem:[#allocation2 + $0xda] sm:$0xff]
      %v2496 = vld [vmem:[#allocation2 + $0xe2] sm:$0xff]
      %v2497 = vld [vmem:[#allocation2 + $0xf2] sm:$0xff]
      %v2498 = vld [vmem:[#allocation2 + $0xfa] sm:$0xff]
      %v2499 = vld [vmem:[#allocation2 + $0x10a] sm:$0xff]
      %v2500 = vld [vmem:[#allocation2 + $0x112] sm:$0xff]
      %2521 = vrot.lane.b32.xlu0 %v2453, 32
      %v2522 = vpop.permute.xlu0 %2521
      %2523 = vrot.lane.b32.xlu0 %v2454, 32
      %v2524 = vpop.permute.xlu0 %2523
      %2525 = vrot.lane.b32.xlu0 %v2455, 32
      %v2526 = vpop.permute.xlu0 %2525
      %2527 = vrot.lane.b32.xlu0 %v2456, 32
      %v2528 = vpop.permute.xlu0 %2527
      %2529 = vrot.lane.b32.xlu0 %v2457, 32
      %v2530 = vpop.permute.xlu0 %2529
      %2531 = vrot.lane.b32.xlu0 %v2458, 32
      %v2532 = vpop.permute.xlu0 %2531
      %2533 = vrot.lane.b32.xlu0 %v2459, 32
      %v2534 = vpop.permute.xlu0 %2533
      %2535 = vrot.lane.b32.xlu0 %v2460, 32
      %v2536 = vpop.permute.xlu0 %2535
      %2537 = vrot.lane.b32.xlu0 %v2461, 32
      %v2538 = vpop.permute.xlu0 %2537
      %2539 = vrot.lane.b32.xlu0 %v2462, 32
      %v2540 = vpop.permute.xlu0 %2539
      %2541 = vrot.lane.b32.xlu0 %v2463, 32
      %v2542 = vpop.permute.xlu0 %2541
      %2543 = vrot.lane.b32.xlu0 %v2464, 32
      %v2544 = vpop.permute.xlu0 %2543
      %2545 = vrot.lane.b32.xlu0 %v2465, 32
      %v2546 = vpop.permute.xlu0 %2545
      %2547 = vrot.lane.b32.xlu0 %v2466, 32
      %v2548 = vpop.permute.xlu0 %2547
      %2549 = vrot.lane.b32.xlu0 %v2467, 32
      %v2550 = vpop.permute.xlu0 %2549
      %2551 = vrot.lane.b32.xlu0 %v2468, 32
      %v2552 = vpop.permute.xlu0 %2551
      %2553 = vrot.lane.b32.xlu0 %v2469, 32
      %v2554 = vpop.permute.xlu0 %2553
      %2555 = vrot.lane.b32.xlu0 %v2470, 32
      %v2556 = vpop.permute.xlu0 %2555
      %2557 = vrot.lane.b32.xlu0 %v2471, 32
      %v2558 = vpop.permute.xlu0 %2557
      %2559 = vrot.lane.b32.xlu0 %v2472, 32
      %v2560 = vpop.permute.xlu0 %2559
      %2601 = vrot.lane.b32.xlu0 %v2477, 64
      %v2602 = vpop.permute.xlu0 %2601
      %2603 = vrot.lane.b32.xlu0 %v2478, 64
      %v2604 = vpop.permute.xlu0 %2603
      %2605 = vrot.lane.b32.xlu0 %v2479, 64
      %v2606 = vpop.permute.xlu0 %2605
      %2607 = vrot.lane.b32.xlu0 %v2480, 64
      %v2608 = vpop.permute.xlu0 %2607
      %2609 = vrot.lane.b32.xlu0 %v2481, 64
      %v2610 = vpop.permute.xlu0 %2609
      %2611 = vrot.lane.b32.xlu0 %v2482, 64
      %v2612 = vpop.permute.xlu0 %2611
      %2613 = vrot.lane.b32.xlu0 %v2483, 64
      %v2614 = vpop.permute.xlu0 %2613
      %2615 = vrot.lane.b32.xlu0 %v2484, 64
      %v2616 = vpop.permute.xlu0 %2615
      %2617 = vrot.lane.b32.xlu0 %v2485, 64
      %v2618 = vpop.permute.xlu0 %2617
      %2619 = vrot.lane.b32.xlu0 %v2486, 64
      %v2620 = vpop.permute.xlu0 %2619
      %2621 = vrot.lane.b32.xlu0 %v2487, 64
      %v2622 = vpop.permute.xlu0 %2621
      %2623 = vrot.lane.b32.xlu0 %v2488, 64
      %v2624 = vpop.permute.xlu0 %2623
      %2625 = vrot.lane.b32.xlu0 %v2489, 64
      %v2626 = vpop.permute.xlu0 %2625
      %2627 = vrot.lane.b32.xlu0 %v2490, 64
      %v2628 = vpop.permute.xlu0 %2627
      %2629 = vrot.lane.b32.xlu0 %v2491, 64
      %v2630 = vpop.permute.xlu0 %2629
      %2631 = vrot.lane.b32.xlu0 %v2492, 64
      %v2632 = vpop.permute.xlu0 %2631
      %2633 = vrot.lane.b32.xlu0 %v2493, 64
      %v2634 = vpop.permute.xlu0 %2633
      %2635 = vrot.lane.b32.xlu0 %v2494, 64
      %v2636 = vpop.permute.xlu0 %2635
      %2637 = vrot.lane.b32.xlu0 %v2495, 64
      %v2638 = vpop.permute.xlu0 %2637
      %2639 = vrot.lane.b32.xlu0 %v2496, 64
      %v2640 = vpop.permute.xlu0 %2639
      %2681 = vrot.lane.b32.xlu0 %v2431, 96
      %v2682 = vpop.permute.xlu0 %2681
      %2683 = vrot.lane.b32.xlu0 %v2432, 96
      %v2684 = vpop.permute.xlu0 %2683
      %2685 = vrot.lane.b32.xlu0 %v2433, 96
      %v2686 = vpop.permute.xlu0 %2685
      %2687 = vrot.lane.b32.xlu0 %v2434, 96
      %v2688 = vpop.permute.xlu0 %2687
      %2689 = vrot.lane.b32.xlu0 %v2435, 96
      %v2690 = vpop.permute.xlu0 %2689
      %2691 = vrot.lane.b32.xlu0 %v2436, 96
      %v2692 = vpop.permute.xlu0 %2691
      %2693 = vrot.lane.b32.xlu0 %v2437, 96
      %v2694 = vpop.permute.xlu0 %2693
      %2695 = vrot.lane.b32.xlu0 %v2438, 96
      %v2696 = vpop.permute.xlu0 %2695
      %2697 = vrot.lane.b32.xlu0 %v2439, 96
      %v2698 = vpop.permute.xlu0 %2697
      %2699 = vrot.lane.b32.xlu0 %v2440, 96
      %v2700 = vpop.permute.xlu0 %2699
      %2701 = vrot.lane.b32.xlu0 %v2441, 96
      %v2702 = vpop.permute.xlu0 %2701
      %2703 = vrot.lane.b32.xlu0 %v2442, 96
      %v2704 = vpop.permute.xlu0 %2703
      %2705 = vrot.lane.b32.xlu0 %v2443, 96
      %v2706 = vpop.permute.xlu0 %2705
      %2707 = vrot.lane.b32.xlu0 %v2444, 96
      %v2708 = vpop.permute.xlu0 %2707
      %2709 = vrot.lane.b32.xlu0 %v2445, 96
      %v2710 = vpop.permute.xlu0 %2709
      %2711 = vrot.lane.b32.xlu0 %v2446, 96
      %v2712 = vpop.permute.xlu0 %2711
      %2713 = vrot.lane.b32.xlu0 %v2447, 96
      %v2714 = vpop.permute.xlu0 %2713
      %2715 = vrot.lane.b32.xlu0 %v2448, 96
      %v2716 = vpop.permute.xlu0 %2715
      %2717 = vrot.lane.b32.xlu0 %v2449, 96
      %v2718 = vpop.permute.xlu0 %2717
      %2719 = vrot.lane.b32.xlu0 %v2450, 96
      %v2720 = vpop.permute.xlu0 %2719
      %2743 = vrot.lane.b32.xlu0 %v2479, 32
      %v2744 = vpop.permute.xlu0 %2743
      %2745 = vrot.lane.b32.xlu0 %v2480, 32
      %v2746 = vpop.permute.xlu0 %2745
      %2747 = vrot.lane.b32.xlu0 %v2481, 32
      %v2748 = vpop.permute.xlu0 %2747
      %2749 = vrot.lane.b32.xlu0 %v2482, 32
      %v2750 = vpop.permute.xlu0 %2749
      %2751 = vrot.lane.b32.xlu0 %v2483, 32
      %v2752 = vpop.permute.xlu0 %2751
      %2753 = vrot.lane.b32.xlu0 %v2484, 32
      %v2754 = vpop.permute.xlu0 %2753
      %2755 = vrot.lane.b32.xlu0 %v2485, 32
      %v2756 = vpop.permute.xlu0 %2755
      %2757 = vrot.lane.b32.xlu0 %v2486, 32
      %v2758 = vpop.permute.xlu0 %2757
      %2759 = vrot.lane.b32.xlu0 %v2487, 32
      %v2760 = vpop.permute.xlu0 %2759
      %2761 = vrot.lane.b32.xlu0 %v2488, 32
      %v2762 = vpop.permute.xlu0 %2761
      %2763 = vrot.lane.b32.xlu0 %v2489, 32
      %v2764 = vpop.permute.xlu0 %2763
      %2765 = vrot.lane.b32.xlu0 %v2490, 32
      %v2766 = vpop.permute.xlu0 %2765
      %2767 = vrot.lane.b32.xlu0 %v2491, 32
      %v2768 = vpop.permute.xlu0 %2767
      %2769 = vrot.lane.b32.xlu0 %v2492, 32
      %v2770 = vpop.permute.xlu0 %2769
      %2771 = vrot.lane.b32.xlu0 %v2493, 32
      %v2772 = vpop.permute.xlu0 %2771
      %2773 = vrot.lane.b32.xlu0 %v2494, 32
      %v2774 = vpop.permute.xlu0 %2773
      %2775 = vrot.lane.b32.xlu0 %v2495, 32
      %v2776 = vpop.permute.xlu0 %2775
      %2777 = vrot.lane.b32.xlu0 %v2496, 32
      %v2778 = vpop.permute.xlu0 %2777
      %2779 = vrot.lane.b32.xlu0 %v2497, 32
      %v2780 = vpop.permute.xlu0 %2779
      %2781 = vrot.lane.b32.xlu0 %v2498, 32
      %v2782 = vpop.permute.xlu0 %2781
      %2805 = vrot.lane.b32.xlu0 %v2433, 64
      %v2806 = vpop.permute.xlu0 %2805
      %2807 = vrot.lane.b32.xlu0 %v2434, 64
      %v2808 = vpop.permute.xlu0 %2807
      %2809 = vrot.lane.b32.xlu0 %v2435, 64
      %v2810 = vpop.permute.xlu0 %2809
      %2811 = vrot.lane.b32.xlu0 %v2436, 64
      %v2812 = vpop.permute.xlu0 %2811
      %2813 = vrot.lane.b32.xlu0 %v2437, 64
      %v2814 = vpop.permute.xlu0 %2813
      %2815 = vrot.lane.b32.xlu0 %v2438, 64
      %v2816 = vpop.permute.xlu0 %2815
      %2817 = vrot.lane.b32.xlu0 %v2439, 64
      %v2818 = vpop.permute.xlu0 %2817
      %2819 = vrot.lane.b32.xlu0 %v2440, 64
      %v2820 = vpop.permute.xlu0 %2819
      %2821 = vrot.lane.b32.xlu0 %v2441, 64
      %v2822 = vpop.permute.xlu0 %2821
      %2823 = vrot.lane.b32.xlu0 %v2442, 64
      %v2824 = vpop.permute.xlu0 %2823
      %2825 = vrot.lane.b32.xlu0 %v2443, 64
      %v2826 = vpop.permute.xlu0 %2825
      %2827 = vrot.lane.b32.xlu0 %v2444, 64
      %v2828 = vpop.permute.xlu0 %2827
      %2829 = vrot.lane.b32.xlu0 %v2445, 64
      %v2830 = vpop.permute.xlu0 %2829
      %2831 = vrot.lane.b32.xlu0 %v2446, 64
      %v2832 = vpop.permute.xlu0 %2831
      %2833 = vrot.lane.b32.xlu0 %v2447, 64
      %v2834 = vpop.permute.xlu0 %2833
      %2835 = vrot.lane.b32.xlu0 %v2448, 64
      %v2836 = vpop.permute.xlu0 %2835
      %2837 = vrot.lane.b32.xlu0 %v2449, 64
      %v2838 = vpop.permute.xlu0 %2837
      %2839 = vrot.lane.b32.xlu0 %v2450, 64
      %v2840 = vpop.permute.xlu0 %2839
      %2841 = vrot.lane.b32.xlu0 %v2451, 64
      %v2842 = vpop.permute.xlu0 %2841
      %2843 = vrot.lane.b32.xlu0 %v2452, 64
      %v2844 = vpop.permute.xlu0 %2843
      %2869 = vrot.lane.b32.xlu0 %v2457, 96
      %v2870 = vpop.permute.xlu0 %2869
      %2871 = vrot.lane.b32.xlu0 %v2458, 96
      %v2872 = vpop.permute.xlu0 %2871
      %2873 = vrot.lane.b32.xlu0 %v2459, 96
      %v2874 = vpop.permute.xlu0 %2873
      %2875 = vrot.lane.b32.xlu0 %v2460, 96
      %v2876 = vpop.permute.xlu0 %2875
      %2877 = vrot.lane.b32.xlu0 %v2461, 96
      %v2878 = vpop.permute.xlu0 %2877
      %2879 = vrot.lane.b32.xlu0 %v2462, 96
      %v2880 = vpop.permute.xlu0 %2879
      %2881 = vrot.lane.b32.xlu0 %v2463, 96
      %v2882 = vpop.permute.xlu0 %2881
      %2883 = vrot.lane.b32.xlu0 %v2464, 96
      %v2884 = vpop.permute.xlu0 %2883
      %2885 = vrot.lane.b32.xlu0 %v2465, 96
      %v2886 = vpop.permute.xlu0 %2885
      %2887 = vrot.lane.b32.xlu0 %v2466, 96
      %v2888 = vpop.permute.xlu0 %2887
      %2889 = vrot.lane.b32.xlu0 %v2467, 96
      %v2890 = vpop.permute.xlu0 %2889
      %2891 = vrot.lane.b32.xlu0 %v2468, 96
      %v2892 = vpop.permute.xlu0 %2891
      %2893 = vrot.lane.b32.xlu0 %v2469, 96
      %v2894 = vpop.permute.xlu0 %2893
      %2895 = vrot.lane.b32.xlu0 %v2470, 96
      %v2896 = vpop.permute.xlu0 %2895
      %2897 = vrot.lane.b32.xlu0 %v2471, 96
      %v2898 = vpop.permute.xlu0 %2897
      %2899 = vrot.lane.b32.xlu0 %v2472, 96
      %v2900 = vpop.permute.xlu0 %2899
      %2901 = vrot.lane.b32.xlu0 %v2473, 96
      %v2902 = vpop.permute.xlu0 %2901
      %2903 = vrot.lane.b32.xlu0 %v2474, 96
      %v2904 = vpop.permute.xlu0 %2903
      %2905 = vrot.lane.b32.xlu0 %v2475, 96
      %v2906 = vpop.permute.xlu0 %2905
      %2907 = vrot.lane.b32.xlu0 %v2476, 96
      %v2908 = vpop.permute.xlu0 %2907
      %v2929 = vsel %vm1309, %v2429, %v2522
      %v2930 = vsel %vm1309, %v2430, %v2524
      %v2931 = vsel %vm1309, %v2431, %v2526
      %v2932 = vsel %vm1309, %v2432, %v2528
      %v2933 = vsel %vm1309, %v2433, %v2530
      %v2934 = vsel %vm1309, %v2434, %v2532
      %v2935 = vsel %vm1309, %v2435, %v2534
      %v2936 = vsel %vm1309, %v2436, %v2536
      %v2937 = vsel %vm1309, %v2437, %v2538
      %v2938 = vsel %vm1309, %v2438, %v2540
      %v2939 = vsel %vm1309, %v2439, %v2542
      %v2940 = vsel %vm1309, %v2440, %v2544
      %v2941 = vsel %vm1309, %v2441, %v2546
      %v2942 = vsel %vm1309, %v2442, %v2548
      %v2943 = vsel %vm1309, %v2443, %v2550
      %v2944 = vsel %vm1309, %v2444, %v2552
      %v2945 = vsel %vm1309, %v2445, %v2554
      %v2946 = vsel %vm1309, %v2446, %v2556
      %v2947 = vsel %vm1309, %v2447, %v2558
      %v2948 = vsel %vm1309, %v2448, %v2560
      %v2949 = vsel %vm1346, %v2929, %v2602
      %v2950 = vsel %vm1346, %v2930, %v2604
      %v2951 = vsel %vm1346, %v2931, %v2606
      %v2952 = vsel %vm1346, %v2932, %v2608
      %v2953 = vsel %vm1346, %v2933, %v2610
      %v2954 = vsel %vm1346, %v2934, %v2612
      %v2955 = vsel %vm1346, %v2935, %v2614
      %v2956 = vsel %vm1346, %v2936, %v2616
      %v2957 = vsel %vm1346, %v2937, %v2618
      %v2958 = vsel %vm1346, %v2938, %v2620
      %v2959 = vsel %vm1346, %v2939, %v2622
      %v2960 = vsel %vm1346, %v2940, %v2624
      %v2961 = vsel %vm1346, %v2941, %v2626
      %v2962 = vsel %vm1346, %v2942, %v2628
      %v2963 = vsel %vm1346, %v2943, %v2630
      %v2964 = vsel %vm1346, %v2944, %v2632
      %v2965 = vsel %vm1346, %v2945, %v2634
      %v2966 = vsel %vm1346, %v2946, %v2636
      %v2967 = vsel %vm1346, %v2947, %v2638
      %v2968 = vsel %vm1346, %v2948, %v2640
      %v2969 = vsel %vm1383, %v2949, %v2682
      %v2970 = vsel %vm1383, %v2950, %v2684
      %v2971 = vsel %vm1383, %v2951, %v2686
      %v2972 = vsel %vm1383, %v2952, %v2688
      %v2973 = vsel %vm1383, %v2953, %v2690
      %v2974 = vsel %vm1383, %v2954, %v2692
      %v2975 = vsel %vm1383, %v2955, %v2694
      %v2976 = vsel %vm1383, %v2956, %v2696
      %v2977 = vsel %vm1383, %v2957, %v2698
      %v2978 = vsel %vm1383, %v2958, %v2700
      %v2979 = vsel %vm1383, %v2959, %v2702
      %v2980 = vsel %vm1383, %v2960, %v2704
      %v2981 = vsel %vm1383, %v2961, %v2706
      %v2982 = vsel %vm1383, %v2962, %v2708
      %v2983 = vsel %vm1383, %v2963, %v2710
      %v2984 = vsel %vm1383, %v2964, %v2712
      %v2985 = vsel %vm1383, %v2965, %v2714
      %v2986 = vsel %vm1383, %v2966, %v2716
      %v2987 = vsel %vm1383, %v2967, %v2718
      %v2988 = vsel %vm1383, %v2968, %v2720
      %v2989 = vsel %vm1309, %v2455, %v2744
      %v2990 = vsel %vm1309, %v2456, %v2746
      %v2991 = vsel %vm1309, %v2457, %v2748
      %v2992 = vsel %vm1309, %v2458, %v2750
      %v2993 = vsel %vm1309, %v2459, %v2752
      %v2994 = vsel %vm1309, %v2460, %v2754
      %v2995 = vsel %vm1309, %v2461, %v2756
      %v2996 = vsel %vm1309, %v2462, %v2758
      %v2997 = vsel %vm1309, %v2463, %v2760
      %v2998 = vsel %vm1309, %v2464, %v2762
      %v2999 = vsel %vm1309, %v2465, %v2764
      %v3000 = vsel %vm1309, %v2466, %v2766
      %v3001 = vsel %vm1309, %v2467, %v2768
      %v3002 = vsel %vm1309, %v2468, %v2770
      %v3003 = vsel %vm1309, %v2469, %v2772
      %v3004 = vsel %vm1309, %v2470, %v2774
      %v3005 = vsel %vm1309, %v2471, %v2776
      %v3006 = vsel %vm1309, %v2472, %v2778
      %v3007 = vsel %vm1309, %v2473, %v2780
      %v3008 = vsel %vm1309, %v2474, %v2782
      %v3009 = vsel %vm1346, %v2989, %v2806
      %v3010 = vsel %vm1346, %v2990, %v2808
      %v3011 = vsel %vm1346, %v2991, %v2810
      %v3012 = vsel %vm1346, %v2992, %v2812
      %v3013 = vsel %vm1346, %v2993, %v2814
      %v3014 = vsel %vm1346, %v2994, %v2816
      %v3015 = vsel %vm1346, %v2995, %v2818
      %v3016 = vsel %vm1346, %v2996, %v2820
      %v3017 = vsel %vm1346, %v2997, %v2822
      %v3018 = vsel %vm1346, %v2998, %v2824
      %v3019 = vsel %vm1346, %v2999, %v2826
      %v3020 = vsel %vm1346, %v3000, %v2828
      %v3021 = vsel %vm1346, %v3001, %v2830
      %v3022 = vsel %vm1346, %v3002, %v2832
      %v3023 = vsel %vm1346, %v3003, %v2834
      %v3024 = vsel %vm1346, %v3004, %v2836
      %v3025 = vsel %vm1346, %v3005, %v2838
      %v3026 = vsel %vm1346, %v3006, %v2840
      %v3027 = vsel %vm1346, %v3007, %v2842
      %v3028 = vsel %vm1346, %v3008, %v2844
      %v3029 = vsel %vm1383, %v3009, %v2870
      %v3030 = vsel %vm1383, %v3010, %v2872
      %v3031 = vsel %vm1383, %v3011, %v2874
      %v3032 = vsel %vm1383, %v3012, %v2876
      %v3033 = vsel %vm1383, %v3013, %v2878
      %v3034 = vsel %vm1383, %v3014, %v2880
      %v3035 = vsel %vm1383, %v3015, %v2882
      %v3036 = vsel %vm1383, %v3016, %v2884
      %v3037 = vsel %vm1383, %v3017, %v2886
      %v3038 = vsel %vm1383, %v3018, %v2888
      %v3039 = vsel %vm1383, %v3019, %v2890
      %v3040 = vsel %vm1383, %v3020, %v2892
      %v3041 = vsel %vm1383, %v3021, %v2894
      %v3042 = vsel %vm1383, %v3022, %v2896
      %v3043 = vsel %vm1383, %v3023, %v2898
      %v3044 = vsel %vm1383, %v3024, %v2900
      %v3045 = vsel %vm1383, %v3025, %v2902
      %v3046 = vsel %vm1383, %v3026, %v2904
      %v3047 = vsel %vm1383, %v3027, %v2906
      %v3048 = vsel %vm1383, %v3028, %v2908
      %v3049 = vpack.c.bf16 %v2970, %v2969
      %v3050 = vpack.c.bf16 %v3030, %v3029
      %v3051 = vpack.c.bf16 %v2482, %v2481
      %v3052 = vpack.c.bf16 %v2972, %v2971
      %v3053 = vpack.c.bf16 %v3032, %v3031
      %v3054 = vpack.c.bf16 %v2484, %v2483
      %v3055 = vpack.c.bf16 %v2974, %v2973
      %v3056 = vpack.c.bf16 %v3034, %v3033
      %v3057 = vpack.c.bf16 %v2486, %v2485
      %v3058 = vpack.c.bf16 %v2976, %v2975
      %v3059 = vpack.c.bf16 %v3036, %v3035
      %v3060 = vpack.c.bf16 %v2488, %v2487
      %v3061 = vpack.c.bf16 %v2978, %v2977
      %v3062 = vpack.c.bf16 %v3038, %v3037
      %v3063 = vpack.c.bf16 %v2490, %v2489
      %v3064 = vpack.c.bf16 %v2980, %v2979
      %v3065 = vpack.c.bf16 %v3040, %v3039
      %v3066 = vpack.c.bf16 %v2492, %v2491
      %v3067 = vpack.c.bf16 %v2982, %v2981
      %v3068 = vpack.c.bf16 %v3042, %v3041
      %v3069 = vpack.c.bf16 %v2494, %v2493
      %v3070 = vpack.c.bf16 %v2984, %v2983
      %v3071 = vpack.c.bf16 %v3044, %v3043
      %v3072 = vpack.c.bf16 %v2496, %v2495
      %v3073 = vpack.c.bf16 %v2986, %v2985
      %v3074 = vpack.c.bf16 %v3046, %v3045
      %v3075 = vpack.c.bf16 %v2498, %v2497
      %v3076 = vpack.c.bf16 %v2988, %v2987
      %v3077 = vpack.c.bf16 %v3048, %v3047
      %v3078 = vpack.c.bf16 %v2500, %v2499
      %v3079 = vld [vmem:[%s3] sm:$0xf]
      %v3080 = vld [vmem:[%s3 + $0x4] sm:$0xf]
      %v3081 = vld [vmem:[%s3 + $0x8] sm:$0xf]
      %v3082 = vld [vmem:[%s3 + $0xc] sm:$0xf]
      %v3083 = vld [vmem:[%s3 + $0x10] sm:$0xf]
      %v3084 = vld [vmem:[%s3 + $0x14] sm:$0xf]
      %v3085 = vld [vmem:[%s3 + $0x18] sm:$0xf]
      %v3086 = vld [vmem:[%s3 + $0x1c] sm:$0xf]
      %v3087 = vld [vmem:[%s3 + $0x20] sm:$0xf]
      %v3088 = vld [vmem:[%s3 + $0x24] sm:$0xf]
      %v3089 = vld [vmem:[%s3 + $0x28] sm:$0xf]
      %v3090 = vld [vmem:[%s3 + $0x2c] sm:$0xf]
      %v3091 = vld [vmem:[%s3 + $0x30] sm:$0xf]
      %v3092 = vld [vmem:[%s3 + $0x34] sm:$0xf]
      %v3093 = vld [vmem:[%s3 + $0x38] sm:$0xf]
      %v3094 = vld [vmem:[%s3 + $0x3c] sm:$0xf]
      %v3095 = vld [vmem:[%s3 + $0x40] sm:$0xf]
      %v3096 = vld [vmem:[%s3 + $0x44] sm:$0xf]
      %v3097 = vld [vmem:[%s3 + $0x48] sm:$0xf]
      %v3098 = vld [vmem:[%s3 + $0x4c] sm:$0xf]
      %v3099 = vld [vmem:[%s3 + $0x50] sm:$0xf]
      %v3100 = vld [vmem:[%s3 + $0x54] sm:$0xf]
      %v3101 = vld [vmem:[%s3 + $0x58] sm:$0xf]
      %v3102 = vld [vmem:[%s3 + $0x5c] sm:$0xf]
      %v3103 = vld [vmem:[%s3 + $0x60] sm:$0xf]
      %v3104 = vld [vmem:[%s3 + $0x64] sm:$0xf]
      %v3105 = vld [vmem:[%s3 + $0x68] sm:$0xf]
      %v3106 = vld [vmem:[%s3 + $0x6c] sm:$0xf]
      %v3107 = vld [vmem:[%s3 + $0x70] sm:$0xf]
      %v3108 = vld [vmem:[%s3 + $0x74] sm:$0xf]
      %v3109 = vld [vmem:[%s3 + $0x78] sm:$0xf]
      %v3110 = vld [vmem:[%s3 + $0x7c] sm:$0xf]
      %v3111 = vld [vmem:[%s3 + $0x80] sm:$0xf]
      %v3112 = vld [vmem:[%s3 + $0x84] sm:$0xf]
      %v3113 = vld [vmem:[%s3 + $0x88] sm:$0xf]
      %v3114 = vld [vmem:[%s3 + $0x8c] sm:$0xf]
      %v3115 = vld [vmem:[%s4] sm:$0x1]
      %v3117 = vlaneseq
      %v3118 = vshrl.u32 %v3117, 7
      %v3119 = vsub.s32 0, %v3118
      %v3120 = vrot.slane %v3115, %v3119
      %v3158 = vunpack.c.l.b16 %v3079
      %v3159 = vunpack.c.l.b16 %v3080
      %v3160 = vunpack.c.l.b16 %v3081
      %v3161 = vunpack.c.l.b16 %v3082
      %v3162 = vunpack.c.l.b16 %v3083
      %v3163 = vunpack.c.l.b16 %v3084
      %v3164 = vunpack.c.l.b16 %v3085
      %v3165 = vunpack.c.l.b16 %v3086
      %v3166 = vunpack.c.l.b16 %v3087
      %v3167 = vunpack.c.l.b16 %v3088
      %v3168 = vunpack.c.l.b16 %v3089
      %v3169 = vunpack.c.l.b16 %v3090
      %v3170 = vunpack.c.l.b16 %v3091
      %v3171 = vunpack.c.l.b16 %v3092
      %v3172 = vunpack.c.l.b16 %v3093
      %v3173 = vunpack.c.l.b16 %v3094
      %v3174 = vunpack.c.l.b16 %v3095
      %v3175 = vunpack.c.l.b16 %v3096
      %v3176 = vunpack.c.l.b16 %v3097
      %v3177 = vunpack.c.l.b16 %v3098
      %v3178 = vunpack.c.l.b16 %v3099
      %v3179 = vunpack.c.l.b16 %v3100
      %v3180 = vunpack.c.l.b16 %v3101
      %v3181 = vunpack.c.l.b16 %v3102
      %v3182 = vunpack.c.l.b16 %v3103
      %v3183 = vunpack.c.l.b16 %v3104
      %v3184 = vunpack.c.l.b16 %v3105
      %v3185 = vunpack.c.l.b16 %v3106
      %v3186 = vunpack.c.l.b16 %v3107
      %v3187 = vunpack.c.l.b16 %v3108
      %v3188 = vunpack.c.l.b16 %v3109
      %v3189 = vunpack.c.l.b16 %v3110
      %v3190 = vunpack.c.l.b16 %v3111
      %v3191 = vunpack.c.l.b16 %v3112
      %v3192 = vunpack.c.l.b16 %v3113
      %v3193 = vunpack.c.l.b16 %v3114
      %v3194 = vpack.c.b16 %v3159, %v3158
      %v3195 = vpack.c.b16 %v3161, %v3160
      %v3196 = vpack.c.b16 %v3163, %v3162
      %v3197 = vpack.c.b16 %v3165, %v3164
      %v3198 = vpack.c.b16 %v3167, %v3166
      %v3199 = vpack.c.b16 %v3169, %v3168
      %v3200 = vpack.c.b16 %v3171, %v3170
      %v3201 = vpack.c.b16 %v3173, %v3172
      %v3202 = vpack.c.b16 %v3175, %v3174
      %v3203 = vpack.c.b16 %v3177, %v3176
      %v3204 = vpack.c.b16 %v3179, %v3178
      %v3205 = vpack.c.b16 %v3181, %v3180
      %v3206 = vpack.c.b16 %v3183, %v3182
      %v3207 = vpack.c.b16 %v3185, %v3184
      %v3208 = vpack.c.b16 %v3187, %v3186
      %v3209 = vpack.c.b16 %v3189, %v3188
      %v3210 = vpack.c.b16 %v3191, %v3190
      %v3211 = vpack.c.b16 %v3193, %v3192
      %v3231 = vsel %vm1309, %v3051, 0
      %v3234 = vsel %vm1309, %v3054, 0
      %v3237 = vsel %vm1309, %v3057, 0
      %v3240 = vsel %vm1309, %v3060, 0
      %v3243 = vsel %vm1309, %v3063, 0
      %v3246 = vsel %vm1309, %v3066, 0
      %v3249 = vsel %vm1309, %v3069, 0
      %v3252 = vsel %vm1309, %v3072, 0
      %v3255 = vsel %vm1309, %v3075, 0
      %v3258 = vsel %vm1309, %v3078, 0
      %3260 = vmatprep.subr.bf16.mxu0 0
      %3261 = vmatpush1.bf16.msra.mxu0 %v3194
      %3262 = vmatprep.subr.bf16.mxu0 0
      %3263 = vmatpush1.bf16.msra.mxu0 %v3195
      %3264 = vmatprep.subr.bf16.mxu0 0
      %3265 = vmatpush1.bf16.msra.mxu0 %v3196
      %3266 = vmatprep.subr.bf16.mxu0 0
      %3267 = vmatpush1.bf16.msra.mxu0 %v3197
      %3268 = vmatprep.subr.bf16.mxu0 0
      %3269 = vmatpush1.bf16.msra.mxu0 %v3198
      %3270 = vmatprep.subr.bf16.mxu0 0
      %3271 = vmatpush1.bf16.msra.mxu0 %v3199
      %3272 = vmatprep.subr.bf16.mxu0 0
      %3273 = vmatpush1.bf16.msra.mxu0 %v3200
      %3274 = vmatprep.subr.bf16.mxu0 0
      %3275 = vmatpush1.bf16.msra.mxu0 %v3201
      %3276 = vmatprep.subr.bf16.mxu0 0
      %3277 = vmatpush1.bf16.msra.mxu0 %v3202
      %3278 = vmatprep.subr.bf16.mxu0 0
      %3279 = vmatpush1.bf16.msra.mxu0 %v3203
      %3280 = vmatprep.subr.bf16.mxu0 0
      %3281 = vmatpush1.bf16.msra.mxu0 %v3204
      %3282 = vmatprep.subr.bf16.mxu0 0
      %3283 = vmatpush1.bf16.msra.mxu0 %v3205
      %3284 = vmatprep.subr.bf16.mxu0 0
      %3285 = vmatpush1.bf16.msra.mxu0 %v3206
      %3286 = vmatprep.subr.bf16.mxu0 0
      %3287 = vmatpush1.bf16.msra.mxu0 %v3207
      %3288 = vmatprep.subr.bf16.mxu0 0
      %3289 = vmatpush1.bf16.msra.mxu0 %v3208
      %3290 = vmatprep.subr.bf16.mxu0 0
      %3291 = vmatpush1.bf16.msra.mxu0 %v3209
      %3292 = vmatprep.mubr.bf16.mxu0 %v3050
      %3293 = vmatmul.mubr.bf16.gmra.mrb[0].mxu0 %v3049
      %v3294 = vpop.f32.mrb[0].mxu0
      %v3295 = vadd.f32 %v3120, %v3294
      %v3296 = vpop.f32.mrb[0].mxu0
      %v3297 = vpop.f32.mrb[0].mxu0
      %v3298 = vadd.f32 %v3120, %v3297
      %v3299 = vpop.f32.mrb[0].mxu0
      %3300 = vmatprep.mubr.bf16.mxu0 %v3053
      %3301 = vmatmul.mubr.bf16.gmra.mrb[0].mxu0 %v3052
      %v3302 = vpop.f32.mrb[0].mxu0
      %v3303 = vadd.f32 %v3120, %v3302
      %v3304 = vpop.f32.mrb[0].mxu0
      %v3305 = vpop.f32.mrb[0].mxu0
      %v3306 = vadd.f32 %v3120, %v3305
      %v3307 = vpop.f32.mrb[0].mxu0
      %3308 = vmatprep.mubr.bf16.mxu0 %v3056
      %3309 = vmatmul.mubr.bf16.gmra.mrb[0].mxu0 %v3055
      %v3310 = vpop.f32.mrb[0].mxu0
      %v3311 = vadd.f32 %v3120, %v3310
      %v3312 = vpop.f32.mrb[0].mxu0
      %v3313 = vpop.f32.mrb[0].mxu0
      %v3314 = vadd.f32 %v3120, %v3313
      %v3315 = vpop.f32.mrb[0].mxu0
      %3316 = vmatprep.mubr.bf16.mxu0 %v3059
      %3317 = vmatmul.mubr.bf16.gmra.mrb[0].mxu0 %v3058
      %v3318 = vpop.f32.mrb[0].mxu0
      %v3319 = vadd.f32 %v3120, %v3318
      %v3320 = vpop.f32.mrb[0].mxu0
      %v3321 = vpop.f32.mrb[0].mxu0
      %v3322 = vadd.f32 %v3120, %v3321
      %v3323 = vpop.f32.mrb[0].mxu0
      %3324 = vmatprep.mubr.bf16.mxu0 %v3062
      %3325 = vmatmul.mubr.bf16.gmra.mrb[0].mxu0 %v3061
      %v3326 = vpop.f32.mrb[0].mxu0
      %v3327 = vadd.f32 %v3120, %v3326
      %v3328 = vpop.f32.mrb[0].mxu0
      %v3329 = vpop.f32.mrb[0].mxu0
      %v3330 = vadd.f32 %v3120, %v3329
      %v3331 = vpop.f32.mrb[0].mxu0
      %3332 = vmatprep.mubr.bf16.mxu0 %v3065
      %3333 = vmatmul.mubr.bf16.gmra.mrb[0].mxu0 %v3064
      %v3334 = vpop.f32.mrb[0].mxu0
      %v3335 = vadd.f32 %v3120, %v3334
      %v3336 = vpop.f32.mrb[0].mxu0
      %v3337 = vpop.f32.mrb[0].mxu0
      %v3338 = vadd.f32 %v3120, %v3337
      %v3339 = vpop.f32.mrb[0].mxu0
      %3340 = vmatprep.mubr.bf16.mxu0 %v3068
      %3341 = vmatmul.mubr.bf16.gmra.mrb[0].mxu0 %v3067
      %v3342 = vpop.f32.mrb[0].mxu0
      %v3343 = vadd.f32 %v3120, %v3342
      %v3344 = vpop.f32.mrb[0].mxu0
      %v3345 = vpop.f32.mrb[0].mxu0
      %v3346 = vadd.f32 %v3120, %v3345
      %v3347 = vpop.f32.mrb[0].mxu0
      %3348 = vmatprep.mubr.bf16.mxu0 %v3071
      %3349 = vmatmul.mubr.bf16.gmra.mrb[0].mxu0 %v3070
      %v3350 = vpop.f32.mrb[0].mxu0
      %v3351 = vadd.f32 %v3120, %v3350
      %v3352 = vpop.f32.mrb[0].mxu0
      %v3353 = vpop.f32.mrb[0].mxu0
      %v3354 = vadd.f32 %v3120, %v3353
      %v3355 = vpop.f32.mrb[0].mxu0
      %3356 = vmatprep.mubr.bf16.mxu0 %v3074
      %3357 = vmatmul.mubr.bf16.gmra.mrb[0].mxu0 %v3073
      %v3358 = vpop.f32.mrb[0].mxu0
      %v3359 = vadd.f32 %v3120, %v3358
      %v3360 = vpop.f32.mrb[0].mxu0
      %v3361 = vpop.f32.mrb[0].mxu0
      %v3362 = vadd.f32 %v3120, %v3361
      %v3363 = vpop.f32.mrb[0].mxu0
      %3364 = vmatprep.mubr.bf16.mxu0 %v3077
      %3365 = vmatmul.mubr.bf16.gmra.mrb[0].mxu0 %v3076
      %v3366 = vpop.f32.mrb[0].mxu0
      %v3367 = vadd.f32 %v3120, %v3366
      %v3368 = vpop.f32.mrb[0].mxu0
      %v3369 = vpop.f32.mrb[0].mxu0
      %v3370 = vadd.f32 %v3120, %v3369
      %v3371 = vpop.f32.mrb[0].mxu0
      %3372 = vdwg.mxu0
      %3373 = vmatprep.subr.bf16.mxu0 0
      %3374 = vmatpush1.bf16.msra.mxu0 %v3210
      %3375 = vmatprep.subr.bf16.mxu0 0
      %3376 = vmatpush1.bf16.msra.mxu0 %v3211
      %3377 = vmatprep.subr.bf16.mxu0 0
      %3378 = vmatpush1.bf16.msra.mxu0 0
      %3379 = vmatprep.subr.bf16.mxu0 0
      %3380 = vmatpush1.bf16.msra.mxu0 0
      %3381 = vmatprep.subr.bf16.mxu0 0
      %3382 = vmatpush1.bf16.msra.mxu0 0
      %3383 = vmatprep.subr.bf16.mxu0 0
      %3384 = vmatpush1.bf16.msra.mxu0 0
      %3385 = vmatprep.subr.bf16.mxu0 0
      %3386 = vmatpush1.bf16.msra.mxu0 0
      %3387 = vmatprep.subr.bf16.mxu0 0
      %3388 = vmatpush1.bf16.msra.mxu0 0
      %3389 = vmatprep.subr.bf16.mxu0 0
      %3390 = vmatpush1.bf16.msra.mxu0 0
      %3391 = vmatprep.subr.bf16.mxu0 0
      %3392 = vmatpush1.bf16.msra.mxu0 0
      %3393 = vmatprep.subr.bf16.mxu0 0
      %3394 = vmatpush1.bf16.msra.mxu0 0
      %3395 = vmatprep.subr.bf16.mxu0 0
      %3396 = vmatpush1.bf16.msra.mxu0 0
      %3397 = vmatprep.subr.bf16.mxu0 0
      %3398 = vmatpush1.bf16.msra.mxu0 0
      %3399 = vmatprep.subr.bf16.mxu0 0
      %3400 = vmatpush1.bf16.msra.mxu0 0
      %3401 = vmatprep.subr.bf16.mxu0 0
      %3402 = vmatpush1.bf16.msra.mxu0 0
      %3403 = vmatprep.subr.bf16.mxu0 0
      %3404 = vmatpush1.bf16.msra.mxu0 0
      %3405 = vmatprep.mubr.bf16.mxu0 0
      %3406 = vmatmul.mubr.bf16.gmra.mrb[0].mxu0 %v3231
      %v3407 = vpop.f32.mrb[0].mxu0
      %v3408 = vadd.f32 %v3295, %v3407
      %v3409 = vpop.f32.mrb[0].mxu0
      %v3410 = vpop.f32.mrb[0].mxu0
      %v3411 = vadd.f32 %v3298, %v3410
      %v3412 = vpop.f32.mrb[0].mxu0
      %3413 = vmatprep.mubr.bf16.mxu0 0
      %3414 = vmatmul.mubr.bf16.gmra.mrb[0].mxu0 %v3234
      %v3415 = vpop.f32.mrb[0].mxu0
      %v3416 = vadd.f32 %v3303, %v3415
      %v3417 = vpop.f32.mrb[0].mxu0
      %v3418 = vpop.f32.mrb[0].mxu0
      %v3419 = vadd.f32 %v3306, %v3418
      %v3420 = vpop.f32.mrb[0].mxu0
      %3421 = vmatprep.mubr.bf16.mxu0 0
      %3422 = vmatmul.mubr.bf16.gmra.mrb[0].mxu0 %v3237
      %v3423 = vpop.f32.mrb[0].mxu0
      %v3424 = vadd.f32 %v3311, %v3423
      %v3425 = vpop.f32.mrb[0].mxu0
      %v3426 = vpop.f32.mrb[0].mxu0
      %v3427 = vadd.f32 %v3314, %v3426
      %v3428 = vpop.f32.mrb[0].mxu0
      %3429 = vmatprep.mubr.bf16.mxu0 0
      %3430 = vmatmul.mubr.bf16.gmra.mrb[0].mxu0 %v3240
      %v3431 = vpop.f32.mrb[0].mxu0
      %v3432 = vadd.f32 %v3319, %v3431
      %v3433 = vpop.f32.mrb[0].mxu0
      %v3434 = vpop.f32.mrb[0].mxu0
      %v3435 = vadd.f32 %v3322, %v3434
      %v3436 = vpop.f32.mrb[0].mxu0
      %3437 = vmatprep.mubr.bf16.mxu0 0
      %3438 = vmatmul.mubr.bf16.gmra.mrb[0].mxu0 %v3243
      %v3439 = vpop.f32.mrb[0].mxu0
      %v3440 = vadd.f32 %v3327, %v3439
      %v3441 = vpop.f32.mrb[0].mxu0
      %v3442 = vpop.f32.mrb[0].mxu0
      %v3443 = vadd.f32 %v3330, %v3442
      %v3444 = vpop.f32.mrb[0].mxu0
      %3445 = vmatprep.mubr.bf16.mxu0 0
      %3446 = vmatmul.mubr.bf16.gmra.mrb[0].mxu0 %v3246
      %v3447 = vpop.f32.mrb[0].mxu0
      %v3448 = vadd.f32 %v3335, %v3447
      %v3449 = vpop.f32.mrb[0].mxu0
      %v3450 = vpop.f32.mrb[0].mxu0
      %v3451 = vadd.f32 %v3338, %v3450
      %v3452 = vpop.f32.mrb[0].mxu0
      %3453 = vmatprep.mubr.bf16.mxu0 0
      %3454 = vmatmul.mubr.bf16.gmra.mrb[0].mxu0 %v3249
      %v3455 = vpop.f32.mrb[0].mxu0
      %v3456 = vadd.f32 %v3343, %v3455
      %v3457 = vpop.f32.mrb[0].mxu0
      %v3458 = vpop.f32.mrb[0].mxu0
      %v3459 = vadd.f32 %v3346, %v3458
      %v3460 = vpop.f32.mrb[0].mxu0
      %3461 = vmatprep.mubr.bf16.mxu0 0
      %3462 = vmatmul.mubr.bf16.gmra.mrb[0].mxu0 %v3252
      %v3463 = vpop.f32.mrb[0].mxu0
      %v3464 = vadd.f32 %v3351, %v3463
      %v3465 = vpop.f32.mrb[0].mxu0
      %v3466 = vpop.f32.mrb[0].mxu0
      %v3467 = vadd.f32 %v3354, %v3466
      %v3468 = vpop.f32.mrb[0].mxu0
      %3469 = vmatprep.mubr.bf16.mxu0 0
      %3470 = vmatmul.mubr.bf16.gmra.mrb[0].mxu0 %v3255
      %v3471 = vpop.f32.mrb[0].mxu0
      %v3472 = vadd.f32 %v3359, %v3471
      %v3473 = vpop.f32.mrb[0].mxu0
      %v3474 = vpop.f32.mrb[0].mxu0
      %v3475 = vadd.f32 %v3362, %v3474
      %v3476 = vpop.f32.mrb[0].mxu0
      %3477 = vmatprep.mubr.bf16.mxu0 0
      %3478 = vmatmul.mubr.bf16.gmra.mrb[0].mxu0 %v3258
      %v3479 = vpop.f32.mrb[0].mxu0
      %v3480 = vadd.f32 %v3367, %v3479
      %v3481 = vpop.f32.mrb[0].mxu0
      %v3482 = vpop.f32.mrb[0].mxu0
      %v3483 = vadd.f32 %v3370, %v3482
      %v3484 = vpop.f32.mrb[0].mxu0
      %3485 = vdwg.mxu0
      %v3486 = vld [vmem:[%s8] sm:$0xff]
      %v3487 = vld [vmem:[%s8 + $0x8] sm:$0xff]
      %v3488 = vld [vmem:[%s8 + $0x10] sm:$0xff]
      %v3489 = vld [vmem:[%s8 + $0x18] sm:$0xff]
      %v3490 = vld [vmem:[%s8 + $0x20] sm:$0xff]
      %v3491 = vld [vmem:[%s8 + $0x28] sm:$0xff]
      %v3492 = vld [vmem:[%s8 + $0x30] sm:$0xff]
      %v3493 = vld [vmem:[%s8 + $0x38] sm:$0xff]
      %v3494 = vld [vmem:[%s8 + $0x40] sm:$0xff]
      %v3495 = vld [vmem:[%s8 + $0x48] sm:$0xff]
      %v3496 = vld [vmem:[%s8 + $0x50] sm:$0xff]
      %v3497 = vld [vmem:[%s8 + $0x58] sm:$0xff]
      %v3498 = vld [vmem:[%s8 + $0x60] sm:$0xff]
      %v3499 = vld [vmem:[%s8 + $0x68] sm:$0xff]
      %v3500 = vld [vmem:[%s8 + $0x70] sm:$0xff]
      %v3501 = vld [vmem:[%s8 + $0x78] sm:$0xff]
      %v3502 = vld [vmem:[%s8 + $0x80] sm:$0xff]
      %v3503 = vld [vmem:[%s8 + $0x88] sm:$0xff]
      %v3504 = vld [vmem:[%s8 + $0x90] sm:$0xff]
      %v3505 = vld [vmem:[%s8 + $0x98] sm:$0xff]
      %3507 = vset.pattern.permute.xlu0 0
      %3508 = vperm.xlu0 %3507, %v3486
      %v3509 = vpop.permute.xlu0 %3508
      %3512 = vset.pattern.permute.xlu0 0
      %3513 = vperm.xlu0 %3512, %v3487
      %v3514 = vpop.permute.xlu0 %3513
      %3517 = vset.pattern.permute.xlu0 0
      %3518 = vperm.xlu0 %3517, %v3488
      %v3519 = vpop.permute.xlu0 %3518
      %3522 = vset.pattern.permute.xlu0 0
      %3523 = vperm.xlu0 %3522, %v3489
      %v3524 = vpop.permute.xlu0 %3523
      %3527 = vset.pattern.permute.xlu0 0
      %3528 = vperm.xlu0 %3527, %v3490
      %v3529 = vpop.permute.xlu0 %3528
      %3532 = vset.pattern.permute.xlu0 0
      %3533 = vperm.xlu0 %3532, %v3491
      %v3534 = vpop.permute.xlu0 %3533
      %3537 = vset.pattern.permute.xlu0 0
      %3538 = vperm.xlu0 %3537, %v3492
      %v3539 = vpop.permute.xlu0 %3538
      %3542 = vset.pattern.permute.xlu0 0
      %3543 = vperm.xlu0 %3542, %v3493
      %v3544 = vpop.permute.xlu0 %3543
      %3547 = vset.pattern.permute.xlu0 0
      %3548 = vperm.xlu0 %3547, %v3494
      %v3549 = vpop.permute.xlu0 %3548
      %3552 = vset.pattern.permute.xlu0 0
      %3553 = vperm.xlu0 %3552, %v3495
      %v3554 = vpop.permute.xlu0 %3553
      %3557 = vset.pattern.permute.xlu0 0
      %3558 = vperm.xlu0 %3557, %v3496
      %v3559 = vpop.permute.xlu0 %3558
      %3562 = vset.pattern.permute.xlu0 0
      %3563 = vperm.xlu0 %3562, %v3497
      %v3564 = vpop.permute.xlu0 %3563
      %3567 = vset.pattern.permute.xlu0 0
      %3568 = vperm.xlu0 %3567, %v3498
      %v3569 = vpop.permute.xlu0 %3568
      %3572 = vset.pattern.permute.xlu0 0
      %3573 = vperm.xlu0 %3572, %v3499
      %v3574 = vpop.permute.xlu0 %3573
      %3577 = vset.pattern.permute.xlu0 0
      %3578 = vperm.xlu0 %3577, %v3500
      %v3579 = vpop.permute.xlu0 %3578
      %3582 = vset.pattern.permute.xlu0 0
      %3583 = vperm.xlu0 %3582, %v3501
      %v3584 = vpop.permute.xlu0 %3583
      %3587 = vset.pattern.permute.xlu0 0
      %3588 = vperm.xlu0 %3587, %v3502
      %v3589 = vpop.permute.xlu0 %3588
      %3592 = vset.pattern.permute.xlu0 0
      %3593 = vperm.xlu0 %3592, %v3503
      %v3594 = vpop.permute.xlu0 %3593
      %3597 = vset.pattern.permute.xlu0 0
      %3598 = vperm.xlu0 %3597, %v3504
      %v3599 = vpop.permute.xlu0 %3598
      %3602 = vset.pattern.permute.xlu0 0
      %3603 = vperm.xlu0 %3602, %v3505
      %v3604 = vpop.permute.xlu0 %3603
      %v3606 = vmul.f32 %v3408, %v3509
      %v3607 = vmul.f32 %v3411, %v3514
      %v3608 = vmul.f32 %v3416, %v3519
      %v3609 = vmul.f32 %v3419, %v3524
      %v3610 = vmul.f32 %v3424, %v3529
      %v3611 = vmul.f32 %v3427, %v3534
      %v3612 = vmul.f32 %v3432, %v3539
      %v3613 = vmul.f32 %v3435, %v3544
      %v3614 = vmul.f32 %v3440, %v3549
      %v3615 = vmul.f32 %v3443, %v3554
      %v3616 = vmul.f32 %v3448, %v3559
      %v3617 = vmul.f32 %v3451, %v3564
      %v3618 = vmul.f32 %v3456, %v3569
      %v3619 = vmul.f32 %v3459, %v3574
      %v3620 = vmul.f32 %v3464, %v3579
      %v3621 = vmul.f32 %v3467, %v3584
      %v3622 = vmul.f32 %v3472, %v3589
      %v3623 = vmul.f32 %v3475, %v3594
      %v3624 = vmul.f32 %v3480, %v3599
      %v3625 = vmul.f32 %v3483, %v3604
      %3626 = vst.msk [vmem:[#allocation3] sm:$0xff] %vm1309, %v3606
      %3627 = vst.msk [vmem:[#allocation3 + $0x8] sm:$0xff] %vm1309, %v3607
      %3628 = vst.msk [vmem:[#allocation3 + $0x10] sm:$0xff] %vm1309, %v3608
      %3629 = vst.msk [vmem:[#allocation3 + $0x18] sm:$0xff] %vm1309, %v3609
      %3630 = vst.msk [vmem:[#allocation3 + $0x20] sm:$0xff] %vm1309, %v3610
      %3631 = vst.msk [vmem:[#allocation3 + $0x28] sm:$0xff] %vm1309, %v3611
      %3632 = vst.msk [vmem:[#allocation3 + $0x30] sm:$0xff] %vm1309, %v3612
      %3633 = vst.msk [vmem:[#allocation3 + $0x38] sm:$0xff] %vm1309, %v3613
      %3634 = vst.msk [vmem:[#allocation3 + $0x40] sm:$0xff] %vm1309, %v3614
      %3635 = vst.msk [vmem:[#allocation3 + $0x48] sm:$0xff] %vm1309, %v3615
      %3636 = vst.msk [vmem:[#allocation3 + $0x50] sm:$0xff] %vm1309, %v3616
      %3637 = vst.msk [vmem:[#allocation3 + $0x58] sm:$0xff] %vm1309, %v3617
      %3638 = vst.msk [vmem:[#allocation3 + $0x60] sm:$0xff] %vm1309, %v3618
      %3639 = vst.msk [vmem:[#allocation3 + $0x68] sm:$0xff] %vm1309, %v3619
      %3640 = vst.msk [vmem:[#allocation3 + $0x70] sm:$0xff] %vm1309, %v3620
      %3641 = vst.msk [vmem:[#allocation3 + $0x78] sm:$0xff] %vm1309, %v3621
      %3642 = vst.msk [vmem:[#allocation3 + $0x80] sm:$0xff] %vm1309, %v3622
      %3643 = vst.msk [vmem:[#allocation3 + $0x88] sm:$0xff] %vm1309, %v3623
      %3644 = vst.msk [vmem:[#allocation3 + $0x90] sm:$0xff] %vm1309, %v3624
      %3645 = vst.msk [vmem:[#allocation3 + $0x98] sm:$0xff] %vm1309, %v3625
      %v3646 = vld [vmem:[#allocation3] sm:$0xff]
      %v3647 = vld [vmem:[#allocation3 + $0x10] sm:$0xff]
      %v3648 = vld [vmem:[#allocation3 + $0x20] sm:$0xff]
      %v3649 = vld [vmem:[#allocation3 + $0x30] sm:$0xff]
      %v3650 = vld [vmem:[#allocation3 + $0x40] sm:$0xff]
      %v3651 = vld [vmem:[#allocation3 + $0x50] sm:$0xff]
      %v3652 = vld [vmem:[#allocation3 + $0x60] sm:$0xff]
      %v3653 = vld [vmem:[#allocation3 + $0x70] sm:$0xff]
      %v3654 = vld [vmem:[#allocation3 + $0x80] sm:$0xff]
      %v3655 = vld [vmem:[#allocation3 + $0x90] sm:$0xff]
      %v3656 = vld [vmem:[#allocation3 + $0x1] sm:$0xff]
      %v3657 = vld [vmem:[#allocation3 + $0x11] sm:$0xff]
      %v3658 = vld [vmem:[#allocation3 + $0x21] sm:$0xff]
      %v3659 = vld [vmem:[#allocation3 + $0x31] sm:$0xff]
      %v3660 = vld [vmem:[#allocation3 + $0x41] sm:$0xff]
      %v3661 = vld [vmem:[#allocation3 + $0x51] sm:$0xff]
      %v3662 = vld [vmem:[#allocation3 + $0x61] sm:$0xff]
      %v3663 = vld [vmem:[#allocation3 + $0x71] sm:$0xff]
      %v3664 = vld [vmem:[#allocation3 + $0x81] sm:$0xff]
      %v3665 = vld [vmem:[#allocation3 + $0x91] sm:$0xff]
      %v3666 = vld [vmem:[#allocation3 + $0x2] sm:$0xff]
      %v3667 = vld [vmem:[#allocation3 + $0x12] sm:$0xff]
      %v3668 = vld [vmem:[#allocation3 + $0x22] sm:$0xff]
      %v3669 = vld [vmem:[#allocation3 + $0x32] sm:$0xff]
      %v3670 = vld [vmem:[#allocation3 + $0x42] sm:$0xff]
      %v3671 = vld [vmem:[#allocation3 + $0x52] sm:$0xff]
      %v3672 = vld [vmem:[#allocation3 + $0x62] sm:$0xff]
      %v3673 = vld [vmem:[#allocation3 + $0x72] sm:$0xff]
      %v3674 = vld [vmem:[#allocation3 + $0x82] sm:$0xff]
      %v3675 = vld [vmem:[#allocation3 + $0x92] sm:$0xff]
      %3684 = vrot.lane.b32.xlu0 %v3656, 32
      %v3685 = vpop.permute.xlu0 %3684
      %3686 = vrot.lane.b32.xlu0 %v3657, 32
      %v3687 = vpop.permute.xlu0 %3686
      %3688 = vrot.lane.b32.xlu0 %v3658, 32
      %v3689 = vpop.permute.xlu0 %3688
      %3690 = vrot.lane.b32.xlu0 %v3659, 32
      %v3691 = vpop.permute.xlu0 %3690
      %3692 = vrot.lane.b32.xlu0 %v3660, 32
      %v3693 = vpop.permute.xlu0 %3692
      %3694 = vrot.lane.b32.xlu0 %v3661, 32
      %v3695 = vpop.permute.xlu0 %3694
      %3696 = vrot.lane.b32.xlu0 %v3662, 32
      %v3697 = vpop.permute.xlu0 %3696
      %3698 = vrot.lane.b32.xlu0 %v3663, 32
      %v3699 = vpop.permute.xlu0 %3698
      %3716 = vrot.lane.b32.xlu0 %v3666, 64
      %v3717 = vpop.permute.xlu0 %3716
      %3718 = vrot.lane.b32.xlu0 %v3667, 64
      %v3719 = vpop.permute.xlu0 %3718
      %3720 = vrot.lane.b32.xlu0 %v3668, 64
      %v3721 = vpop.permute.xlu0 %3720
      %3722 = vrot.lane.b32.xlu0 %v3669, 64
      %v3723 = vpop.permute.xlu0 %3722
      %3724 = vrot.lane.b32.xlu0 %v3670, 64
      %v3725 = vpop.permute.xlu0 %3724
      %3726 = vrot.lane.b32.xlu0 %v3671, 64
      %v3727 = vpop.permute.xlu0 %3726
      %3728 = vrot.lane.b32.xlu0 %v3672, 64
      %v3729 = vpop.permute.xlu0 %3728
      %3730 = vrot.lane.b32.xlu0 %v3673, 64
      %v3731 = vpop.permute.xlu0 %3730
      %3748 = vrot.lane.b32.xlu0 %v3647, 96
      %v3749 = vpop.permute.xlu0 %3748
      %3750 = vrot.lane.b32.xlu0 %v3648, 96
      %v3751 = vpop.permute.xlu0 %3750
      %3752 = vrot.lane.b32.xlu0 %v3649, 96
      %v3753 = vpop.permute.xlu0 %3752
      %3754 = vrot.lane.b32.xlu0 %v3650, 96
      %v3755 = vpop.permute.xlu0 %3754
      %3756 = vrot.lane.b32.xlu0 %v3651, 96
      %v3757 = vpop.permute.xlu0 %3756
      %3758 = vrot.lane.b32.xlu0 %v3652, 96
      %v3759 = vpop.permute.xlu0 %3758
      %3760 = vrot.lane.b32.xlu0 %v3653, 96
      %v3761 = vpop.permute.xlu0 %3760
      %3762 = vrot.lane.b32.xlu0 %v3654, 96
      %v3763 = vpop.permute.xlu0 %3762
      %3773 = vrot.lane.b32.xlu0 %v3667, 32
      %v3774 = vpop.permute.xlu0 %3773
      %3775 = vrot.lane.b32.xlu0 %v3668, 32
      %v3776 = vpop.permute.xlu0 %3775
      %3777 = vrot.lane.b32.xlu0 %v3669, 32
      %v3778 = vpop.permute.xlu0 %3777
      %3779 = vrot.lane.b32.xlu0 %v3670, 32
      %v3780 = vpop.permute.xlu0 %3779
      %3781 = vrot.lane.b32.xlu0 %v3671, 32
      %v3782 = vpop.permute.xlu0 %3781
      %3783 = vrot.lane.b32.xlu0 %v3672, 32
      %v3784 = vpop.permute.xlu0 %3783
      %3785 = vrot.lane.b32.xlu0 %v3673, 32
      %v3786 = vpop.permute.xlu0 %3785
      %3787 = vrot.lane.b32.xlu0 %v3674, 32
      %v3788 = vpop.permute.xlu0 %3787
      %3798 = vrot.lane.b32.xlu0 %v3648, 64
      %v3799 = vpop.permute.xlu0 %3798
      %3800 = vrot.lane.b32.xlu0 %v3649, 64
      %v3801 = vpop.permute.xlu0 %3800
      %3802 = vrot.lane.b32.xlu0 %v3650, 64
      %v3803 = vpop.permute.xlu0 %3802
      %3804 = vrot.lane.b32.xlu0 %v3651, 64
      %v3805 = vpop.permute.xlu0 %3804
      %3806 = vrot.lane.b32.xlu0 %v3652, 64
      %v3807 = vpop.permute.xlu0 %3806
      %3808 = vrot.lane.b32.xlu0 %v3653, 64
      %v3809 = vpop.permute.xlu0 %3808
      %3810 = vrot.lane.b32.xlu0 %v3654, 64
      %v3811 = vpop.permute.xlu0 %3810
      %3812 = vrot.lane.b32.xlu0 %v3655, 64
      %v3813 = vpop.permute.xlu0 %3812
      %3824 = vrot.lane.b32.xlu0 %v3658, 96
      %v3825 = vpop.permute.xlu0 %3824
      %3826 = vrot.lane.b32.xlu0 %v3659, 96
      %v3827 = vpop.permute.xlu0 %3826
      %3828 = vrot.lane.b32.xlu0 %v3660, 96
      %v3829 = vpop.permute.xlu0 %3828
      %3830 = vrot.lane.b32.xlu0 %v3661, 96
      %v3831 = vpop.permute.xlu0 %3830
      %3832 = vrot.lane.b32.xlu0 %v3662, 96
      %v3833 = vpop.permute.xlu0 %3832
      %3834 = vrot.lane.b32.xlu0 %v3663, 96
      %v3835 = vpop.permute.xlu0 %3834
      %3836 = vrot.lane.b32.xlu0 %v3664, 96
      %v3837 = vpop.permute.xlu0 %3836
      %3838 = vrot.lane.b32.xlu0 %v3665, 96
      %v3839 = vpop.permute.xlu0 %3838
      %v3848 = vsel %vm1309, %v3646, %v3685
      %v3849 = vsel %vm1309, %v3647, %v3687
      %v3850 = vsel %vm1309, %v3648, %v3689
      %v3851 = vsel %vm1309, %v3649, %v3691
      %v3852 = vsel %vm1309, %v3650, %v3693
      %v3853 = vsel %vm1309, %v3651, %v3695
      %v3854 = vsel %vm1309, %v3652, %v3697
      %v3855 = vsel %vm1309, %v3653, %v3699
      %v3856 = vsel %vm1346, %v3848, %v3717
      %v3857 = vsel %vm1346, %v3849, %v3719
      %v3858 = vsel %vm1346, %v3850, %v3721
      %v3859 = vsel %vm1346, %v3851, %v3723
      %v3860 = vsel %vm1346, %v3852, %v3725
      %v3861 = vsel %vm1346, %v3853, %v3727
      %v3862 = vsel %vm1346, %v3854, %v3729
      %v3863 = vsel %vm1346, %v3855, %v3731
      %v3864 = vsel %vm1383, %v3856, %v3749
      %v3865 = vsel %vm1383, %v3857, %v3751
      %v3866 = vsel %vm1383, %v3858, %v3753
      %v3867 = vsel %vm1383, %v3859, %v3755
      %v3868 = vsel %vm1383, %v3860, %v3757
      %v3869 = vsel %vm1383, %v3861, %v3759
      %v3870 = vsel %vm1383, %v3862, %v3761
      %v3871 = vsel %vm1383, %v3863, %v3763
      %v3872 = vsel %vm1309, %v3657, %v3774
      %v3873 = vsel %vm1309, %v3658, %v3776
      %v3874 = vsel %vm1309, %v3659, %v3778
      %v3875 = vsel %vm1309, %v3660, %v3780
      %v3876 = vsel %vm1309, %v3661, %v3782
      %v3877 = vsel %vm1309, %v3662, %v3784
      %v3878 = vsel %vm1309, %v3663, %v3786
      %v3879 = vsel %vm1309, %v3664, %v3788
      %v3880 = vsel %vm1346, %v3872, %v3799
      %v3881 = vsel %vm1346, %v3873, %v3801
      %v3882 = vsel %vm1346, %v3874, %v3803
      %v3883 = vsel %vm1346, %v3875, %v3805
      %v3884 = vsel %vm1346, %v3876, %v3807
      %v3885 = vsel %vm1346, %v3877, %v3809
      %v3886 = vsel %vm1346, %v3878, %v3811
      %v3887 = vsel %vm1346, %v3879, %v3813
      %v3888 = vsel %vm1383, %v3880, %v3825
      %v3889 = vsel %vm1383, %v3881, %v3827
      %v3890 = vsel %vm1383, %v3882, %v3829
      %v3891 = vsel %vm1383, %v3883, %v3831
      %v3892 = vsel %vm1383, %v3884, %v3833
      %v3893 = vsel %vm1383, %v3885, %v3835
      %v3894 = vsel %vm1383, %v3886, %v3837
      %v3895 = vsel %vm1383, %v3887, %v3839
      %v3896 = vpack.c.bf16 %v3865, %v3864
      %v3897 = vpack.c.bf16 %v3889, %v3888
      %v3898 = vpack.c.bf16 %v3669, %v3668
      %v3899 = vpack.c.bf16 %v3867, %v3866
      %v3900 = vpack.c.bf16 %v3891, %v3890
      %v3901 = vpack.c.bf16 %v3671, %v3670
      %v3902 = vpack.c.bf16 %v3869, %v3868
      %v3903 = vpack.c.bf16 %v3893, %v3892
      %v3904 = vpack.c.bf16 %v3673, %v3672
      %v3905 = vpack.c.bf16 %v3871, %v3870
      %v3906 = vpack.c.bf16 %v3895, %v3894
      %v3907 = vpack.c.bf16 %v3675, %v3674
      %v3908 = vld [vmem:[%s5] sm:$0xf]
      %v3909 = vld [vmem:[%s5 + $0x4] sm:$0xf]
      %v3910 = vld [vmem:[%s5 + $0x8] sm:$0xf]
      %v3911 = vld [vmem:[%s5 + $0xc] sm:$0xf]
      %v3912 = vld [vmem:[%s5 + $0x10] sm:$0xf]
      %v3913 = vld [vmem:[%s5 + $0x14] sm:$0xf]
      %v3914 = vld [vmem:[%s5 + $0x18] sm:$0xf]
      %v3915 = vld [vmem:[%s5 + $0x1c] sm:$0xf]
      %v3916 = vld [vmem:[%s5 + $0x20] sm:$0xf]
      %v3917 = vld [vmem:[%s5 + $0x24] sm:$0xf]
      %v3918 = vld [vmem:[%s5 + $0x28] sm:$0xf]
      %v3919 = vld [vmem:[%s5 + $0x2c] sm:$0xf]
      %v3920 = vld [vmem:[%s5 + $0x30] sm:$0xf]
      %v3921 = vld [vmem:[%s5 + $0x34] sm:$0xf]
      %v3922 = vld [vmem:[%s5 + $0x38] sm:$0xf]
      %v3923 = vld [vmem:[%s5 + $0x3c] sm:$0xf]
      %v3924 = vld [vmem:[%s5 + $0x40] sm:$0xf]
      %v3925 = vld [vmem:[%s5 + $0x44] sm:$0xf]
      %v3926 = vld [vmem:[%s5 + $0x48] sm:$0xf]
      %v3927 = vld [vmem:[%s5 + $0x4c] sm:$0xf]
      %v3928 = vld [vmem:[%s5 + $0x50] sm:$0xf]
      %v3929 = vld [vmem:[%s5 + $0x54] sm:$0xf]
      %v3930 = vld [vmem:[%s5 + $0x58] sm:$0xf]
      %v3931 = vld [vmem:[%s5 + $0x5c] sm:$0xf]
      %v3932 = vld [vmem:[%s5 + $0x60] sm:$0xf]
      %v3933 = vld [vmem:[%s5 + $0x64] sm:$0xf]
      %v3934 = vld [vmem:[%s5 + $0x68] sm:$0xf]
      %v3935 = vld [vmem:[%s5 + $0x6c] sm:$0xf]
      %v3936 = vld [vmem:[%s5 + $0x70] sm:$0xf]
      %v3937 = vld [vmem:[%s5 + $0x74] sm:$0xf]
      %v3938 = vld [vmem:[%s5 + $0x78] sm:$0xf]
      %v3939 = vld [vmem:[%s5 + $0x7c] sm:$0xf]
      %v3940 = vld [vmem:[%s5 + $0x80] sm:$0xf]
      %v3941 = vld [vmem:[%s5 + $0x84] sm:$0xf]
      %v3942 = vld [vmem:[%s5 + $0x88] sm:$0xf]
      %v3943 = vld [vmem:[%s5 + $0x8c] sm:$0xf]
      %v3944 = vld [vmem:[%s6] sm:$0x1]
      %v3946 = vlaneseq
      %v3947 = vshrl.u32 %v3946, 7
      %v3948 = vsub.s32 0, %v3947
      %v3949 = vrot.slane %v3944, %v3948
      %v3987 = vunpack.c.l.b16 %v3908
      %v3988 = vunpack.c.l.b16 %v3909
      %v3989 = vunpack.c.l.b16 %v3910
      %v3990 = vunpack.c.l.b16 %v3911
      %v3991 = vunpack.c.l.b16 %v3912
      %v3992 = vunpack.c.l.b16 %v3913
      %v3993 = vunpack.c.l.b16 %v3914
      %v3994 = vunpack.c.l.b16 %v3915
      %v3995 = vunpack.c.l.b16 %v3916
      %v3996 = vunpack.c.l.b16 %v3917
      %v3997 = vunpack.c.l.b16 %v3918
      %v3998 = vunpack.c.l.b16 %v3919
      %v3999 = vunpack.c.l.b16 %v3920
      %v4000 = vunpack.c.l.b16 %v3921
      %v4001 = vunpack.c.l.b16 %v3922
      %v4002 = vunpack.c.l.b16 %v3923
      %v4003 = vunpack.c.l.b16 %v3924
      %v4004 = vunpack.c.l.b16 %v3925
      %v4005 = vunpack.c.l.b16 %v3926
      %v4006 = vunpack.c.l.b16 %v3927
      %v4007 = vunpack.c.l.b16 %v3928
      %v4008 = vunpack.c.l.b16 %v3929
      %v4009 = vunpack.c.l.b16 %v3930
      %v4010 = vunpack.c.l.b16 %v3931
      %v4011 = vunpack.c.l.b16 %v3932
      %v4012 = vunpack.c.l.b16 %v3933
      %v4013 = vunpack.c.l.b16 %v3934
      %v4014 = vunpack.c.l.b16 %v3935
      %v4015 = vunpack.c.l.b16 %v3936
      %v4016 = vunpack.c.l.b16 %v3937
      %v4017 = vunpack.c.l.b16 %v3938
      %v4018 = vunpack.c.l.b16 %v3939
      %v4019 = vunpack.c.l.b16 %v3940
      %v4020 = vunpack.c.l.b16 %v3941
      %v4021 = vunpack.c.l.b16 %v3942
      %v4022 = vunpack.c.l.b16 %v3943
      %v4023 = vpack.c.b16 %v3988, %v3987
      %v4024 = vpack.c.b16 %v3990, %v3989
      %v4025 = vpack.c.b16 %v3992, %v3991
      %v4026 = vpack.c.b16 %v3994, %v3993
      %v4027 = vpack.c.b16 %v3996, %v3995
      %v4028 = vpack.c.b16 %v3998, %v3997
      %v4029 = vpack.c.b16 %v4000, %v3999
      %v4030 = vpack.c.b16 %v4002, %v4001
      %v4031 = vpack.c.b16 %v4004, %v4003
      %v4032 = vpack.c.b16 %v4006, %v4005
      %v4033 = vpack.c.b16 %v4008, %v4007
      %v4034 = vpack.c.b16 %v4010, %v4009
      %v4035 = vpack.c.b16 %v4012, %v4011
      %v4036 = vpack.c.b16 %v4014, %v4013
      %v4037 = vpack.c.b16 %v4016, %v4015
      %v4038 = vpack.c.b16 %v4018, %v4017
      %v4039 = vpack.c.b16 %v4020, %v4019
      %v4040 = vpack.c.b16 %v4022, %v4021
      %v4060 = vsel %vm1309, %v3898, 0
      %v4063 = vsel %vm1309, %v3901, 0
      %v4066 = vsel %vm1309, %v3904, 0
      %v4069 = vsel %vm1309, %v3907, 0
      %4071 = vmatprep.subr.bf16.mxu0 0
      %4072 = vmatpush1.bf16.msra.mxu0 %v4023
      %4073 = vmatprep.subr.bf16.mxu0 0
      %4074 = vmatpush1.bf16.msra.mxu0 %v4024
      %4075 = vmatprep.subr.bf16.mxu0 0
      %4076 = vmatpush1.bf16.msra.mxu0 %v4025
      %4077 = vmatprep.subr.bf16.mxu0 0
      %4078 = vmatpush1.bf16.msra.mxu0 %v4026
      %4079 = vmatprep.subr.bf16.mxu0 0
      %4080 = vmatpush1.bf16.msra.mxu0 %v4027
      %4081 = vmatprep.subr.bf16.mxu0 0
      %4082 = vmatpush1.bf16.msra.mxu0 %v4028
      %4083 = vmatprep.subr.bf16.mxu0 0
      %4084 = vmatpush1.bf16.msra.mxu0 %v4029
      %4085 = vmatprep.subr.bf16.mxu0 0
      %4086 = vmatpush1.bf16.msra.mxu0 %v4030
      %4087 = vmatprep.subr.bf16.mxu0 0
      %4088 = vmatpush1.bf16.msra.mxu0 %v4031
      %4089 = vmatprep.subr.bf16.mxu0 0
      %4090 = vmatpush1.bf16.msra.mxu0 %v4032
      %4091 = vmatprep.subr.bf16.mxu0 0
      %4092 = vmatpush1.bf16.msra.mxu0 %v4033
      %4093 = vmatprep.subr.bf16.mxu0 0
      %4094 = vmatpush1.bf16.msra.mxu0 %v4034
      %4095 = vmatprep.subr.bf16.mxu0 0
      %4096 = vmatpush1.bf16.msra.mxu0 %v4035
      %4097 = vmatprep.subr.bf16.mxu0 0
      %4098 = vmatpush1.bf16.msra.mxu0 %v4036
      %4099 = vmatprep.subr.bf16.mxu0 0
      %4100 = vmatpush1.bf16.msra.mxu0 %v4037
      %4101 = vmatprep.subr.bf16.mxu0 0
      %4102 = vmatpush1.bf16.msra.mxu0 %v4038
      %4103 = vmatprep.mubr.bf16.mxu0 %v3897
      %4104 = vmatmul.mubr.bf16.gmra.mrb[0].mxu0 %v3896
      %v4105 = vpop.f32.mrb[0].mxu0
      %v4106 = vadd.f32 %v3949, %v4105
      %v4107 = vpop.f32.mrb[0].mxu0
      %v4108 = vpop.f32.mrb[0].mxu0
      %v4109 = vadd.f32 %v3949, %v4108
      %v4110 = vpop.f32.mrb[0].mxu0
      %4111 = vmatprep.mubr.bf16.mxu0 %v3900
      %4112 = vmatmul.mubr.bf16.gmra.mrb[0].mxu0 %v3899
      %v4113 = vpop.f32.mrb[0].mxu0
      %v4114 = vadd.f32 %v3949, %v4113
      %v4115 = vpop.f32.mrb[0].mxu0
      %v4116 = vpop.f32.mrb[0].mxu0
      %v4117 = vadd.f32 %v3949, %v4116
      %v4118 = vpop.f32.mrb[0].mxu0
      %4119 = vmatprep.mubr.bf16.mxu0 %v3903
      %4120 = vmatmul.mubr.bf16.gmra.mrb[0].mxu0 %v3902
      %v4121 = vpop.f32.mrb[0].mxu0
      %v4122 = vadd.f32 %v3949, %v4121
      %v4123 = vpop.f32.mrb[0].mxu0
      %v4124 = vpop.f32.mrb[0].mxu0
      %v4125 = vadd.f32 %v3949, %v4124
      %v4126 = vpop.f32.mrb[0].mxu0
      %4127 = vmatprep.mubr.bf16.mxu0 %v3906
      %4128 = vmatmul.mubr.bf16.gmra.mrb[0].mxu0 %v3905
      %v4129 = vpop.f32.mrb[0].mxu0
      %v4130 = vadd.f32 %v3949, %v4129
      %v4131 = vpop.f32.mrb[0].mxu0
      %v4132 = vpop.f32.mrb[0].mxu0
      %v4133 = vadd.f32 %v3949, %v4132
      %v4134 = vpop.f32.mrb[0].mxu0
      %4135 = vdwg.mxu0
      %4136 = vmatprep.subr.bf16.mxu0 0
      %4137 = vmatpush1.bf16.msra.mxu0 %v4039
      %4138 = vmatprep.subr.bf16.mxu0 0
      %4139 = vmatpush1.bf16.msra.mxu0 %v4040
      %4140 = vmatprep.subr.bf16.mxu0 0
      %4141 = vmatpush1.bf16.msra.mxu0 0
      %4142 = vmatprep.subr.bf16.mxu0 0
      %4143 = vmatpush1.bf16.msra.mxu0 0
      %4144 = vmatprep.subr.bf16.mxu0 0
      %4145 = vmatpush1.bf16.msra.mxu0 0
      %4146 = vmatprep.subr.bf16.mxu0 0
      %4147 = vmatpush1.bf16.msra.mxu0 0
      %4148 = vmatprep.subr.bf16.mxu0 0
      %4149 = vmatpush1.bf16.msra.mxu0 0
      %4150 = vmatprep.subr.bf16.mxu0 0
      %4151 = vmatpush1.bf16.msra.mxu0 0
      %4152 = vmatprep.subr.bf16.mxu0 0
      %4153 = vmatpush1.bf16.msra.mxu0 0
      %4154 = vmatprep.subr.bf16.mxu0 0
      %4155 = vmatpush1.bf16.msra.mxu0 0
      %4156 = vmatprep.subr.bf16.mxu0 0
      %4157 = vmatpush1.bf16.msra.mxu0 0
      %4158 = vmatprep.subr.bf16.mxu0 0
      %4159 = vmatpush1.bf16.msra.mxu0 0
      %4160 = vmatprep.subr.bf16.mxu0 0
      %4161 = vmatpush1.bf16.msra.mxu0 0
      %4162 = vmatprep.subr.bf16.mxu0 0
      %4163 = vmatpush1.bf16.msra.mxu0 0
      %4164 = vmatprep.subr.bf16.mxu0 0
      %4165 = vmatpush1.bf16.msra.mxu0 0
      %4166 = vmatprep.subr.bf16.mxu0 0
      %4167 = vmatpush1.bf16.msra.mxu0 0
      %4168 = vmatprep.mubr.bf16.mxu0 0
      %4169 = vmatmul.mubr.bf16.gmra.mrb[0].mxu0 %v4060
      %v4170 = vpop.f32.mrb[0].mxu0
      %v4171 = vadd.f32 %v4106, %v4170
      %v4172 = vpop.f32.mrb[0].mxu0
      %v4173 = vpop.f32.mrb[0].mxu0
      %v4174 = vadd.f32 %v4109, %v4173
      %v4175 = vpop.f32.mrb[0].mxu0
      %4176 = vmatprep.mubr.bf16.mxu0 0
      %4177 = vmatmul.mubr.bf16.gmra.mrb[0].mxu0 %v4063
      %v4178 = vpop.f32.mrb[0].mxu0
      %v4179 = vadd.f32 %v4114, %v4178
      %v4180 = vpop.f32.mrb[0].mxu0
      %v4181 = vpop.f32.mrb[0].mxu0
      %v4182 = vadd.f32 %v4117, %v4181
      %v4183 = vpop.f32.mrb[0].mxu0
      %4184 = vmatprep.mubr.bf16.mxu0 0
      %4185 = vmatmul.mubr.bf16.gmra.mrb[0].mxu0 %v4066
      %v4186 = vpop.f32.mrb[0].mxu0
      %v4187 = vadd.f32 %v4122, %v4186
      %v4188 = vpop.f32.mrb[0].mxu0
      %v4189 = vpop.f32.mrb[0].mxu0
      %v4190 = vadd.f32 %v4125, %v4189
      %v4191 = vpop.f32.mrb[0].mxu0
      %4192 = vmatprep.mubr.bf16.mxu0 0
      %4193 = vmatmul.mubr.bf16.gmra.mrb[0].mxu0 %v4069
      %v4194 = vpop.f32.mrb[0].mxu0
      %v4195 = vadd.f32 %v4130, %v4194
      %v4196 = vpop.f32.mrb[0].mxu0
      %v4197 = vpop.f32.mrb[0].mxu0
      %v4198 = vadd.f32 %v4133, %v4197
      %v4199 = vpop.f32.mrb[0].mxu0
      %4200 = vdwg.mxu0
      %v4201 = vld [vmem:[%s9] sm:$0x1]
      %vm4202 = vcmp.gt.f32.partialorder %v4201, 0.5
      %v4203 = vld [vmem:[%s10] sm:$0x1]
      %v4205 = vlaneseq
      %v4206 = vshrl.u32 %v4205, 7
      %v4207 = vsub.s32 0, %v4206
      %v4208 = vrot.slane %v4203, %v4207
      %v4210 = vmul.f32 %v4171, %v4208
      %v4211 = vmul.f32 %v4174, %v4208
      %v4212 = vmul.f32 %v4179, %v4208
      %v4213 = vmul.f32 %v4182, %v4208
      %v4214 = vmul.f32 %v4187, %v4208
      %v4215 = vmul.f32 %v4190, %v4208
      %v4216 = vmul.f32 %v4195, %v4208
      %v4217 = vmul.f32 %v4198, %v4208
      %v4218 = vtanh.pop %v4210
      %v4219 = vtanh.pop %v4211
      %v4220 = vtanh.pop %v4212
      %v4221 = vtanh.pop %v4213
      %v4222 = vtanh.pop %v4214
      %v4223 = vtanh.pop %v4215
      %v4224 = vtanh.pop %v4216
      %v4225 = vtanh.pop %v4217
      %v4226 = vsel %vm4202, 1, 0
      %v4227 = vlaneseq
      %v4228 = vshrl.u32 %v4227, 7
      %v4229 = vsub.s32 0, %v4228
      %v4230 = vrot.slane %v4226, %v4229
      %vm4231 = vcmp.eq.s32.totalorder %v4230, 1
      %v4232 = vsel %vm4231, %v4218, %v4171
      %v4233 = vsel %vm4231, %v4219, %v4174
      %v4234 = vsel %vm4231, %v4220, %v4179
      %v4235 = vsel %vm4231, %v4221, %v4182
      %v4236 = vsel %vm4231, %v4222, %v4187
      %v4237 = vsel %vm4231, %v4223, %v4190
      %v4238 = vsel %vm4231, %v4224, %v4195
      %v4239 = vsel %vm4231, %v4225, %v4198
      %v4240 = vld [vmem:[%s11] sm:$0x1]
      %v4242 = vlaneseq
      %v4243 = vshrl.u32 %v4242, 7
      %v4244 = vsub.s32 0, %v4243
      %v4245 = vrot.slane %v4240, %v4244
      %v4247 = vmul.f32 %v4232, %v4245
      %v4248 = vmul.f32 %v4233, %v4245
      %v4249 = vmul.f32 %v4234, %v4245
      %v4250 = vmul.f32 %v4235, %v4245
      %v4251 = vmul.f32 %v4236, %v4245
      %v4252 = vmul.f32 %v4237, %v4245
      %v4253 = vmul.f32 %v4238, %v4245
      %v4254 = vmul.f32 %v4239, %v4245
      %4255 = vst [vmem:[%s413] sm:$0xff] %v4247
      %4256 = vst [vmem:[%s413 + $0x8] sm:$0xff] %v4248
      %4257 = vst [vmem:[%s413 + $0x10] sm:$0xff] %v4249
      %4258 = vst [vmem:[%s413 + $0x18] sm:$0xff] %v4250
      %4259 = vst [vmem:[%s413 + $0x20] sm:$0xff] %v4251
      %4260 = vst [vmem:[%s413 + $0x28] sm:$0xff] %v4252
      %4261 = vst [vmem:[%s413 + $0x30] sm:$0xff] %v4253
      %4262 = vst [vmem:[%s413 + $0x38] sm:$0xff] %v4254
      %p4263 = scmp.lt.s32.totalorder %s23, 1
      %s4264 = scalar_select %p4263, %s23, 1
      %s4265 = smul.addr %s4264, 8
      %s4266 = smul.addr %s4265, 8
      %s4267 = scalar_lea.vmem %s12, %s4266
      // Predicated region
      $region69: #{prediction_head_forward.1} parent=67 // pred_check
        %p4268 = pneg %p298
      $region70: #{prediction_head_forward.1} parent=67 // pred_check_branch
        %4270 = sbr.rel (%p4268) target = $region72
      $region71: #{prediction_head_forward.1} parent=67 // pred_region
        _
      $region72: #{prediction_head_forward.1} parent=67 // pred_fallthru
        _
    $region68: #{prediction_head_forward.1} parent=5 // pred_fallthru
      _
    %p4271 = scmp.le.s32.totalorder 2, %s18
    // Predicated region
    $region73: #{prediction_head_forward.1} parent=5 // pred_check
      %p4272 = pneg %p4271
    $region74: #{prediction_head_forward.1} parent=5 // pred_check_branch
      %4274 = sbr.rel (%p4272) target = $region76
    $region75: #{prediction_head_forward.1} parent=5 // pred_region
      %s4275 = ssub.s32 %s18, 2
      // Predicated region
      $region77: #{prediction_head_forward.1} parent=75 // pred_check
        %p4276 = pneg %p304
      $region78: #{prediction_head_forward.1} parent=75 // pred_check_branch
        %4278 = sbr.rel (%p4276) target = $region80
      $region79: #{prediction_head_forward.1} parent=75 // pred_region
        %p4279 = scmp.lt.s32.totalorder %s24, 1
        %s4280 = scalar_select %p4279, %s24, 1
        %s4281 = smul.addr %s4280, 8
        %s4282 = smul.addr %s4281, 8
        %s4283 = scalar_lea.vmem %s12, %s4282
      $region80: #{prediction_head_forward.1} parent=75 // pred_fallthru
        _
    $region76: #{prediction_head_forward.1} parent=5 // pred_fallthru
      _
  $region6: #{prediction_head_forward.1} parent=0 // loop_footer
    %s22 = sadd.s32 1, %s18
  $region7: #{prediction_head_forward.1} parent=0 // loop_footer_branch
    %17 = sbr.rel target = $region3
  $region8: #{prediction_head_forward.1} parent=0 // loop_exit
    _

</llo_original>
